<compile_context>
chip_gen: v5e
topology: v5e:2x2
jax: 0.10.0
libtpu: 0.0.40
codegen_flags: <defaults>
</compile_context>

<pallas_src>
import numpy as np
import jax
import jax.numpy as jnp
from jax.experimental import pallas as pl
from jax.experimental.pallas import tpu as pltpu

# ---------------------------------------------------------------------------
# Small synthetic HuBERT configuration (shapes follow the module structure)
# ---------------------------------------------------------------------------
B           = 2            # batch
L_WAV       = 330          # raw waveform samples
C_CONV      = 32           # conv feature channels
D_MODEL     = 32           # encoder embedding dim
NUM_HEADS   = 4
HEAD_DIM    = D_MODEL // NUM_HEADS
FFN_DIM     = 64
NUM_LAYERS  = 2
POS_K       = 5            # pos_conv kernel (odd -> fairseq SamePad is a no-op)
POS_G       = 4            # pos_conv groups
K0, S0      = 10, 5        # conv0 kernel / stride
K1, S1      = 3, 2         # conv1 kernel / stride
NORMALIZE   = True         # task_cfg.normalize
LN_EPS      = 1e-5         # torch LayerNorm / GroupNorm eps
WAV_EPS     = 1e-5         # HubertModel.eps

T1 = (L_WAV - K0) // S0 + 1        # 65  conv0 output frames
T2 = (T1 - K1) // S1 + 1           # 32  conv1 output frames (encoder seq len)
assert K0 == 2 * S0 and L_WAV == (T1 + 1) * S0, \
    "conv0 reshape trick requires K0 == 2*S0 and L_WAV == (T1+1)*S0"


# ---------------------------------------------------------------------------
# In-kernel helpers (traced inside Mosaic kernels)
# ---------------------------------------------------------------------------
_ERF_P  = 0.3275911
_ERF_A1 = 0.254829592
_ERF_A2 = -0.284496736
_ERF_A3 = 1.421413741
_ERF_A4 = -1.453152027
_ERF_A5 = 1.061405429


def _erf_approx(x):
    # Abramowitz & Stegun 7.1.26 (max abs err ~1.5e-7): exp/select/VPU ops only.
    s = jnp.where(x < 0.0, -1.0, 1.0)
    a = jnp.abs(x)
    t = 1.0 / (1.0 + _ERF_P * a)
    poly = t * (_ERF_A1 + t * (_ERF_A2 + t * (_ERF_A3 + t * (_ERF_A4 + t * _ERF_A5))))
    return s * (1.0 - poly * jnp.exp(-a * a))


def _gelu(x):
    # TODO(synk): exact erf-GELU realized with an A&S polynomial (~1.5e-7 abs
    # err); lax.erf lowering inside Mosaic is not guaranteed on all versions.
    return 0.5 * x * (1.0 + _erf_approx(x * 0.7071067811865476))


def _layer_norm(x, g, b):
    # torch.nn.LayerNorm over the last dim: biased variance, eps inside rsqrt.
    m = jnp.mean(x, axis=-1, keepdims=True)
    v = jnp.mean((x - m) ** 2, axis=-1, keepdims=True)
    return (x - m) * jax.lax.rsqrt(v + LN_EPS) * g + b


def _nbytes(*arrs):
    return int(sum(int(np.prod(a.shape)) * jnp.dtype(a.dtype).itemsize for a in arrs))


# ---------------------------------------------------------------------------
# Kernel 1: fused front-end
#   wav norm + conv0 + GroupNorm + GELU + conv1 + GELU + feature LN +
#   post_extract_proj + pos_conv + GELU + residual + encoder LN
# ---------------------------------------------------------------------------
def _frontend_kernel(wav2d_ref,                       # (1, T1+1, S0)  f32
                     w0a_ref, w0b_ref,                # (S0, C)        bf16
                     gng_ref, gnb_ref,                # (1, C)         f32
                     sel1_ref,                        # (K1, T2, T1)   f32 0/1
                     w1_ref,                          # (K1, C, C)     bf16
                     feg_ref, feb_ref,                # (1, C)         f32
                     pw_ref, pb_ref,                  # (C, D) bf16, (1, D) f32
                     selp_ref,                        # (POS_K, T2, T2) f32 0/1
                     wp_ref, posb_ref,                # (POS_K, D, D) bf16, (1, D) f32
                     eg_ref, eb_ref,                  # (1, D)         f32
                     o_ref):                          # (1, T2, D)     f32
    w = wav2d_ref[0]                                  # (66, 5): one row's 330 samples

    # --- HubertModel.layer_norm(wav): (x - m) / sqrt(std + eps), std unbiased
    #     (matches the reference verbatim: v = torch.std; sqrt(v + eps)).
    if NORMALIZE:
        n = float((T1 + 1) * S0)
        m = jnp.sum(jnp.sum(w, axis=1, keepdims=True), axis=0, keepdims=True) / n
        d = w - m
        var_unb = jnp.sum(jnp.sum(d * d, axis=1, keepdims=True),
                          axis=0, keepdims=True) / (n - 1.0)
        wn = d / jnp.sqrt(jnp.sqrt(var_unb) + WAV_EPS)
    else:
        wn = w
    wnb = wn.astype(jnp.bfloat16)

    # --- conv0 (K=10, stride=5, no bias): patch t = rows t and t+1 of the
    #     (66, 5) reshape, so the conv is two contiguous-slab matmuls.
    za = jnp.dot(wnb, w0a_ref[...], preferred_element_type=jnp.float32)   # (66, C)
    zb = jnp.dot(wnb, w0b_ref[...], preferred_element_type=jnp.float32)   # (66, C)
    y0 = za[0:T1, :] + zb[1:T1 + 1, :]                                    # (T1, C)

    # --- GroupNorm(C, C): per-channel over time (biased var, eps on var) + GELU
    m0 = jnp.mean(y0, axis=0, keepdims=True)
    v0 = jnp.mean((y0 - m0) ** 2, axis=0, keepdims=True)
    y0 = (y0 - m0) * jax.lax.rsqrt(v0 + LN_EPS) * gng_ref[...] + gnb_ref[...]
    y0 = _gelu(y0)                                                        # (T1, C) f32

    # --- conv1 (K=3, stride=2, no bias): the stride-2 row gather is a constant
    #     0/1 selection matmul (exact, f32), weight matmul in bf16.
    acc1 = jnp.zeros((T2, C_CONV), jnp.float32)
    for k in range(K1):
        gk = jnp.dot(sel1_ref[k], y0, preferred_element_type=jnp.float32)  # rows 2t+k
        acc1 = acc1 + jnp.dot(gk.astype(jnp.bfloat16), w1_ref[k],
                              preferred_element_type=jnp.float32)
    y1 = _gelu(acc1)

    # --- feature LayerNorm (over channels) + post_extract_proj
    y1 = _layer_norm(y1, feg_ref[...], feb_ref[...])
    feats = jnp.dot(y1.astype(jnp.bfloat16), pw_ref[...],
                    preferred_element_type=jnp.float32) + pb_ref[...]      # (T2, D)

    # --- pos_conv (grouped K=5, pad=2, SamePad no-op) + GELU + residual + enc LN
    #     The +/-k time shifts (including zero padding) are selection matmuls.
    accp = jnp.zeros((T2, D_MODEL), jnp.float32)
    for k in range(POS_K):
        gk = jnp.dot(selp_ref[k], feats, preferred_element_type=jnp.float32)
        accp = accp + jnp.dot(gk.astype(jnp.bfloat16), wp_ref[k],
                              preferred_element_type=jnp.float32)
    accp = accp + posb_ref[...]
    y = _gelu(accp) + feats
    o_ref[0] = _layer_norm(y, eg_ref[...], eb_ref[...])


def frontend(wav2d, p):
    Bb = wav2d.shape[0]

    def rep_spec(arr):
        nd = arr.ndim
        return pl.BlockSpec(arr.shape, lambda b, _nd=nd: (0,) * _nd)

    args = (wav2d,
            p["w0a"], p["w0b"], p["gn_g"], p["gn_b"],
            p["sel1"], p["w1_taps"], p["fe_ln_g"], p["fe_ln_b"],
            p["proj_w"], p["proj_b"],
            p["sel_p"], p["pos_w_taps"], p["pos_b"],
            p["enc_ln_g"], p["enc_ln_b"])
    in_specs = [pl.BlockSpec((1, T1 + 1, S0), lambda b: (b, 0, 0))]
    in_specs += [rep_spec(a) for a in args[1:]]

    flops = int(Bb * 2 * ((T1 + 1) * S0 * C_CONV * 2
                          + K1 * (T2 * T1 * C_CONV + T2 * C_CONV * C_CONV)
                          + T2 * C_CONV * D_MODEL
                          + POS_K * (T2 * T2 * D_MODEL + T2 * D_MODEL * D_MODEL)))
    trans = int(Bb * (T1 * C_CONV + T2 * C_CONV + T2 * D_MODEL))
    nbytes = _nbytes(*args) + Bb * T2 * D_MODEL * 4

    return pl.pallas_call(
        _frontend_kernel,
        grid=(Bb,),
        in_specs=in_specs,
        out_specs=pl.BlockSpec((1, T2, D_MODEL), lambda b: (b, 0, 0)),
        out_shape=jax.ShapeDtypeStruct((Bb, T2, D_MODEL), jnp.float32),
        compiler_params=pltpu.CompilerParams(dimension_semantics=("parallel",)),
        cost_estimate=pl.CostEstimate(flops=flops, transcendentals=trans,
                                      bytes_accessed=nbytes),
    )(*args)


# ---------------------------------------------------------------------------
# Kernel 2: fused encoder stack (all layers in one pallas_call)
#   grid = (B, NUM_LAYERS + 1); the extra trailing step only writes the final
#   hidden state.  The activation is carried in a VMEM scratch across the
#   layer axis; hidden_states[l] (the layer-l INPUT) is written every step.
# ---------------------------------------------------------------------------
def _encoder_stack_kernel(x_ref,
                          wqkv_ref, bqkv_ref, wo_ref, bo_ref,
                          ln1g_ref, ln1b_ref,
                          fc1w_ref, fc1b_ref, fc2w_ref, fc2b_ref,
                          ln2g_ref, ln2b_ref,
                          hid_ref, carry_ref):
    l = pl.program_id(1)

    @pl.when(l == 0)
    def _():
        carry_ref[...] = x_ref[0]

    x = carry_ref[...]                                 # (T, D) f32 layer input
    hid_ref[0, 0] = x                                  # hidden_states[l]

    @pl.when(l < NUM_LAYERS)
    def _():
        scale = 1.0 / (HEAD_DIM ** 0.5)
        xb = x.astype(jnp.bfloat16)

        # fused Q/K/V projection (bf16 MXU operands, f32 accumulation)
        qkv = jnp.dot(xb, wqkv_ref[0],
                      preferred_element_type=jnp.float32) + bqkv_ref[0]    # (T, 3D)

        # per-head attention; out-projection accumulated per head (no concat).
        # NOTE: additive pad mask elided — feats_length == T2 for every row,
        # so the mask is a per-row constant and cannot change the softmax.
        attn = jnp.zeros((T2, D_MODEL), jnp.float32)
        for h in range(NUM_HEADS):
            lo = h * HEAD_DIM
            q = (qkv[:, lo:lo + HEAD_DIM] * scale).astype(jnp.bfloat16)
            k = qkv[:, D_MODEL + lo:D_MODEL + lo + HEAD_DIM].astype(jnp.bfloat16)
            v = qkv[:, 2 * D_MODEL + lo:2 * D_MODEL + lo + HEAD_DIM].astype(jnp.bfloat16)
            s = jax.lax.dot_general(q, k, (((1,), (1,)), ((), ())),
                                    preferred_element_type=jnp.float32)    # (T, T)
            s = s - jnp.max(s, axis=-1, keepdims=True)                     # stable softmax
            pr = jnp.exp(s)
            pr = pr * pl.reciprocal(jnp.sum(pr, axis=-1, keepdims=True), approx=True)
            oh = jnp.dot(pr.astype(jnp.bfloat16), v,
                         preferred_element_type=jnp.float32)               # (T, hd)
            attn = attn + jnp.dot(oh.astype(jnp.bfloat16), wo_ref[0, h],
                                  preferred_element_type=jnp.float32)      # (T, D)
        attn = attn + bo_ref[0]

        # residual + LN1 (post-LN), FFN (fc1 + GELU + fc2), residual + LN2
        x1 = _layer_norm(x + attn, ln1g_ref[0], ln1b_ref[0])
        h1 = jnp.dot(x1.astype(jnp.bfloat16), fc1w_ref[0],
                     preferred_element_type=jnp.float32) + fc1b_ref[0]
        h1 = _gelu(h1)
        h2 = jnp.dot(h1.astype(jnp.bfloat16), fc2w_ref[0],
                     preferred_element_type=jnp.float32) + fc2b_ref[0]
        carry_ref[...] = _layer_norm(x1 + h2, ln2g_ref[0], ln2b_ref[0])


def encoder_stack(feats, p):
    Bb = feats.shape[0]
    Lp1 = NUM_LAYERS + 1

    def per_layer_spec(arr):
        nd = arr.ndim
        # clamp the layer index so the extra trailing grid step stays in bounds
        return pl.BlockSpec(
            (1,) + arr.shape[1:],
            lambda b, l, _nd=nd: (jnp.minimum(l, NUM_LAYERS - 1),) + (0,) * (_nd - 1))

    args = (feats,
            p["qkv_w"], p["qkv_b"], p["o_w"], p["o_b"],
            p["ln1_g"], p["ln1_b"],
            p["fc1_w"], p["fc1_b"], p["fc2_w"], p["fc2_b"],
            p["ln2_g"], p["ln2_b"])
    in_specs = [pl.BlockSpec((1, T2, D_MODEL), lambda b, l: (b, 0, 0))]
    in_specs += [per_layer_spec(a) for a in args[1:]]

    flops = int(Bb * NUM_LAYERS * 2 * (T2 * D_MODEL * 3 * D_MODEL
                                       + 2 * NUM_HEADS * T2 * T2 * HEAD_DIM
                                       + T2 * D_MODEL * D_MODEL
                                       + 2 * T2 * D_MODEL * FFN_DIM))
    trans = int(Bb * NUM_LAYERS * (NUM_HEADS * T2 * T2 + T2 * FFN_DIM))
    nbytes = _nbytes(*args) + Lp1 * Bb * T2 * D_MODEL * 4

    return pl.pallas_call(
        _encoder_stack_kernel,
        grid=(Bb, Lp1),
        in_specs=in_specs,
        out_specs=pl.BlockSpec((1, 1, T2, D_MODEL), lambda b, l: (l, b, 0, 0)),
        out_shape=jax.ShapeDtypeStruct((Lp1, Bb, T2, D_MODEL), jnp.float32),
        scratch_shapes=[pltpu.VMEM((T2, D_MODEL), jnp.float32)],
        compiler_params=pltpu.CompilerParams(
            dimension_semantics=("parallel", "arbitrary")),
        cost_estimate=pl.CostEstimate(flops=flops, transcendentals=trans,
                                      bytes_accessed=nbytes),
    )(*args)


# ---------------------------------------------------------------------------
# Full forward: exactly two pallas_calls
# ---------------------------------------------------------------------------
def hubert_forward(params, wav):
    Bb = wav.shape[0]
    # (B, 330) -> (B, 66, 5): free row-major reshape so conv0's im2col becomes
    # two contiguous sublane slabs inside the fused front-end kernel.
    wav2d = wav.reshape(Bb, T1 + 1, S0)
    feats = frontend(wav2d, params)                    # (B, T2, D)
    hidden = encoder_stack(feats, params)              # (L+1, B, T2, D)
    # feats_length = ones(B, T).sum(-1).long()  (int32; x64 disabled)
    feats_length = jnp.full((Bb,), T2, dtype=jnp.int32)
    return hidden, feats_length


# ---------------------------------------------------------------------------
# Deterministic parameter init (weights stored directly in kernel layouts;
# MXU-operand weights in bf16, norm/bias/selection constants in f32)
# ---------------------------------------------------------------------------
def init_params(key):
    def nrm(k, shape, scale=0.05):
        return (scale * jax.random.normal(k, shape)).astype(jnp.float32)

    keys = iter(jax.random.split(key, 8 + 12 * NUM_LAYERS))
    C, D, G = C_CONV, D_MODEL, POS_G
    Dg = D // G
    bf = jnp.bfloat16

    # conv0 weight (C_out, 1, K0) split into the two (S0, C) half-kernel slabs
    w0 = np.asarray(nrm(next(keys), (C, 1, K0)))
    w0a = np.transpose(w0[:, 0, 0:S0], (1, 0))            # (5, C)
    w0b = np.transpose(w0[:, 0, S0:K0], (1, 0))            # (5, C)

    # conv1 weight (C_out, C_in, K1) -> per-tap (C_in, C_out) matrices
    w1 = np.asarray(nrm(next(keys), (C, C, K1)))
    w1_taps = np.stack([w1[:, :, k].T for k in range(K1)], axis=0)   # (K1, C, C)

    # stride-2 row-selection matrices (im2col realized as MXU matmuls)
    sel1 = np.zeros((K1, T2, T1), np.float32)
    for k in range(K1):
        sel1[k, np.arange(T2), S1 * np.arange(T2) + k] = 1.0

    # grouped pos_conv weight -> dense block-diagonal, per-tap (D_in, D_out)
    w_grp = np.asarray(nrm(next(keys), (D, Dg, POS_K)))
    dense = np.zeros((D, D, POS_K), np.float32)
    for g in range(G):
        dense[g * Dg:(g + 1) * Dg, g * Dg:(g + 1) * Dg, :] = \
            w_grp[g * Dg:(g + 1) * Dg, :, :]
    pos_w_taps = np.stack([dense[:, :, k].T for k in range(POS_K)], axis=0)

    # +/-k time-shift selection matrices (zero rows realize the k//2 padding)
    pad = POS_K // 2
    sel_p = np.zeros((POS_K, T2, T2), np.float32)
    for k in range(POS_K):
        for t in range(T2):
            s = t + k - pad
            if 0 <= s < T2:
                sel_p[k, t, s] = 1.0

    p = {
        "w0a": jnp.asarray(w0a).astype(bf),
        "w0b": jnp.asarray(w0b).astype(bf),
        "gn_g": jnp.ones((1, C), jnp.float32),
        "gn_b": jnp.zeros((1, C), jnp.float32),
        "sel1": jnp.asarray(sel1),
        "w1_taps": jnp.asarray(w1_taps).astype(bf),
        "fe_ln_g": jnp.ones((1, C), jnp.float32),
        "fe_ln_b": jnp.zeros((1, C), jnp.float32),
        "proj_w": nrm(next(keys), (C, D)).astype(bf),
        "proj_b": nrm(next(keys), (1, D)),
        "sel_p": jnp.asarray(sel_p),
        "pos_w_taps": jnp.asarray(pos_w_taps).astype(bf),
        "pos_b": nrm(next(keys), (1, D)),
        "enc_ln_g": jnp.ones((1, D), jnp.float32),
        "enc_ln_b": jnp.zeros((1, D), jnp.float32),
    }

    # --- encoder layers, stacked along a leading layer axis -----------------
    acc = {k: [] for k in ("qkv_w", "qkv_b", "o_w", "o_b", "ln1_g", "ln1_b",
                           "fc1_w", "fc1_b", "fc2_w", "fc2_b", "ln2_g", "ln2_b")}
    for _ in range(NUM_LAYERS):
        q_w, q_b = nrm(next(keys), (D, D)), nrm(next(keys), (1, D))
        k_w, k_b = nrm(next(keys), (D, D)), nrm(next(keys), (1, D))
        v_w, v_b = nrm(next(keys), (D, D)), nrm(next(keys), (1, D))
        acc["qkv_w"].append(jnp.concatenate([q_w, k_w, v_w], axis=1))      # (D, 3D)
        acc["qkv_b"].append(jnp.concatenate([q_b, k_b, v_b], axis=1))      # (1, 3D)
        acc["o_w"].append(nrm(next(keys), (D, D)).reshape(NUM_HEADS, HEAD_DIM, D))
        acc["o_b"].append(nrm(next(keys), (1, D)))
        acc["ln1_g"].append(jnp.ones((1, D), jnp.float32))
        acc["ln1_b"].append(jnp.zeros((1, D), jnp.float32))
        acc["fc1_w"].append(nrm(next(keys), (D, FFN_DIM)))
        acc["fc1_b"].append(nrm(next(keys), (1, FFN_DIM)))
        acc["fc2_w"].append(nrm(next(keys), (FFN_DIM, D)))
        acc["fc2_b"].append(nrm(next(keys), (1, D)))
        acc["ln2_g"].append(jnp.ones((1, D), jnp.float32))
        acc["ln2_b"].append(jnp.zeros((1, D), jnp.float32))

    mxu_weights = {"qkv_w", "o_w", "fc1_w", "fc2_w"}
    for name, vals in acc.items():
        stacked = jnp.stack(vals, axis=0)
        p[name] = stacked.astype(bf) if name in mxu_weights else stacked
    return p


if __name__ == "__main__":
    root = jax.random.PRNGKey(0)
    pkey, wkey = jax.random.split(root)
    params = init_params(pkey)
    wav = jax.random.normal(wkey, (B, L_WAV), dtype=jnp.float32)

    fwd = jax.jit(hubert_forward)
    hidden_states, feats_length = fwd(params, wav)
    jax.block_until_ready((hidden_states, feats_length))

    assert hidden_states.shape == (NUM_LAYERS + 1, B, T2, D_MODEL), hidden_states.shape
    assert feats_length.shape == (B,)
    assert int(feats_length[0]) == T2
    assert bool(jnp.all(jnp.isfinite(hidden_states)))
    print("KERNEL_OK")
</pallas_src>

<mosaic_0001>
module attributes {stable_mosaic.version = 11 : i64} {
  func.func @_frontend_kernel(%arg0: i32, %arg1: memref<1x66x5xf32, #tpu.memory_space<vmem>>, %arg2: memref<5x32xbf16, #tpu.memory_space<vmem>>, %arg3: memref<5x32xbf16, #tpu.memory_space<vmem>>, %arg4: memref<1x32xf32, #tpu.memory_space<vmem>>, %arg5: memref<1x32xf32, #tpu.memory_space<vmem>>, %arg6: memref<3x32x65xf32, #tpu.memory_space<vmem>>, %arg7: memref<3x32x32xbf16, #tpu.memory_space<vmem>>, %arg8: memref<1x32xf32, #tpu.memory_space<vmem>>, %arg9: memref<1x32xf32, #tpu.memory_space<vmem>>, %arg10: memref<32x32xbf16, #tpu.memory_space<vmem>>, %arg11: memref<1x32xf32, #tpu.memory_space<vmem>>, %arg12: memref<5x32x32xf32, #tpu.memory_space<vmem>>, %arg13: memref<5x32x32xbf16, #tpu.memory_space<vmem>>, %arg14: memref<1x32xf32, #tpu.memory_space<vmem>>, %arg15: memref<1x32xf32, #tpu.memory_space<vmem>>, %arg16: memref<1x32xf32, #tpu.memory_space<vmem>>, %arg17: memref<1x32x32xf32, #tpu.memory_space<vmem>>) attributes {dimension_semantics = [#tpu.dimension_semantics<parallel>], iteration_bounds = array<i64: 2>, scalar_prefetch = 0 : i64, scratch_operands = 0 : i64, tpu.core_type = #tpu.core_type<tc>, window_params = [{transform_indices = @transform_0, window_bounds = array<i64: 1, 66, 5>}, {pipeline_mode = #tpu.pipeline_mode<synchronous>, transform_indices = @transform_1, window_bounds = array<i64: 5, 32>}, {pipeline_mode = #tpu.pipeline_mode<synchronous>, transform_indices = @transform_2, window_bounds = array<i64: 5, 32>}, {pipeline_mode = #tpu.pipeline_mode<synchronous>, transform_indices = @transform_3, window_bounds = array<i64: 1, 32>}, {pipeline_mode = #tpu.pipeline_mode<synchronous>, transform_indices = @transform_4, window_bounds = array<i64: 1, 32>}, {pipeline_mode = #tpu.pipeline_mode<synchronous>, transform_indices = @transform_5, window_bounds = array<i64: 3, 32, 65>}, {pipeline_mode = #tpu.pipeline_mode<synchronous>, transform_indices = @transform_6, window_bounds = array<i64: 3, 32, 32>}, {pipeline_mode = #tpu.pipeline_mode<synchronous>, transform_indices = @transform_7, window_bounds = array<i64: 1, 32>}, {pipeline_mode = #tpu.pipeline_mode<synchronous>, transform_indices = @transform_8, window_bounds = array<i64: 1, 32>}, {pipeline_mode = #tpu.pipeline_mode<synchronous>, transform_indices = @transform_9, window_bounds = array<i64: 32, 32>}, {pipeline_mode = #tpu.pipeline_mode<synchronous>, transform_indices = @transform_10, window_bounds = array<i64: 1, 32>}, {pipeline_mode = #tpu.pipeline_mode<synchronous>, transform_indices = @transform_11, window_bounds = array<i64: 5, 32, 32>}, {pipeline_mode = #tpu.pipeline_mode<synchronous>, transform_indices = @transform_12, window_bounds = array<i64: 5, 32, 32>}, {pipeline_mode = #tpu.pipeline_mode<synchronous>, transform_indices = @transform_13, window_bounds = array<i64: 1, 32>}, {pipeline_mode = #tpu.pipeline_mode<synchronous>, transform_indices = @transform_14, window_bounds = array<i64: 1, 32>}, {pipeline_mode = #tpu.pipeline_mode<synchronous>, transform_indices = @transform_15, window_bounds = array<i64: 1, 32>}, {transform_indices = @transform_16, window_bounds = array<i64: 1, 32, 32>}]} {
    %c0 = arith.constant 0 : index
    %c0_0 = arith.constant 0 : index
    %c0_1 = arith.constant 0 : index
    %0 = vector.load %arg1[%c0, %c0_0, %c0_1] : memref<1x66x5xf32, #tpu.memory_space<vmem>>, vector<1x66x5xf32>
    %1 = vector.shape_cast %0 : vector<1x66x5xf32> to vector<66x5xf32>
    %cst = arith.constant dense<0.000000e+00> : vector<66xf32>
    %2 = vector.multi_reduction <add>, %1, %cst [1] : vector<66x5xf32> to vector<66xf32>
    %3 = vector.shape_cast %2 : vector<66xf32> to vector<66x1xf32>
    %cst_2 = arith.constant dense<0.000000e+00> : vector<1xf32>
    %4 = vector.multi_reduction <add>, %3, %cst_2 [0] : vector<66x1xf32> to vector<1xf32>
    %5 = vector.shape_cast %4 : vector<1xf32> to vector<1x1xf32>
    %cst_3 = arith.constant 3.300000e+02 : f32
    %6 = vector.broadcast %cst_3 : f32 to vector<1x1xf32>
    %7 = arith.divf %5, %6 : vector<1x1xf32>
    %8 = vector.broadcast %7 : vector<1x1xf32> to vector<66x5xf32>
    %9 = arith.subf %1, %8 : vector<66x5xf32>
    %10 = arith.mulf %9, %9 : vector<66x5xf32>
    %cst_4 = arith.constant dense<0.000000e+00> : vector<66xf32>
    %11 = vector.multi_reduction <add>, %10, %cst_4 [1] : vector<66x5xf32> to vector<66xf32>
    %12 = vector.shape_cast %11 : vector<66xf32> to vector<66x1xf32>
    %cst_5 = arith.constant dense<0.000000e+00> : vector<1xf32>
    %13 = vector.multi_reduction <add>, %12, %cst_5 [0] : vector<66x1xf32> to vector<1xf32>
    %14 = vector.shape_cast %13 : vector<1xf32> to vector<1x1xf32>
    %cst_6 = arith.constant 3.290000e+02 : f32
    %15 = vector.broadcast %cst_6 : f32 to vector<1x1xf32>
    %16 = arith.divf %14, %15 : vector<1x1xf32>
    %17 = math.sqrt %16 : vector<1x1xf32>
    %cst_7 = arith.constant 9.99999974E-6 : f32
    %18 = vector.broadcast %cst_7 : f32 to vector<1x1xf32>
    %19 = arith.addf %17, %18 : vector<1x1xf32>
    %20 = math.sqrt %19 : vector<1x1xf32>
    %21 = vector.broadcast %20 : vector<1x1xf32> to vector<66x5xf32>
    %22 = arith.divf %9, %21 : vector<66x5xf32>
    %23 = arith.truncf %22 : vector<66x5xf32> to vector<66x5xbf16>
    %c0_8 = arith.constant 0 : index
    %c0_9 = arith.constant 0 : index
    %24 = vector.load %arg2[%c0_8, %c0_9] : memref<5x32xbf16, #tpu.memory_space<vmem>>, vector<5x32xbf16>
    %cst_10 = arith.constant dense<0.000000e+00> : vector<66x32xf32>
    %25 = tpu.matmul %23, %24, %cst_10 {dimension_numbers = #tpu.dot_dimension_numbers<[1], [0], [0], [1], [0, 0, 1, 1], [], []>} : vector<66x5xbf16>, vector<5x32xbf16>, vector<66x32xf32> -> vector<66x32xf32>
    %c0_11 = arith.constant 0 : index
    %c0_12 = arith.constant 0 : index
    %26 = vector.load %arg3[%c0_11, %c0_12] : memref<5x32xbf16, #tpu.memory_space<vmem>>, vector<5x32xbf16>
    %cst_13 = arith.constant dense<0.000000e+00> : vector<66x32xf32>
    %27 = tpu.matmul %23, %26, %cst_13 {dimension_numbers = #tpu.dot_dimension_numbers<[1], [0], [0], [1], [0, 0, 1, 1], [], []>} : vector<66x5xbf16>, vector<5x32xbf16>, vector<66x32xf32> -> vector<66x32xf32>
    %28 = vector.extract_strided_slice %25 {offsets = [0, 0], sizes = [65, 32], strides = [1, 1]} : vector<66x32xf32> to vector<65x32xf32>
    %29 = vector.extract_strided_slice %27 {offsets = [1, 0], sizes = [65, 32], strides = [1, 1]} : vector<66x32xf32> to vector<65x32xf32>
    %30 = arith.addf %28, %29 : vector<65x32xf32>
    %cst_14 = arith.constant dense<0.000000e+00> : vector<32xf32>
    %31 = vector.multi_reduction <add>, %30, %cst_14 [0] : vector<65x32xf32> to vector<32xf32>
    %32 = vector.shape_cast %31 : vector<32xf32> to vector<1x32xf32>
    %cst_15 = arith.constant 6.500000e+01 : f32
    %33 = vector.broadcast %cst_15 : f32 to vector<1x32xf32>
    %34 = arith.divf %32, %33 : vector<1x32xf32>
    %35 = vector.broadcast %34 : vector<1x32xf32> to vector<65x32xf32>
    %36 = arith.subf %30, %35 : vector<65x32xf32>
    %37 = arith.mulf %36, %36 : vector<65x32xf32>
    %cst_16 = arith.constant dense<0.000000e+00> : vector<32xf32>
    %38 = vector.multi_reduction <add>, %37, %cst_16 [0] : vector<65x32xf32> to vector<32xf32>
    %39 = vector.shape_cast %38 : vector<32xf32> to vector<1x32xf32>
    %cst_17 = arith.constant 6.500000e+01 : f32
    %40 = vector.broadcast %cst_17 : f32 to vector<1x32xf32>
    %41 = arith.divf %39, %40 : vector<1x32xf32>
    %42 = vector.broadcast %34 : vector<1x32xf32> to vector<65x32xf32>
    %43 = arith.subf %30, %42 : vector<65x32xf32>
    %cst_18 = arith.constant 9.99999974E-6 : f32
    %44 = vector.broadcast %cst_18 : f32 to vector<1x32xf32>
    %45 = arith.addf %41, %44 : vector<1x32xf32>
    %46 = math.rsqrt %45 : vector<1x32xf32>
    %47 = vector.broadcast %46 : vector<1x32xf32> to vector<65x32xf32>
    %48 = arith.mulf %43, %47 : vector<65x32xf32>
    %c0_19 = arith.constant 0 : index
    %c0_20 = arith.constant 0 : index
    %49 = vector.load %arg4[%c0_19, %c0_20] : memref<1x32xf32, #tpu.memory_space<vmem>>, vector<1x32xf32>
    %50 = vector.broadcast %49 : vector<1x32xf32> to vector<65x32xf32>
    %51 = arith.mulf %48, %50 : vector<65x32xf32>
    %c0_21 = arith.constant 0 : index
    %c0_22 = arith.constant 0 : index
    %52 = vector.load %arg5[%c0_21, %c0_22] : memref<1x32xf32, #tpu.memory_space<vmem>>, vector<1x32xf32>
    %53 = vector.broadcast %52 : vector<1x32xf32> to vector<65x32xf32>
    %54 = arith.addf %51, %53 : vector<65x32xf32>
    %cst_23 = arith.constant 5.000000e-01 : f32
    %55 = vector.broadcast %cst_23 : f32 to vector<65x32xf32>
    %56 = arith.mulf %55, %54 : vector<65x32xf32>
    %cst_24 = arith.constant 0.707106769 : f32
    %57 = vector.broadcast %cst_24 : f32 to vector<65x32xf32>
    %58 = arith.mulf %54, %57 : vector<65x32xf32>
    %cst_25 = arith.constant 0.000000e+00 : f32
    %59 = vector.broadcast %cst_25 : f32 to vector<65x32xf32>
    %60 = arith.cmpf olt, %58, %59 : vector<65x32xf32>
    %cst_26 = arith.constant -1.000000e+00 : f32
    %cst_27 = arith.constant 1.000000e+00 : f32
    %61 = vector.broadcast %cst_26 : f32 to vector<65x32xf32>
    %62 = vector.broadcast %cst_27 : f32 to vector<65x32xf32>
    %63 = arith.select %60, %61, %62 : vector<65x32xi1>, vector<65x32xf32>
    %64 = math.absf %58 : vector<65x32xf32>
    %cst_28 = arith.constant 0.327591091 : f32
    %65 = vector.broadcast %cst_28 : f32 to vector<65x32xf32>
    %66 = arith.mulf %65, %64 : vector<65x32xf32>
    %cst_29 = arith.constant 1.000000e+00 : f32
    %67 = vector.broadcast %cst_29 : f32 to vector<65x32xf32>
    %68 = arith.addf %67, %66 : vector<65x32xf32>
    %cst_30 = arith.constant 1.000000e+00 : f32
    %69 = vector.broadcast %cst_30 : f32 to vector<65x32xf32>
    %70 = arith.divf %69, %68 : vector<65x32xf32>
    %cst_31 = arith.constant 1.06140542 : f32
    %71 = vector.broadcast %cst_31 : f32 to vector<65x32xf32>
    %72 = arith.mulf %70, %71 : vector<65x32xf32>
    %cst_32 = arith.constant -1.45315206 : f32
    %73 = vector.broadcast %cst_32 : f32 to vector<65x32xf32>
    %74 = arith.addf %73, %72 : vector<65x32xf32>
    %75 = arith.mulf %70, %74 : vector<65x32xf32>
    %cst_33 = arith.constant 1.42141378 : f32
    %76 = vector.broadcast %cst_33 : f32 to vector<65x32xf32>
    %77 = arith.addf %76, %75 : vector<65x32xf32>
    %78 = arith.mulf %70, %77 : vector<65x32xf32>
    %cst_34 = arith.constant -0.284496725 : f32
    %79 = vector.broadcast %cst_34 : f32 to vector<65x32xf32>
    %80 = arith.addf %79, %78 : vector<65x32xf32>
    %81 = arith.mulf %70, %80 : vector<65x32xf32>
    %cst_35 = arith.constant 0.254829586 : f32
    %82 = vector.broadcast %cst_35 : f32 to vector<65x32xf32>
    %83 = arith.addf %82, %81 : vector<65x32xf32>
    %84 = arith.mulf %70, %83 : vector<65x32xf32>
    %cst_36 = arith.constant 0.000000e+00 : f32
    %85 = vector.broadcast %cst_36 : f32 to vector<65x32xf32>
    %86 = arith.subf %85, %64 : vector<65x32xf32>
    %87 = arith.mulf %86, %64 : vector<65x32xf32>
    %88 = math.exp %87 : vector<65x32xf32>
    %89 = arith.mulf %84, %88 : vector<65x32xf32>
    %cst_37 = arith.constant 1.000000e+00 : f32
    %90 = vector.broadcast %cst_37 : f32 to vector<65x32xf32>
    %91 = arith.subf %90, %89 : vector<65x32xf32>
    %92 = arith.mulf %63, %91 : vector<65x32xf32>
    %cst_38 = arith.constant 1.000000e+00 : f32
    %93 = vector.broadcast %cst_38 : f32 to vector<65x32xf32>
    %94 = arith.addf %93, %92 : vector<65x32xf32>
    %95 = arith.mulf %56, %94 : vector<65x32xf32>
    %cst_39 = arith.constant 0.000000e+00 : f32
    %96 = vector.broadcast %cst_39 : f32 to vector<32x32xf32>
    %c0_40 = arith.constant 0 : index
    %c0_41 = arith.constant 0 : index
    %c0_42 = arith.constant 0 : index
    %97 = vector.load %arg6[%c0_40, %c0_41, %c0_42] : memref<3x32x65xf32, #tpu.memory_space<vmem>>, vector<1x32x65xf32>
    %98 = vector.shape_cast %97 : vector<1x32x65xf32> to vector<32x65xf32>
    %cst_43 = arith.constant dense<0.000000e+00> : vector<32x32xf32>
    %99 = tpu.matmul %98, %95, %cst_43 {dimension_numbers = #tpu.dot_dimension_numbers<[1], [0], [0], [1], [0, 0, 1, 1], [], []>} : vector<32x65xf32>, vector<65x32xf32>, vector<32x32xf32> -> vector<32x32xf32>
    %100 = arith.truncf %99 : vector<32x32xf32> to vector<32x32xbf16>
    %c0_44 = arith.constant 0 : index
    %c0_45 = arith.constant 0 : index
    %c0_46 = arith.constant 0 : index
    %101 = vector.load %arg7[%c0_44, %c0_45, %c0_46] : memref<3x32x32xbf16, #tpu.memory_space<vmem>>, vector<1x32x32xbf16>
    %102 = vector.shape_cast %101 : vector<1x32x32xbf16> to vector<32x32xbf16>
    %cst_47 = arith.constant dense<0.000000e+00> : vector<32x32xf32>
    %103 = tpu.matmul %100, %102, %cst_47 {dimension_numbers = #tpu.dot_dimension_numbers<[1], [0], [0], [1], [0, 0, 1, 1], [], []>} : vector<32x32xbf16>, vector<32x32xbf16>, vector<32x32xf32> -> vector<32x32xf32>
    %104 = arith.addf %96, %103 : vector<32x32xf32>
    %c1 = arith.constant 1 : index
    %c0_48 = arith.constant 0 : index
    %c0_49 = arith.constant 0 : index
    %105 = vector.load %arg6[%c1, %c0_48, %c0_49] : memref<3x32x65xf32, #tpu.memory_space<vmem>>, vector<1x32x65xf32>
    %106 = vector.shape_cast %105 : vector<1x32x65xf32> to vector<32x65xf32>
    %cst_50 = arith.constant dense<0.000000e+00> : vector<32x32xf32>
    %107 = tpu.matmul %106, %95, %cst_50 {dimension_numbers = #tpu.dot_dimension_numbers<[1], [0], [0], [1], [0, 0, 1, 1], [], []>} : vector<32x65xf32>, vector<65x32xf32>, vector<32x32xf32> -> vector<32x32xf32>
    %108 = arith.truncf %107 : vector<32x32xf32> to vector<32x32xbf16>
    %c1_51 = arith.constant 1 : index
    %c0_52 = arith.constant 0 : index
    %c0_53 = arith.constant 0 : index
    %109 = vector.load %arg7[%c1_51, %c0_52, %c0_53] : memref<3x32x32xbf16, #tpu.memory_space<vmem>>, vector<1x32x32xbf16>
    %110 = vector.shape_cast %109 : vector<1x32x32xbf16> to vector<32x32xbf16>
    %cst_54 = arith.constant dense<0.000000e+00> : vector<32x32xf32>
    %111 = tpu.matmul %108, %110, %cst_54 {dimension_numbers = #tpu.dot_dimension_numbers<[1], [0], [0], [1], [0, 0, 1, 1], [], []>} : vector<32x32xbf16>, vector<32x32xbf16>, vector<32x32xf32> -> vector<32x32xf32>
    %112 = arith.addf %104, %111 : vector<32x32xf32>
    %c2 = arith.constant 2 : index
    %c0_55 = arith.constant 0 : index
    %c0_56 = arith.constant 0 : index
    %113 = vector.load %arg6[%c2, %c0_55, %c0_56] : memref<3x32x65xf32, #tpu.memory_space<vmem>>, vector<1x32x65xf32>
    %114 = vector.shape_cast %113 : vector<1x32x65xf32> to vector<32x65xf32>
    %cst_57 = arith.constant dense<0.000000e+00> : vector<32x32xf32>
    %115 = tpu.matmul %114, %95, %cst_57 {dimension_numbers = #tpu.dot_dimension_numbers<[1], [0], [0], [1], [0, 0, 1, 1], [], []>} : vector<32x65xf32>, vector<65x32xf32>, vector<32x32xf32> -> vector<32x32xf32>
    %116 = arith.truncf %115 : vector<32x32xf32> to vector<32x32xbf16>
    %c2_58 = arith.constant 2 : index
    %c0_59 = arith.constant 0 : index
    %c0_60 = arith.constant 0 : index
    %117 = vector.load %arg7[%c2_58, %c0_59, %c0_60] : memref<3x32x32xbf16, #tpu.memory_space<vmem>>, vector<1x32x32xbf16>
    %118 = vector.shape_cast %117 : vector<1x32x32xbf16> to vector<32x32xbf16>
    %cst_61 = arith.constant dense<0.000000e+00> : vector<32x32xf32>
    %119 = tpu.matmul %116, %118, %cst_61 {dimension_numbers = #tpu.dot_dimension_numbers<[1], [0], [0], [1], [0, 0, 1, 1], [], []>} : vector<32x32xbf16>, vector<32x32xbf16>, vector<32x32xf32> -> vector<32x32xf32>
    %120 = arith.addf %112, %119 : vector<32x32xf32>
    %cst_62 = arith.constant 5.000000e-01 : f32
    %121 = vector.broadcast %cst_62 : f32 to vector<32x32xf32>
    %122 = arith.mulf %121, %120 : vector<32x32xf32>
    %cst_63 = arith.constant 0.707106769 : f32
    %123 = vector.broadcast %cst_63 : f32 to vector<32x32xf32>
    %124 = arith.mulf %120, %123 : vector<32x32xf32>
    %cst_64 = arith.constant 0.000000e+00 : f32
    %125 = vector.broadcast %cst_64 : f32 to vector<32x32xf32>
    %126 = arith.cmpf olt, %124, %125 : vector<32x32xf32>
    %cst_65 = arith.constant -1.000000e+00 : f32
    %cst_66 = arith.constant 1.000000e+00 : f32
    %127 = vector.broadcast %cst_65 : f32 to vector<32x32xf32>
    %128 = vector.broadcast %cst_66 : f32 to vector<32x32xf32>
    %129 = arith.select %126, %127, %128 : vector<32x32xi1>, vector<32x32xf32>
    %130 = math.absf %124 : vector<32x32xf32>
    %cst_67 = arith.constant 0.327591091 : f32
    %131 = vector.broadcast %cst_67 : f32 to vector<32x32xf32>
    %132 = arith.mulf %131, %130 : vector<32x32xf32>
    %cst_68 = arith.constant 1.000000e+00 : f32
    %133 = vector.broadcast %cst_68 : f32 to vector<32x32xf32>
    %134 = arith.addf %133, %132 : vector<32x32xf32>
    %cst_69 = arith.constant 1.000000e+00 : f32
    %135 = vector.broadcast %cst_69 : f32 to vector<32x32xf32>
    %136 = arith.divf %135, %134 : vector<32x32xf32>
    %cst_70 = arith.constant 1.06140542 : f32
    %137 = vector.broadcast %cst_70 : f32 to vector<32x32xf32>
    %138 = arith.mulf %136, %137 : vector<32x32xf32>
    %cst_71 = arith.constant -1.45315206 : f32
    %139 = vector.broadcast %cst_71 : f32 to vector<32x32xf32>
    %140 = arith.addf %139, %138 : vector<32x32xf32>
    %141 = arith.mulf %136, %140 : vector<32x32xf32>
    %cst_72 = arith.constant 1.42141378 : f32
    %142 = vector.broadcast %cst_72 : f32 to vector<32x32xf32>
    %143 = arith.addf %142, %141 : vector<32x32xf32>
    %144 = arith.mulf %136, %143 : vector<32x32xf32>
    %cst_73 = arith.constant -0.284496725 : f32
    %145 = vector.broadcast %cst_73 : f32 to vector<32x32xf32>
    %146 = arith.addf %145, %144 : vector<32x32xf32>
    %147 = arith.mulf %136, %146 : vector<32x32xf32>
    %cst_74 = arith.constant 0.254829586 : f32
    %148 = vector.broadcast %cst_74 : f32 to vector<32x32xf32>
    %149 = arith.addf %148, %147 : vector<32x32xf32>
    %150 = arith.mulf %136, %149 : vector<32x32xf32>
    %cst_75 = arith.constant 0.000000e+00 : f32
    %151 = vector.broadcast %cst_75 : f32 to vector<32x32xf32>
    %152 = arith.subf %151, %130 : vector<32x32xf32>
    %153 = arith.mulf %152, %130 : vector<32x32xf32>
    %154 = math.exp %153 : vector<32x32xf32>
    %155 = arith.mulf %150, %154 : vector<32x32xf32>
    %cst_76 = arith.constant 1.000000e+00 : f32
    %156 = vector.broadcast %cst_76 : f32 to vector<32x32xf32>
    %157 = arith.subf %156, %155 : vector<32x32xf32>
    %158 = arith.mulf %129, %157 : vector<32x32xf32>
    %cst_77 = arith.constant 1.000000e+00 : f32
    %159 = vector.broadcast %cst_77 : f32 to vector<32x32xf32>
    %160 = arith.addf %159, %158 : vector<32x32xf32>
    %161 = arith.mulf %122, %160 : vector<32x32xf32>
    %c0_78 = arith.constant 0 : index
    %c0_79 = arith.constant 0 : index
    %162 = vector.load %arg8[%c0_78, %c0_79] : memref<1x32xf32, #tpu.memory_space<vmem>>, vector<1x32xf32>
    %c0_80 = arith.constant 0 : index
    %c0_81 = arith.constant 0 : index
    %163 = vector.load %arg9[%c0_80, %c0_81] : memref<1x32xf32, #tpu.memory_space<vmem>>, vector<1x32xf32>
    %cst_82 = arith.constant dense<0.000000e+00> : vector<32xf32>
    %164 = vector.multi_reduction <add>, %161, %cst_82 [1] : vector<32x32xf32> to vector<32xf32>
    %165 = vector.shape_cast %164 : vector<32xf32> to vector<32x1xf32>
    %cst_83 = arith.constant 3.200000e+01 : f32
    %166 = vector.broadcast %cst_83 : f32 to vector<32x1xf32>
    %167 = arith.divf %165, %166 : vector<32x1xf32>
    %168 = vector.broadcast %167 : vector<32x1xf32> to vector<32x32xf32>
    %169 = arith.subf %161, %168 : vector<32x32xf32>
    %170 = arith.mulf %169, %169 : vector<32x32xf32>
    %cst_84 = arith.constant dense<0.000000e+00> : vector<32xf32>
    %171 = vector.multi_reduction <add>, %170, %cst_84 [1] : vector<32x32xf32> to vector<32xf32>
    %172 = vector.shape_cast %171 : vector<32xf32> to vector<32x1xf32>
    %cst_85 = arith.constant 3.200000e+01 : f32
    %173 = vector.broadcast %cst_85 : f32 to vector<32x1xf32>
    %174 = arith.divf %172, %173 : vector<32x1xf32>
    %175 = vector.broadcast %167 : vector<32x1xf32> to vector<32x32xf32>
    %176 = arith.subf %161, %175 : vector<32x32xf32>
    %cst_86 = arith.constant 9.99999974E-6 : f32
    %177 = vector.broadcast %cst_86 : f32 to vector<32x1xf32>
    %178 = arith.addf %174, %177 : vector<32x1xf32>
    %179 = math.rsqrt %178 : vector<32x1xf32>
    %180 = vector.broadcast %179 : vector<32x1xf32> to vector<32x32xf32>
    %181 = arith.mulf %176, %180 : vector<32x32xf32>
    %182 = vector.broadcast %162 : vector<1x32xf32> to vector<32x32xf32>
    %183 = arith.mulf %181, %182 : vector<32x32xf32>
    %184 = vector.broadcast %163 : vector<1x32xf32> to vector<32x32xf32>
    %185 = arith.addf %183, %184 : vector<32x32xf32>
    %186 = arith.truncf %185 : vector<32x32xf32> to vector<32x32xbf16>
    %c0_87 = arith.constant 0 : index
    %c0_88 = arith.constant 0 : index
    %187 = vector.load %arg10[%c0_87, %c0_88] : memref<32x32xbf16, #tpu.memory_space<vmem>>, vector<32x32xbf16>
    %cst_89 = arith.constant dense<0.000000e+00> : vector<32x32xf32>
    %188 = tpu.matmul %186, %187, %cst_89 {dimension_numbers = #tpu.dot_dimension_numbers<[1], [0], [0], [1], [0, 0, 1, 1], [], []>} : vector<32x32xbf16>, vector<32x32xbf16>, vector<32x32xf32> -> vector<32x32xf32>
    %c0_90 = arith.constant 0 : index
    %c0_91 = arith.constant 0 : index
    %189 = vector.load %arg11[%c0_90, %c0_91] : memref<1x32xf32, #tpu.memory_space<vmem>>, vector<1x32xf32>
    %190 = vector.broadcast %189 : vector<1x32xf32> to vector<32x32xf32>
    %191 = arith.addf %188, %190 : vector<32x32xf32>
    %cst_92 = arith.constant 0.000000e+00 : f32
    %192 = vector.broadcast %cst_92 : f32 to vector<32x32xf32>
    %c0_93 = arith.constant 0 : index
    %c0_94 = arith.constant 0 : index
    %c0_95 = arith.constant 0 : index
    %193 = vector.load %arg12[%c0_93, %c0_94, %c0_95] : memref<5x32x32xf32, #tpu.memory_space<vmem>>, vector<1x32x32xf32>
    %194 = vector.shape_cast %193 : vector<1x32x32xf32> to vector<32x32xf32>
    %cst_96 = arith.constant dense<0.000000e+00> : vector<32x32xf32>
    %195 = tpu.matmul %194, %191, %cst_96 {dimension_numbers = #tpu.dot_dimension_numbers<[1], [0], [0], [1], [0, 0, 1, 1], [], []>} : vector<32x32xf32>, vector<32x32xf32>, vector<32x32xf32> -> vector<32x32xf32>
    %196 = arith.truncf %195 : vector<32x32xf32> to vector<32x32xbf16>
    %c0_97 = arith.constant 0 : index
    %c0_98 = arith.constant 0 : index
    %c0_99 = arith.constant 0 : index
    %197 = vector.load %arg13[%c0_97, %c0_98, %c0_99] : memref<5x32x32xbf16, #tpu.memory_space<vmem>>, vector<1x32x32xbf16>
    %198 = vector.shape_cast %197 : vector<1x32x32xbf16> to vector<32x32xbf16>
    %cst_100 = arith.constant dense<0.000000e+00> : vector<32x32xf32>
    %199 = tpu.matmul %196, %198, %cst_100 {dimension_numbers = #tpu.dot_dimension_numbers<[1], [0], [0], [1], [0, 0, 1, 1], [], []>} : vector<32x32xbf16>, vector<32x32xbf16>, vector<32x32xf32> -> vector<32x32xf32>
    %200 = arith.addf %192, %199 : vector<32x32xf32>
    %c1_101 = arith.constant 1 : index
    %c0_102 = arith.constant 0 : index
    %c0_103 = arith.constant 0 : index
    %201 = vector.load %arg12[%c1_101, %c0_102, %c0_103] : memref<5x32x32xf32, #tpu.memory_space<vmem>>, vector<1x32x32xf32>
    %202 = vector.shape_cast %201 : vector<1x32x32xf32> to vector<32x32xf32>
    %cst_104 = arith.constant dense<0.000000e+00> : vector<32x32xf32>
    %203 = tpu.matmul %202, %191, %cst_104 {dimension_numbers = #tpu.dot_dimension_numbers<[1], [0], [0], [1], [0, 0, 1, 1], [], []>} : vector<32x32xf32>, vector<32x32xf32>, vector<32x32xf32> -> vector<32x32xf32>
    %204 = arith.truncf %203 : vector<32x32xf32> to vector<32x32xbf16>
    %c1_105 = arith.constant 1 : index
    %c0_106 = arith.constant 0 : index
    %c0_107 = arith.constant 0 : index
    %205 = vector.load %arg13[%c1_105, %c0_106, %c0_107] : memref<5x32x32xbf16, #tpu.memory_space<vmem>>, vector<1x32x32xbf16>
    %206 = vector.shape_cast %205 : vector<1x32x32xbf16> to vector<32x32xbf16>
    %cst_108 = arith.constant dense<0.000000e+00> : vector<32x32xf32>
    %207 = tpu.matmul %204, %206, %cst_108 {dimension_numbers = #tpu.dot_dimension_numbers<[1], [0], [0], [1], [0, 0, 1, 1], [], []>} : vector<32x32xbf16>, vector<32x32xbf16>, vector<32x32xf32> -> vector<32x32xf32>
    %208 = arith.addf %200, %207 : vector<32x32xf32>
    %c2_109 = arith.constant 2 : index
    %c0_110 = arith.constant 0 : index
    %c0_111 = arith.constant 0 : index
    %209 = vector.load %arg12[%c2_109, %c0_110, %c0_111] : memref<5x32x32xf32, #tpu.memory_space<vmem>>, vector<1x32x32xf32>
    %210 = vector.shape_cast %209 : vector<1x32x32xf32> to vector<32x32xf32>
    %cst_112 = arith.constant dense<0.000000e+00> : vector<32x32xf32>
    %211 = tpu.matmul %210, %191, %cst_112 {dimension_numbers = #tpu.dot_dimension_numbers<[1], [0], [0], [1], [0, 0, 1, 1], [], []>} : vector<32x32xf32>, vector<32x32xf32>, vector<32x32xf32> -> vector<32x32xf32>
    %212 = arith.truncf %211 : vector<32x32xf32> to vector<32x32xbf16>
    %c2_113 = arith.constant 2 : index
    %c0_114 = arith.constant 0 : index
    %c0_115 = arith.constant 0 : index
    %213 = vector.load %arg13[%c2_113, %c0_114, %c0_115] : memref<5x32x32xbf16, #tpu.memory_space<vmem>>, vector<1x32x32xbf16>
    %214 = vector.shape_cast %213 : vector<1x32x32xbf16> to vector<32x32xbf16>
    %cst_116 = arith.constant dense<0.000000e+00> : vector<32x32xf32>
    %215 = tpu.matmul %212, %214, %cst_116 {dimension_numbers = #tpu.dot_dimension_numbers<[1], [0], [0], [1], [0, 0, 1, 1], [], []>} : vector<32x32xbf16>, vector<32x32xbf16>, vector<32x32xf32> -> vector<32x32xf32>
    %216 = arith.addf %208, %215 : vector<32x32xf32>
    %c3 = arith.constant 3 : index
    %c0_117 = arith.constant 0 : index
    %c0_118 = arith.constant 0 : index
    %217 = vector.load %arg12[%c3, %c0_117, %c0_118] : memref<5x32x32xf32, #tpu.memory_space<vmem>>, vector<1x32x32xf32>
    %218 = vector.shape_cast %217 : vector<1x32x32xf32> to vector<32x32xf32>
    %cst_119 = arith.constant dense<0.000000e+00> : vector<32x32xf32>
    %219 = tpu.matmul %218, %191, %cst_119 {dimension_numbers = #tpu.dot_dimension_numbers<[1], [0], [0], [1], [0, 0, 1, 1], [], []>} : vector<32x32xf32>, vector<32x32xf32>, vector<32x32xf32> -> vector<32x32xf32>
    %220 = arith.truncf %219 : vector<32x32xf32> to vector<32x32xbf16>
    %c3_120 = arith.constant 3 : index
    %c0_121 = arith.constant 0 : index
    %c0_122 = arith.constant 0 : index
    %221 = vector.load %arg13[%c3_120, %c0_121, %c0_122] : memref<5x32x32xbf16, #tpu.memory_space<vmem>>, vector<1x32x32xbf16>
    %222 = vector.shape_cast %221 : vector<1x32x32xbf16> to vector<32x32xbf16>
    %cst_123 = arith.constant dense<0.000000e+00> : vector<32x32xf32>
    %223 = tpu.matmul %220, %222, %cst_123 {dimension_numbers = #tpu.dot_dimension_numbers<[1], [0], [0], [1], [0, 0, 1, 1], [], []>} : vector<32x32xbf16>, vector<32x32xbf16>, vector<32x32xf32> -> vector<32x32xf32>
    %224 = arith.addf %216, %223 : vector<32x32xf32>
    %c4 = arith.constant 4 : index
    %c0_124 = arith.constant 0 : index
    %c0_125 = arith.constant 0 : index
    %225 = vector.load %arg12[%c4, %c0_124, %c0_125] : memref<5x32x32xf32, #tpu.memory_space<vmem>>, vector<1x32x32xf32>
    %226 = vector.shape_cast %225 : vector<1x32x32xf32> to vector<32x32xf32>
    %cst_126 = arith.constant dense<0.000000e+00> : vector<32x32xf32>
    %227 = tpu.matmul %226, %191, %cst_126 {dimension_numbers = #tpu.dot_dimension_numbers<[1], [0], [0], [1], [0, 0, 1, 1], [], []>} : vector<32x32xf32>, vector<32x32xf32>, vector<32x32xf32> -> vector<32x32xf32>
    %228 = arith.truncf %227 : vector<32x32xf32> to vector<32x32xbf16>
    %c4_127 = arith.constant 4 : index
    %c0_128 = arith.constant 0 : index
    %c0_129 = arith.constant 0 : index
    %229 = vector.load %arg13[%c4_127, %c0_128, %c0_129] : memref<5x32x32xbf16, #tpu.memory_space<vmem>>, vector<1x32x32xbf16>
    %230 = vector.shape_cast %229 : vector<1x32x32xbf16> to vector<32x32xbf16>
    %cst_130 = arith.constant dense<0.000000e+00> : vector<32x32xf32>
    %231 = tpu.matmul %228, %230, %cst_130 {dimension_numbers = #tpu.dot_dimension_numbers<[1], [0], [0], [1], [0, 0, 1, 1], [], []>} : vector<32x32xbf16>, vector<32x32xbf16>, vector<32x32xf32> -> vector<32x32xf32>
    %232 = arith.addf %224, %231 : vector<32x32xf32>
    %c0_131 = arith.constant 0 : index
    %c0_132 = arith.constant 0 : index
    %233 = vector.load %arg14[%c0_131, %c0_132] : memref<1x32xf32, #tpu.memory_space<vmem>>, vector<1x32xf32>
    %234 = vector.broadcast %233 : vector<1x32xf32> to vector<32x32xf32>
    %235 = arith.addf %232, %234 : vector<32x32xf32>
    %cst_133 = arith.constant 5.000000e-01 : f32
    %236 = vector.broadcast %cst_133 : f32 to vector<32x32xf32>
    %237 = arith.mulf %236, %235 : vector<32x32xf32>
    %cst_134 = arith.constant 0.707106769 : f32
    %238 = vector.broadcast %cst_134 : f32 to vector<32x32xf32>
    %239 = arith.mulf %235, %238 : vector<32x32xf32>
    %cst_135 = arith.constant 0.000000e+00 : f32
    %240 = vector.broadcast %cst_135 : f32 to vector<32x32xf32>
    %241 = arith.cmpf olt, %239, %240 : vector<32x32xf32>
    %cst_136 = arith.constant -1.000000e+00 : f32
    %cst_137 = arith.constant 1.000000e+00 : f32
    %242 = vector.broadcast %cst_136 : f32 to vector<32x32xf32>
    %243 = vector.broadcast %cst_137 : f32 to vector<32x32xf32>
    %244 = arith.select %241, %242, %243 : vector<32x32xi1>, vector<32x32xf32>
    %245 = math.absf %239 : vector<32x32xf32>
    %cst_138 = arith.constant 0.327591091 : f32
    %246 = vector.broadcast %cst_138 : f32 to vector<32x32xf32>
    %247 = arith.mulf %246, %245 : vector<32x32xf32>
    %cst_139 = arith.constant 1.000000e+00 : f32
    %248 = vector.broadcast %cst_139 : f32 to vector<32x32xf32>
    %249 = arith.addf %248, %247 : vector<32x32xf32>
    %cst_140 = arith.constant 1.000000e+00 : f32
    %250 = vector.broadcast %cst_140 : f32 to vector<32x32xf32>
    %251 = arith.divf %250, %249 : vector<32x32xf32>
    %cst_141 = arith.constant 1.06140542 : f32
    %252 = vector.broadcast %cst_141 : f32 to vector<32x32xf32>
    %253 = arith.mulf %251, %252 : vector<32x32xf32>
    %cst_142 = arith.constant -1.45315206 : f32
    %254 = vector.broadcast %cst_142 : f32 to vector<32x32xf32>
    %255 = arith.addf %254, %253 : vector<32x32xf32>
    %256 = arith.mulf %251, %255 : vector<32x32xf32>
    %cst_143 = arith.constant 1.42141378 : f32
    %257 = vector.broadcast %cst_143 : f32 to vector<32x32xf32>
    %258 = arith.addf %257, %256 : vector<32x32xf32>
    %259 = arith.mulf %251, %258 : vector<32x32xf32>
    %cst_144 = arith.constant -0.284496725 : f32
    %260 = vector.broadcast %cst_144 : f32 to vector<32x32xf32>
    %261 = arith.addf %260, %259 : vector<32x32xf32>
    %262 = arith.mulf %251, %261 : vector<32x32xf32>
    %cst_145 = arith.constant 0.254829586 : f32
    %263 = vector.broadcast %cst_145 : f32 to vector<32x32xf32>
    %264 = arith.addf %263, %262 : vector<32x32xf32>
    %265 = arith.mulf %251, %264 : vector<32x32xf32>
    %cst_146 = arith.constant 0.000000e+00 : f32
    %266 = vector.broadcast %cst_146 : f32 to vector<32x32xf32>
    %267 = arith.subf %266, %245 : vector<32x32xf32>
    %268 = arith.mulf %267, %245 : vector<32x32xf32>
    %269 = math.exp %268 : vector<32x32xf32>
    %270 = arith.mulf %265, %269 : vector<32x32xf32>
    %cst_147 = arith.constant 1.000000e+00 : f32
    %271 = vector.broadcast %cst_147 : f32 to vector<32x32xf32>
    %272 = arith.subf %271, %270 : vector<32x32xf32>
    %273 = arith.mulf %244, %272 : vector<32x32xf32>
    %cst_148 = arith.constant 1.000000e+00 : f32
    %274 = vector.broadcast %cst_148 : f32 to vector<32x32xf32>
    %275 = arith.addf %274, %273 : vector<32x32xf32>
    %276 = arith.mulf %237, %275 : vector<32x32xf32>
    %277 = arith.addf %276, %191 : vector<32x32xf32>
    %c0_149 = arith.constant 0 : index
    %c0_150 = arith.constant 0 : index
    %278 = vector.load %arg15[%c0_149, %c0_150] : memref<1x32xf32, #tpu.memory_space<vmem>>, vector<1x32xf32>
    %c0_151 = arith.constant 0 : index
    %c0_152 = arith.constant 0 : index
    %279 = vector.load %arg16[%c0_151, %c0_152] : memref<1x32xf32, #tpu.memory_space<vmem>>, vector<1x32xf32>
    %cst_153 = arith.constant dense<0.000000e+00> : vector<32xf32>
    %280 = vector.multi_reduction <add>, %277, %cst_153 [1] : vector<32x32xf32> to vector<32xf32>
    %281 = vector.shape_cast %280 : vector<32xf32> to vector<32x1xf32>
    %cst_154 = arith.constant 3.200000e+01 : f32
    %282 = vector.broadcast %cst_154 : f32 to vector<32x1xf32>
    %283 = arith.divf %281, %282 : vector<32x1xf32>
    %284 = vector.broadcast %283 : vector<32x1xf32> to vector<32x32xf32>
    %285 = arith.subf %277, %284 : vector<32x32xf32>
    %286 = arith.mulf %285, %285 : vector<32x32xf32>
    %cst_155 = arith.constant dense<0.000000e+00> : vector<32xf32>
    %287 = vector.multi_reduction <add>, %286, %cst_155 [1] : vector<32x32xf32> to vector<32xf32>
    %288 = vector.shape_cast %287 : vector<32xf32> to vector<32x1xf32>
    %cst_156 = arith.constant 3.200000e+01 : f32
    %289 = vector.broadcast %cst_156 : f32 to vector<32x1xf32>
    %290 = arith.divf %288, %289 : vector<32x1xf32>
    %291 = vector.broadcast %283 : vector<32x1xf32> to vector<32x32xf32>
    %292 = arith.subf %277, %291 : vector<32x32xf32>
    %cst_157 = arith.constant 9.99999974E-6 : f32
    %293 = vector.broadcast %cst_157 : f32 to vector<32x1xf32>
    %294 = arith.addf %290, %293 : vector<32x1xf32>
    %295 = math.rsqrt %294 : vector<32x1xf32>
    %296 = vector.broadcast %295 : vector<32x1xf32> to vector<32x32xf32>
    %297 = arith.mulf %292, %296 : vector<32x32xf32>
    %298 = vector.broadcast %278 : vector<1x32xf32> to vector<32x32xf32>
    %299 = arith.mulf %297, %298 : vector<32x32xf32>
    %300 = vector.broadcast %279 : vector<1x32xf32> to vector<32x32xf32>
    %301 = arith.addf %299, %300 : vector<32x32xf32>
    %c0_158 = arith.constant 0 : index
    %c0_159 = arith.constant 0 : index
    %c0_160 = arith.constant 0 : index
    %302 = vector.load %arg17[%c0_158, %c0_159, %c0_160] : memref<1x32x32xf32, #tpu.memory_space<vmem>>, vector<1x32x32xf32>
    %303 = vector.shape_cast %302 : vector<1x32x32xf32> to vector<32x32xf32>
    %304 = vector.shape_cast %301 : vector<32x32xf32> to vector<1x32x32xf32>
    tpu.vector_store %arg17[%c0_158, %c0_159, %c0_160], %304 {strides = array<i32>} : memref<1x32x32xf32, #tpu.memory_space<vmem>>, vector<1x32x32xf32>,
    return
  }
  func.func @transform_0(%arg0: i32) -> (i32, i32, i32) {
    %c0_i32 = arith.constant 0 : i32
    %c0_i32_0 = arith.constant 0 : i32
    %c0_i32_1 = arith.constant 0 : i32
    return %arg0, %c0_i32, %c0_i32_0 : i32, i32, i32
  }
  func.func @transform_1(%arg0: i32) -> (i32, i32) {
    %c0_i32 = arith.constant 0 : i32
    %c0_i32_0 = arith.constant 0 : i32
    %c0_i32_1 = arith.constant 0 : i32
    return %c0_i32, %c0_i32_0 : i32, i32
  }
  func.func @transform_2(%arg0: i32) -> (i32, i32) {
    %c0_i32 = arith.constant 0 : i32
    %c0_i32_0 = arith.constant 0 : i32
    %c0_i32_1 = arith.constant 0 : i32
    return %c0_i32, %c0_i32_0 : i32, i32
  }
  func.func @transform_3(%arg0: i32) -> (i32, i32) {
    %c0_i32 = arith.constant 0 : i32
    %c0_i32_0 = arith.constant 0 : i32
    %c0_i32_1 = arith.constant 0 : i32
    return %c0_i32, %c0_i32_0 : i32, i32
  }
  func.func @transform_4(%arg0: i32) -> (i32, i32) {
    %c0_i32 = arith.constant 0 : i32
    %c0_i32_0 = arith.constant 0 : i32
    %c0_i32_1 = arith.constant 0 : i32
    return %c0_i32, %c0_i32_0 : i32, i32
  }
  func.func @transform_5(%arg0: i32) -> (i32, i32, i32) {
    %c0_i32 = arith.constant 0 : i32
    %c0_i32_0 = arith.constant 0 : i32
    %c0_i32_1 = arith.constant 0 : i32
    %c0_i32_2 = arith.constant 0 : i32
    return %c0_i32, %c0_i32_0, %c0_i32_1 : i32, i32, i32
  }
  func.func @transform_6(%arg0: i32) -> (i32, i32, i32) {
    %c0_i32 = arith.constant 0 : i32
    %c0_i32_0 = arith.constant 0 : i32
    %c0_i32_1 = arith.constant 0 : i32
    %c0_i32_2 = arith.constant 0 : i32
    return %c0_i32, %c0_i32_0, %c0_i32_1 : i32, i32, i32
  }
  func.func @transform_7(%arg0: i32) -> (i32, i32) {
    %c0_i32 = arith.constant 0 : i32
    %c0_i32_0 = arith.constant 0 : i32
    %c0_i32_1 = arith.constant 0 : i32
    return %c0_i32, %c0_i32_0 : i32, i32
  }
  func.func @transform_8(%arg0: i32) -> (i32, i32) {
    %c0_i32 = arith.constant 0 : i32
    %c0_i32_0 = arith.constant 0 : i32
    %c0_i32_1 = arith.constant 0 : i32
    return %c0_i32, %c0_i32_0 : i32, i32
  }
  func.func @transform_9(%arg0: i32) -> (i32, i32) {
    %c0_i32 = arith.constant 0 : i32
    %c0_i32_0 = arith.constant 0 : i32
    %c0_i32_1 = arith.constant 0 : i32
    return %c0_i32, %c0_i32_0 : i32, i32
  }
  func.func @transform_10(%arg0: i32) -> (i32, i32) {
    %c0_i32 = arith.constant 0 : i32
    %c0_i32_0 = arith.constant 0 : i32
    %c0_i32_1 = arith.constant 0 : i32
    return %c0_i32, %c0_i32_0 : i32, i32
  }
  func.func @transform_11(%arg0: i32) -> (i32, i32, i32) {
    %c0_i32 = arith.constant 0 : i32
    %c0_i32_0 = arith.constant 0 : i32
    %c0_i32_1 = arith.constant 0 : i32
    %c0_i32_2 = arith.constant 0 : i32
    return %c0_i32, %c0_i32_0, %c0_i32_1 : i32, i32, i32
  }
  func.func @transform_12(%arg0: i32) -> (i32, i32, i32) {
    %c0_i32 = arith.constant 0 : i32
    %c0_i32_0 = arith.constant 0 : i32
    %c0_i32_1 = arith.constant 0 : i32
    %c0_i32_2 = arith.constant 0 : i32
    return %c0_i32, %c0_i32_0, %c0_i32_1 : i32, i32, i32
  }
  func.func @transform_13(%arg0: i32) -> (i32, i32) {
    %c0_i32 = arith.constant 0 : i32
    %c0_i32_0 = arith.constant 0 : i32
    %c0_i32_1 = arith.constant 0 : i32
    return %c0_i32, %c0_i32_0 : i32, i32
  }
  func.func @transform_14(%arg0: i32) -> (i32, i32) {
    %c0_i32 = arith.constant 0 : i32
    %c0_i32_0 = arith.constant 0 : i32
    %c0_i32_1 = arith.constant 0 : i32
    return %c0_i32, %c0_i32_0 : i32, i32
  }
  func.func @transform_15(%arg0: i32) -> (i32, i32) {
    %c0_i32 = arith.constant 0 : i32
    %c0_i32_0 = arith.constant 0 : i32
    %c0_i32_1 = arith.constant 0 : i32
    return %c0_i32, %c0_i32_0 : i32, i32
  }
  func.func @transform_16(%arg0: i32) -> (i32, i32, i32) {
    %c0_i32 = arith.constant 0 : i32
    %c0_i32_0 = arith.constant 0 : i32
    %c0_i32_1 = arith.constant 0 : i32
    return %arg0, %c0_i32, %c0_i32_0 : i32, i32, i32
  }
}

module attributes {stable_mosaic.version = 11 : i64} {
  func.func @_encoder_stack_kernel(%arg0: i32, %arg1: i32, %arg2: memref<1x32x32xf32, #tpu.memory_space<vmem>>, %arg3: memref<1x32x96xbf16, #tpu.memory_space<vmem>>, %arg4: memref<1x1x96xf32, #tpu.memory_space<vmem>>, %arg5: memref<1x4x8x32xbf16, #tpu.memory_space<vmem>>, %arg6: memref<1x1x32xf32, #tpu.memory_space<vmem>>, %arg7: memref<1x1x32xf32, #tpu.memory_space<vmem>>, %arg8: memref<1x1x32xf32, #tpu.memory_space<vmem>>, %arg9: memref<1x32x64xbf16, #tpu.memory_space<vmem>>, %arg10: memref<1x1x64xf32, #tpu.memory_space<vmem>>, %arg11: memref<1x64x32xbf16, #tpu.memory_space<vmem>>, %arg12: memref<1x1x32xf32, #tpu.memory_space<vmem>>, %arg13: memref<1x1x32xf32, #tpu.memory_space<vmem>>, %arg14: memref<1x1x32xf32, #tpu.memory_space<vmem>>, %arg15: memref<1x1x32x32xf32, #tpu.memory_space<vmem>>, %arg16: memref<32x32xf32, #tpu.memory_space<vmem>>) attributes {dimension_semantics = [#tpu.dimension_semantics<parallel>, #tpu.dimension_semantics<arbitrary>], iteration_bounds = array<i64: 2, 3>, scalar_prefetch = 0 : i64, scratch_operands = 1 : i64, tpu.core_type = #tpu.core_type<tc>, window_params = [{transform_indices = @transform_0, window_bounds = array<i64: 1, 32, 32>}, {transform_indices = @transform_1, window_bounds = array<i64: 1, 32, 96>}, {transform_indices = @transform_2, window_bounds = array<i64: 1, 1, 96>}, {transform_indices = @transform_3, window_bounds = array<i64: 1, 4, 8, 32>}, {transform_indices = @transform_4, window_bounds = array<i64: 1, 1, 32>}, {transform_indices = @transform_5, window_bounds = array<i64: 1, 1, 32>}, {transform_indices = @transform_6, window_bounds = array<i64: 1, 1, 32>}, {transform_indices = @transform_7, window_bounds = array<i64: 1, 32, 64>}, {transform_indices = @transform_8, window_bounds = array<i64: 1, 1, 64>}, {transform_indices = @transform_9, window_bounds = array<i64: 1, 64, 32>}, {transform_indices = @transform_10, window_bounds = array<i64: 1, 1, 32>}, {transform_indices = @transform_11, window_bounds = array<i64: 1, 1, 32>}, {transform_indices = @transform_12, window_bounds = array<i64: 1, 1, 32>}, {transform_indices = @transform_13, window_bounds = array<i64: 1, 1, 32, 32>}]} {
    %c0_i32 = arith.constant 0 : i32
    %0 = arith.cmpi eq, %arg1, %c0_i32 : i32
    %1 = arith.extui %0 : i1 to i32
    %c0_i32_0 = arith.constant 0 : i32
    %2 = arith.cmpi ne, %1, %c0_i32_0 : i32
    scf.if %2 {
      %c0_7 = arith.constant 0 : index
      %c0_8 = arith.constant 0 : index
      %c0_9 = arith.constant 0 : index
      %10 = vector.load %arg2[%c0_7, %c0_8, %c0_9] : memref<1x32x32xf32, #tpu.memory_space<vmem>>, vector<1x32x32xf32>
      %11 = vector.shape_cast %10 : vector<1x32x32xf32> to vector<32x32xf32>
      %c0_10 = arith.constant 0 : index
      %c0_11 = arith.constant 0 : index
      %12 = vector.load %arg16[%c0_10, %c0_11] : memref<32x32xf32, #tpu.memory_space<vmem>>, vector<32x32xf32>
      tpu.vector_store %arg16[%c0_10, %c0_11], %11 {strides = array<i32>} : memref<32x32xf32, #tpu.memory_space<vmem>>, vector<32x32xf32>,
    } else {
    }
    %c0 = arith.constant 0 : index
    %c0_1 = arith.constant 0 : index
    %3 = vector.load %arg16[%c0, %c0_1] : memref<32x32xf32, #tpu.memory_space<vmem>>, vector<32x32xf32>
    %c0_2 = arith.constant 0 : index
    %c0_3 = arith.constant 0 : index
    %c0_4 = arith.constant 0 : index
    %c0_5 = arith.constant 0 : index
    %4 = vector.load %arg15[%c0_2, %c0_3, %c0_4, %c0_5] : memref<1x1x32x32xf32, #tpu.memory_space<vmem>>, vector<1x1x32x32xf32>
    %5 = vector.shape_cast %4 : vector<1x1x32x32xf32> to vector<32x32xf32>
    %6 = vector.shape_cast %3 : vector<32x32xf32> to vector<1x1x32x32xf32>
    tpu.vector_store %arg15[%c0_2, %c0_3, %c0_4, %c0_5], %6 {strides = array<i32>} : memref<1x1x32x32xf32, #tpu.memory_space<vmem>>, vector<1x1x32x32xf32>,
    %c2_i32 = arith.constant 2 : i32
    %7 = arith.cmpi slt, %arg1, %c2_i32 : i32
    %8 = arith.extui %7 : i1 to i32
    %c0_i32_6 = arith.constant 0 : i32
    %9 = arith.cmpi ne, %8, %c0_i32_6 : i32
    scf.if %9 {
      %10 = arith.truncf %3 : vector<32x32xf32> to vector<32x32xbf16>
      %c0_7 = arith.constant 0 : index
      %c0_8 = arith.constant 0 : index
      %c0_9 = arith.constant 0 : index
      %11 = vector.load %arg3[%c0_7, %c0_8, %c0_9] : memref<1x32x96xbf16, #tpu.memory_space<vmem>>, vector<1x32x96xbf16>
      %12 = vector.shape_cast %11 : vector<1x32x96xbf16> to vector<32x96xbf16>
      %cst = arith.constant dense<0.000000e+00> : vector<32x96xf32>
      %13 = tpu.matmul %10, %12, %cst {dimension_numbers = #tpu.dot_dimension_numbers<[1], [0], [0], [1], [0, 0, 1, 1], [], []>} : vector<32x32xbf16>, vector<32x96xbf16>, vector<32x96xf32> -> vector<32x96xf32>
      %c0_10 = arith.constant 0 : index
      %c0_11 = arith.constant 0 : index
      %c0_12 = arith.constant 0 : index
      %14 = vector.load %arg4[%c0_10, %c0_11, %c0_12] : memref<1x1x96xf32, #tpu.memory_space<vmem>>, vector<1x1x96xf32>
      %15 = vector.shape_cast %14 : vector<1x1x96xf32> to vector<1x96xf32>
      %16 = vector.broadcast %15 : vector<1x96xf32> to vector<32x96xf32>
      %17 = arith.addf %13, %16 : vector<32x96xf32>
      %cst_13 = arith.constant 0.000000e+00 : f32
      %18 = vector.broadcast %cst_13 : f32 to vector<32x32xf32>
      %19 = vector.extract_strided_slice %17 {offsets = [0, 0], sizes = [32, 8], strides = [1, 1]} : vector<32x96xf32> to vector<32x8xf32>
      %cst_14 = arith.constant 0.353553385 : f32
      %20 = vector.broadcast %cst_14 : f32 to vector<32x8xf32>
      %21 = arith.mulf %19, %20 : vector<32x8xf32>
      %22 = arith.truncf %21 : vector<32x8xf32> to vector<32x8xbf16>
      %23 = vector.extract_strided_slice %17 {offsets = [0, 32], sizes = [32, 8], strides = [1, 1]} : vector<32x96xf32> to vector<32x8xf32>
      %24 = arith.truncf %23 : vector<32x8xf32> to vector<32x8xbf16>
      %25 = vector.extract_strided_slice %17 {offsets = [0, 64], sizes = [32, 8], strides = [1, 1]} : vector<32x96xf32> to vector<32x8xf32>
      %26 = arith.truncf %25 : vector<32x8xf32> to vector<32x8xbf16>
      %cst_15 = arith.constant dense<0.000000e+00> : vector<32x32xf32>
      %27 = tpu.matmul %22, %24, %cst_15 {dimension_numbers = #tpu.dot_dimension_numbers<[1], [1], [0], [0], [0, 0, 1, 0], [], []>} : vector<32x8xbf16>, vector<32x8xbf16>, vector<32x32xf32> -> vector<32x32xf32>
      %cst_16 = arith.constant dense<0xFF800000> : vector<32xf32>
      %28 = vector.multi_reduction <maximumf>, %27, %cst_16 [1] : vector<32x32xf32> to vector<32xf32>
      %29 = vector.shape_cast %28 : vector<32xf32> to vector<32x1xf32>
      %30 = vector.broadcast %29 : vector<32x1xf32> to vector<32x32xf32>
      %31 = arith.subf %27, %30 : vector<32x32xf32>
      %32 = math.exp %31 : vector<32x32xf32>
      %cst_17 = arith.constant dense<0.000000e+00> : vector<32xf32>
      %33 = vector.multi_reduction <add>, %32, %cst_17 [1] : vector<32x32xf32> to vector<32xf32>
      %34 = vector.shape_cast %33 : vector<32xf32> to vector<32x1xf32>
      %35 = tpu.reciprocal %34 {approx = true} : vector<32x1xf32> -> vector<32x1xf32>
      %36 = vector.broadcast %35 : vector<32x1xf32> to vector<32x32xf32>
      %37 = arith.mulf %32, %36 : vector<32x32xf32>
      %38 = arith.truncf %37 : vector<32x32xf32> to vector<32x32xbf16>
      %cst_18 = arith.constant dense<0.000000e+00> : vector<32x8xf32>
      %39 = tpu.matmul %38, %26, %cst_18 {dimension_numbers = #tpu.dot_dimension_numbers<[1], [0], [0], [1], [0, 0, 1, 1], [], []>} : vector<32x32xbf16>, vector<32x8xbf16>, vector<32x8xf32> -> vector<32x8xf32>
      %40 = arith.truncf %39 : vector<32x8xf32> to vector<32x8xbf16>
      %c0_19 = arith.constant 0 : index
      %c0_20 = arith.constant 0 : index
      %c0_21 = arith.constant 0 : index
      %c0_22 = arith.constant 0 : index
      %41 = vector.load %arg5[%c0_19, %c0_20, %c0_21, %c0_22] : memref<1x4x8x32xbf16, #tpu.memory_space<vmem>>, vector<1x1x8x32xbf16>
      %42 = vector.shape_cast %41 : vector<1x1x8x32xbf16> to vector<8x32xbf16>
      %cst_23 = arith.constant dense<0.000000e+00> : vector<32x32xf32>
      %43 = tpu.matmul %40, %42, %cst_23 {dimension_numbers = #tpu.dot_dimension_numbers<[1], [0], [0], [1], [0, 0, 1, 1], [], []>} : vector<32x8xbf16>, vector<8x32xbf16>, vector<32x32xf32> -> vector<32x32xf32>
      %44 = arith.addf %18, %43 : vector<32x32xf32>
      %45 = vector.extract_strided_slice %17 {offsets = [0, 8], sizes = [32, 8], strides = [1, 1]} : vector<32x96xf32> to vector<32x8xf32>
      %cst_24 = arith.constant 0.353553385 : f32
      %46 = vector.broadcast %cst_24 : f32 to vector<32x8xf32>
      %47 = arith.mulf %45, %46 : vector<32x8xf32>
      %48 = arith.truncf %47 : vector<32x8xf32> to vector<32x8xbf16>
      %49 = vector.extract_strided_slice %17 {offsets = [0, 40], sizes = [32, 8], strides = [1, 1]} : vector<32x96xf32> to vector<32x8xf32>
      %50 = arith.truncf %49 : vector<32x8xf32> to vector<32x8xbf16>
      %51 = vector.extract_strided_slice %17 {offsets = [0, 72], sizes = [32, 8], strides = [1, 1]} : vector<32x96xf32> to vector<32x8xf32>
      %52 = arith.truncf %51 : vector<32x8xf32> to vector<32x8xbf16>
      %cst_25 = arith.constant dense<0.000000e+00> : vector<32x32xf32>
      %53 = tpu.matmul %48, %50, %cst_25 {dimension_numbers = #tpu.dot_dimension_numbers<[1], [1], [0], [0], [0, 0, 1, 0], [], []>} : vector<32x8xbf16>, vector<32x8xbf16>, vector<32x32xf32> -> vector<32x32xf32>
      %cst_26 = arith.constant dense<0xFF800000> : vector<32xf32>
      %54 = vector.multi_reduction <maximumf>, %53, %cst_26 [1] : vector<32x32xf32> to vector<32xf32>
      %55 = vector.shape_cast %54 : vector<32xf32> to vector<32x1xf32>
      %56 = vector.broadcast %55 : vector<32x1xf32> to vector<32x32xf32>
      %57 = arith.subf %53, %56 : vector<32x32xf32>
      %58 = math.exp %57 : vector<32x32xf32>
      %cst_27 = arith.constant dense<0.000000e+00> : vector<32xf32>
      %59 = vector.multi_reduction <add>, %58, %cst_27 [1] : vector<32x32xf32> to vector<32xf32>
      %60 = vector.shape_cast %59 : vector<32xf32> to vector<32x1xf32>
      %61 = tpu.reciprocal %60 {approx = true} : vector<32x1xf32> -> vector<32x1xf32>
      %62 = vector.broadcast %61 : vector<32x1xf32> to vector<32x32xf32>
      %63 = arith.mulf %58, %62 : vector<32x32xf32>
      %64 = arith.truncf %63 : vector<32x32xf32> to vector<32x32xbf16>
      %cst_28 = arith.constant dense<0.000000e+00> : vector<32x8xf32>
      %65 = tpu.matmul %64, %52, %cst_28 {dimension_numbers = #tpu.dot_dimension_numbers<[1], [0], [0], [1], [0, 0, 1, 1], [], []>} : vector<32x32xbf16>, vector<32x8xbf16>, vector<32x8xf32> -> vector<32x8xf32>
      %66 = arith.truncf %65 : vector<32x8xf32> to vector<32x8xbf16>
      %c0_29 = arith.constant 0 : index
      %c1 = arith.constant 1 : index
      %c0_30 = arith.constant 0 : index
      %c0_31 = arith.constant 0 : index
      %67 = vector.load %arg5[%c0_29, %c1, %c0_30, %c0_31] : memref<1x4x8x32xbf16, #tpu.memory_space<vmem>>, vector<1x1x8x32xbf16>
      %68 = vector.shape_cast %67 : vector<1x1x8x32xbf16> to vector<8x32xbf16>
      %cst_32 = arith.constant dense<0.000000e+00> : vector<32x32xf32>
      %69 = tpu.matmul %66, %68, %cst_32 {dimension_numbers = #tpu.dot_dimension_numbers<[1], [0], [0], [1], [0, 0, 1, 1], [], []>} : vector<32x8xbf16>, vector<8x32xbf16>, vector<32x32xf32> -> vector<32x32xf32>
      %70 = arith.addf %44, %69 : vector<32x32xf32>
      %71 = vector.extract_strided_slice %17 {offsets = [0, 16], sizes = [32, 8], strides = [1, 1]} : vector<32x96xf32> to vector<32x8xf32>
      %cst_33 = arith.constant 0.353553385 : f32
      %72 = vector.broadcast %cst_33 : f32 to vector<32x8xf32>
      %73 = arith.mulf %71, %72 : vector<32x8xf32>
      %74 = arith.truncf %73 : vector<32x8xf32> to vector<32x8xbf16>
      %75 = vector.extract_strided_slice %17 {offsets = [0, 48], sizes = [32, 8], strides = [1, 1]} : vector<32x96xf32> to vector<32x8xf32>
      %76 = arith.truncf %75 : vector<32x8xf32> to vector<32x8xbf16>
      %77 = vector.extract_strided_slice %17 {offsets = [0, 80], sizes = [32, 8], strides = [1, 1]} : vector<32x96xf32> to vector<32x8xf32>
      %78 = arith.truncf %77 : vector<32x8xf32> to vector<32x8xbf16>
      %cst_34 = arith.constant dense<0.000000e+00> : vector<32x32xf32>
      %79 = tpu.matmul %74, %76, %cst_34 {dimension_numbers = #tpu.dot_dimension_numbers<[1], [1], [0], [0], [0, 0, 1, 0], [], []>} : vector<32x8xbf16>, vector<32x8xbf16>, vector<32x32xf32> -> vector<32x32xf32>
      %cst_35 = arith.constant dense<0xFF800000> : vector<32xf32>
      %80 = vector.multi_reduction <maximumf>, %79, %cst_35 [1] : vector<32x32xf32> to vector<32xf32>
      %81 = vector.shape_cast %80 : vector<32xf32> to vector<32x1xf32>
      %82 = vector.broadcast %81 : vector<32x1xf32> to vector<32x32xf32>
      %83 = arith.subf %79, %82 : vector<32x32xf32>
      %84 = math.exp %83 : vector<32x32xf32>
      %cst_36 = arith.constant dense<0.000000e+00> : vector<32xf32>
      %85 = vector.multi_reduction <add>, %84, %cst_36 [1] : vector<32x32xf32> to vector<32xf32>
      %86 = vector.shape_cast %85 : vector<32xf32> to vector<32x1xf32>
      %87 = tpu.reciprocal %86 {approx = true} : vector<32x1xf32> -> vector<32x1xf32>
      %88 = vector.broadcast %87 : vector<32x1xf32> to vector<32x32xf32>
      %89 = arith.mulf %84, %88 : vector<32x32xf32>
      %90 = arith.truncf %89 : vector<32x32xf32> to vector<32x32xbf16>
      %cst_37 = arith.constant dense<0.000000e+00> : vector<32x8xf32>
      %91 = tpu.matmul %90, %78, %cst_37 {dimension_numbers = #tpu.dot_dimension_numbers<[1], [0], [0], [1], [0, 0, 1, 1], [], []>} : vector<32x32xbf16>, vector<32x8xbf16>, vector<32x8xf32> -> vector<32x8xf32>
      %92 = arith.truncf %91 : vector<32x8xf32> to vector<32x8xbf16>
      %c0_38 = arith.constant 0 : index
      %c2 = arith.constant 2 : index
      %c0_39 = arith.constant 0 : index
      %c0_40 = arith.constant 0 : index
      %93 = vector.load %arg5[%c0_38, %c2, %c0_39, %c0_40] : memref<1x4x8x32xbf16, #tpu.memory_space<vmem>>, vector<1x1x8x32xbf16>
      %94 = vector.shape_cast %93 : vector<1x1x8x32xbf16> to vector<8x32xbf16>
      %cst_41 = arith.constant dense<0.000000e+00> : vector<32x32xf32>
      %95 = tpu.matmul %92, %94, %cst_41 {dimension_numbers = #tpu.dot_dimension_numbers<[1], [0], [0], [1], [0, 0, 1, 1], [], []>} : vector<32x8xbf16>, vector<8x32xbf16>, vector<32x32xf32> -> vector<32x32xf32>
      %96 = arith.addf %70, %95 : vector<32x32xf32>
      %97 = vector.extract_strided_slice %17 {offsets = [0, 24], sizes = [32, 8], strides = [1, 1]} : vector<32x96xf32> to vector<32x8xf32>
      %cst_42 = arith.constant 0.353553385 : f32
      %98 = vector.broadcast %cst_42 : f32 to vector<32x8xf32>
      %99 = arith.mulf %97, %98 : vector<32x8xf32>
      %100 = arith.truncf %99 : vector<32x8xf32> to vector<32x8xbf16>
      %101 = vector.extract_strided_slice %17 {offsets = [0, 56], sizes = [32, 8], strides = [1, 1]} : vector<32x96xf32> to vector<32x8xf32>
      %102 = arith.truncf %101 : vector<32x8xf32> to vector<32x8xbf16>
      %103 = vector.extract_strided_slice %17 {offsets = [0, 88], sizes = [32, 8], strides = [1, 1]} : vector<32x96xf32> to vector<32x8xf32>
      %104 = arith.truncf %103 : vector<32x8xf32> to vector<32x8xbf16>
      %cst_43 = arith.constant dense<0.000000e+00> : vector<32x32xf32>
      %105 = tpu.matmul %100, %102, %cst_43 {dimension_numbers = #tpu.dot_dimension_numbers<[1], [1], [0], [0], [0, 0, 1, 0], [], []>} : vector<32x8xbf16>, vector<32x8xbf16>, vector<32x32xf32> -> vector<32x32xf32>
      %cst_44 = arith.constant dense<0xFF800000> : vector<32xf32>
      %106 = vector.multi_reduction <maximumf>, %105, %cst_44 [1] : vector<32x32xf32> to vector<32xf32>
      %107 = vector.shape_cast %106 : vector<32xf32> to vector<32x1xf32>
      %108 = vector.broadcast %107 : vector<32x1xf32> to vector<32x32xf32>
      %109 = arith.subf %105, %108 : vector<32x32xf32>
      %110 = math.exp %109 : vector<32x32xf32>
      %cst_45 = arith.constant dense<0.000000e+00> : vector<32xf32>
      %111 = vector.multi_reduction <add>, %110, %cst_45 [1] : vector<32x32xf32> to vector<32xf32>
      %112 = vector.shape_cast %111 : vector<32xf32> to vector<32x1xf32>
      %113 = tpu.reciprocal %112 {approx = true} : vector<32x1xf32> -> vector<32x1xf32>
      %114 = vector.broadcast %113 : vector<32x1xf32> to vector<32x32xf32>
      %115 = arith.mulf %110, %114 : vector<32x32xf32>
      %116 = arith.truncf %115 : vector<32x32xf32> to vector<32x32xbf16>
      %cst_46 = arith.constant dense<0.000000e+00> : vector<32x8xf32>
      %117 = tpu.matmul %116, %104, %cst_46 {dimension_numbers = #tpu.dot_dimension_numbers<[1], [0], [0], [1], [0, 0, 1, 1], [], []>} : vector<32x32xbf16>, vector<32x8xbf16>, vector<32x8xf32> -> vector<32x8xf32>
      %118 = arith.truncf %117 : vector<32x8xf32> to vector<32x8xbf16>
      %c0_47 = arith.constant 0 : index
      %c3 = arith.constant 3 : index
      %c0_48 = arith.constant 0 : index
      %c0_49 = arith.constant 0 : index
      %119 = vector.load %arg5[%c0_47, %c3, %c0_48, %c0_49] : memref<1x4x8x32xbf16, #tpu.memory_space<vmem>>, vector<1x1x8x32xbf16>
      %120 = vector.shape_cast %119 : vector<1x1x8x32xbf16> to vector<8x32xbf16>
      %cst_50 = arith.constant dense<0.000000e+00> : vector<32x32xf32>
      %121 = tpu.matmul %118, %120, %cst_50 {dimension_numbers = #tpu.dot_dimension_numbers<[1], [0], [0], [1], [0, 0, 1, 1], [], []>} : vector<32x8xbf16>, vector<8x32xbf16>, vector<32x32xf32> -> vector<32x32xf32>
      %122 = arith.addf %96, %121 : vector<32x32xf32>
      %c0_51 = arith.constant 0 : index
      %c0_52 = arith.constant 0 : index
      %c0_53 = arith.constant 0 : index
      %123 = vector.load %arg6[%c0_51, %c0_52, %c0_53] : memref<1x1x32xf32, #tpu.memory_space<vmem>>, vector<1x1x32xf32>
      %124 = vector.shape_cast %123 : vector<1x1x32xf32> to vector<1x32xf32>
      %125 = vector.broadcast %124 : vector<1x32xf32> to vector<32x32xf32>
      %126 = arith.addf %122, %125 : vector<32x32xf32>
      %127 = arith.addf %3, %126 : vector<32x32xf32>
      %c0_54 = arith.constant 0 : index
      %c0_55 = arith.constant 0 : index
      %c0_56 = arith.constant 0 : index
      %128 = vector.load %arg7[%c0_54, %c0_55, %c0_56] : memref<1x1x32xf32, #tpu.memory_space<vmem>>, vector<1x1x32xf32>
      %129 = vector.shape_cast %128 : vector<1x1x32xf32> to vector<1x32xf32>
      %c0_57 = arith.constant 0 : index
      %c0_58 = arith.constant 0 : index
      %c0_59 = arith.constant 0 : index
      %130 = vector.load %arg8[%c0_57, %c0_58, %c0_59] : memref<1x1x32xf32, #tpu.memory_space<vmem>>, vector<1x1x32xf32>
      %131 = vector.shape_cast %130 : vector<1x1x32xf32> to vector<1x32xf32>
      %cst_60 = arith.constant dense<0.000000e+00> : vector<32xf32>
      %132 = vector.multi_reduction <add>, %127, %cst_60 [1] : vector<32x32xf32> to vector<32xf32>
      %133 = vector.shape_cast %132 : vector<32xf32> to vector<32x1xf32>
      %cst_61 = arith.constant 3.200000e+01 : f32
      %134 = vector.broadcast %cst_61 : f32 to vector<32x1xf32>
      %135 = arith.divf %133, %134 : vector<32x1xf32>
      %136 = vector.broadcast %135 : vector<32x1xf32> to vector<32x32xf32>
      %137 = arith.subf %127, %136 : vector<32x32xf32>
      %138 = arith.mulf %137, %137 : vector<32x32xf32>
      %cst_62 = arith.constant dense<0.000000e+00> : vector<32xf32>
      %139 = vector.multi_reduction <add>, %138, %cst_62 [1] : vector<32x32xf32> to vector<32xf32>
      %140 = vector.shape_cast %139 : vector<32xf32> to vector<32x1xf32>
      %cst_63 = arith.constant 3.200000e+01 : f32
      %141 = vector.broadcast %cst_63 : f32 to vector<32x1xf32>
      %142 = arith.divf %140, %141 : vector<32x1xf32>
      %143 = vector.broadcast %135 : vector<32x1xf32> to vector<32x32xf32>
      %144 = arith.subf %127, %143 : vector<32x32xf32>
      %cst_64 = arith.constant 9.99999974E-6 : f32
      %145 = vector.broadcast %cst_64 : f32 to vector<32x1xf32>
      %146 = arith.addf %142, %145 : vector<32x1xf32>
      %147 = math.rsqrt %146 : vector<32x1xf32>
      %148 = vector.broadcast %147 : vector<32x1xf32> to vector<32x32xf32>
      %149 = arith.mulf %144, %148 : vector<32x32xf32>
      %150 = vector.broadcast %129 : vector<1x32xf32> to vector<32x32xf32>
      %151 = arith.mulf %149, %150 : vector<32x32xf32>
      %152 = vector.broadcast %131 : vector<1x32xf32> to vector<32x32xf32>
      %153 = arith.addf %151, %152 : vector<32x32xf32>
      %154 = arith.truncf %153 : vector<32x32xf32> to vector<32x32xbf16>
      %c0_65 = arith.constant 0 : index
      %c0_66 = arith.constant 0 : index
      %c0_67 = arith.constant 0 : index
      %155 = vector.load %arg9[%c0_65, %c0_66, %c0_67] : memref<1x32x64xbf16, #tpu.memory_space<vmem>>, vector<1x32x64xbf16>
      %156 = vector.shape_cast %155 : vector<1x32x64xbf16> to vector<32x64xbf16>
      %cst_68 = arith.constant dense<0.000000e+00> : vector<32x64xf32>
      %157 = tpu.matmul %154, %156, %cst_68 {dimension_numbers = #tpu.dot_dimension_numbers<[1], [0], [0], [1], [0, 0, 1, 1], [], []>} : vector<32x32xbf16>, vector<32x64xbf16>, vector<32x64xf32> -> vector<32x64xf32>
      %c0_69 = arith.constant 0 : index
      %c0_70 = arith.constant 0 : index
      %c0_71 = arith.constant 0 : index
      %158 = vector.load %arg10[%c0_69, %c0_70, %c0_71] : memref<1x1x64xf32, #tpu.memory_space<vmem>>, vector<1x1x64xf32>
      %159 = vector.shape_cast %158 : vector<1x1x64xf32> to vector<1x64xf32>
      %160 = vector.broadcast %159 : vector<1x64xf32> to vector<32x64xf32>
      %161 = arith.addf %157, %160 : vector<32x64xf32>
      %cst_72 = arith.constant 5.000000e-01 : f32
      %162 = vector.broadcast %cst_72 : f32 to vector<32x64xf32>
      %163 = arith.mulf %162, %161 : vector<32x64xf32>
      %cst_73 = arith.constant 0.707106769 : f32
      %164 = vector.broadcast %cst_73 : f32 to vector<32x64xf32>
      %165 = arith.mulf %161, %164 : vector<32x64xf32>
      %cst_74 = arith.constant 0.000000e+00 : f32
      %166 = vector.broadcast %cst_74 : f32 to vector<32x64xf32>
      %167 = arith.cmpf olt, %165, %166 : vector<32x64xf32>
      %cst_75 = arith.constant -1.000000e+00 : f32
      %cst_76 = arith.constant 1.000000e+00 : f32
      %168 = vector.broadcast %cst_75 : f32 to vector<32x64xf32>
      %169 = vector.broadcast %cst_76 : f32 to vector<32x64xf32>
      %170 = arith.select %167, %168, %169 : vector<32x64xi1>, vector<32x64xf32>
      %171 = math.absf %165 : vector<32x64xf32>
      %cst_77 = arith.constant 0.327591091 : f32
      %172 = vector.broadcast %cst_77 : f32 to vector<32x64xf32>
      %173 = arith.mulf %172, %171 : vector<32x64xf32>
      %cst_78 = arith.constant 1.000000e+00 : f32
      %174 = vector.broadcast %cst_78 : f32 to vector<32x64xf32>
      %175 = arith.addf %174, %173 : vector<32x64xf32>
      %cst_79 = arith.constant 1.000000e+00 : f32
      %176 = vector.broadcast %cst_79 : f32 to vector<32x64xf32>
      %177 = arith.divf %176, %175 : vector<32x64xf32>
      %cst_80 = arith.constant 1.06140542 : f32
      %178 = vector.broadcast %cst_80 : f32 to vector<32x64xf32>
      %179 = arith.mulf %177, %178 : vector<32x64xf32>
      %cst_81 = arith.constant -1.45315206 : f32
      %180 = vector.broadcast %cst_81 : f32 to vector<32x64xf32>
      %181 = arith.addf %180, %179 : vector<32x64xf32>
      %182 = arith.mulf %177, %181 : vector<32x64xf32>
      %cst_82 = arith.constant 1.42141378 : f32
      %183 = vector.broadcast %cst_82 : f32 to vector<32x64xf32>
      %184 = arith.addf %183, %182 : vector<32x64xf32>
      %185 = arith.mulf %177, %184 : vector<32x64xf32>
      %cst_83 = arith.constant -0.284496725 : f32
      %186 = vector.broadcast %cst_83 : f32 to vector<32x64xf32>
      %187 = arith.addf %186, %185 : vector<32x64xf32>
      %188 = arith.mulf %177, %187 : vector<32x64xf32>
      %cst_84 = arith.constant 0.254829586 : f32
      %189 = vector.broadcast %cst_84 : f32 to vector<32x64xf32>
      %190 = arith.addf %189, %188 : vector<32x64xf32>
      %191 = arith.mulf %177, %190 : vector<32x64xf32>
      %cst_85 = arith.constant 0.000000e+00 : f32
      %192 = vector.broadcast %cst_85 : f32 to vector<32x64xf32>
      %193 = arith.subf %192, %171 : vector<32x64xf32>
      %194 = arith.mulf %193, %171 : vector<32x64xf32>
      %195 = math.exp %194 : vector<32x64xf32>
      %196 = arith.mulf %191, %195 : vector<32x64xf32>
      %cst_86 = arith.constant 1.000000e+00 : f32
      %197 = vector.broadcast %cst_86 : f32 to vector<32x64xf32>
      %198 = arith.subf %197, %196 : vector<32x64xf32>
      %199 = arith.mulf %170, %198 : vector<32x64xf32>
      %cst_87 = arith.constant 1.000000e+00 : f32
      %200 = vector.broadcast %cst_87 : f32 to vector<32x64xf32>
      %201 = arith.addf %200, %199 : vector<32x64xf32>
      %202 = arith.mulf %163, %201 : vector<32x64xf32>
      %203 = arith.truncf %202 : vector<32x64xf32> to vector<32x64xbf16>
      %c0_88 = arith.constant 0 : index
      %c0_89 = arith.constant 0 : index
      %c0_90 = arith.constant 0 : index
      %204 = vector.load %arg11[%c0_88, %c0_89, %c0_90] : memref<1x64x32xbf16, #tpu.memory_space<vmem>>, vector<1x64x32xbf16>
      %205 = vector.shape_cast %204 : vector<1x64x32xbf16> to vector<64x32xbf16>
      %cst_91 = arith.constant dense<0.000000e+00> : vector<32x32xf32>
      %206 = tpu.matmul %203, %205, %cst_91 {dimension_numbers = #tpu.dot_dimension_numbers<[1], [0], [0], [1], [0, 0, 1, 1], [], []>} : vector<32x64xbf16>, vector<64x32xbf16>, vector<32x32xf32> -> vector<32x32xf32>
      %c0_92 = arith.constant 0 : index
      %c0_93 = arith.constant 0 : index
      %c0_94 = arith.constant 0 : index
      %207 = vector.load %arg12[%c0_92, %c0_93, %c0_94] : memref<1x1x32xf32, #tpu.memory_space<vmem>>, vector<1x1x32xf32>
      %208 = vector.shape_cast %207 : vector<1x1x32xf32> to vector<1x32xf32>
      %209 = vector.broadcast %208 : vector<1x32xf32> to vector<32x32xf32>
      %210 = arith.addf %206, %209 : vector<32x32xf32>
      %211 = arith.addf %153, %210 : vector<32x32xf32>
      %c0_95 = arith.constant 0 : index
      %c0_96 = arith.constant 0 : index
      %c0_97 = arith.constant 0 : index
      %212 = vector.load %arg13[%c0_95, %c0_96, %c0_97] : memref<1x1x32xf32, #tpu.memory_space<vmem>>, vector<1x1x32xf32>
      %213 = vector.shape_cast %212 : vector<1x1x32xf32> to vector<1x32xf32>
      %c0_98 = arith.constant 0 : index
      %c0_99 = arith.constant 0 : index
      %c0_100 = arith.constant 0 : index
      %214 = vector.load %arg14[%c0_98, %c0_99, %c0_100] : memref<1x1x32xf32, #tpu.memory_space<vmem>>, vector<1x1x32xf32>
      %215 = vector.shape_cast %214 : vector<1x1x32xf32> to vector<1x32xf32>
      %cst_101 = arith.constant dense<0.000000e+00> : vector<32xf32>
      %216 = vector.multi_reduction <add>, %211, %cst_101 [1] : vector<32x32xf32> to vector<32xf32>
      %217 = vector.shape_cast %216 : vector<32xf32> to vector<32x1xf32>
      %cst_102 = arith.constant 3.200000e+01 : f32
      %218 = vector.broadcast %cst_102 : f32 to vector<32x1xf32>
      %219 = arith.divf %217, %218 : vector<32x1xf32>
      %220 = vector.broadcast %219 : vector<32x1xf32> to vector<32x32xf32>
      %221 = arith.subf %211, %220 : vector<32x32xf32>
      %222 = arith.mulf %221, %221 : vector<32x32xf32>
      %cst_103 = arith.constant dense<0.000000e+00> : vector<32xf32>
      %223 = vector.multi_reduction <add>, %222, %cst_103 [1] : vector<32x32xf32> to vector<32xf32>
      %224 = vector.shape_cast %223 : vector<32xf32> to vector<32x1xf32>
      %cst_104 = arith.constant 3.200000e+01 : f32
      %225 = vector.broadcast %cst_104 : f32 to vector<32x1xf32>
      %226 = arith.divf %224, %225 : vector<32x1xf32>
      %227 = vector.broadcast %219 : vector<32x1xf32> to vector<32x32xf32>
      %228 = arith.subf %211, %227 : vector<32x32xf32>
      %cst_105 = arith.constant 9.99999974E-6 : f32
      %229 = vector.broadcast %cst_105 : f32 to vector<32x1xf32>
      %230 = arith.addf %226, %229 : vector<32x1xf32>
      %231 = math.rsqrt %230 : vector<32x1xf32>
      %232 = vector.broadcast %231 : vector<32x1xf32> to vector<32x32xf32>
      %233 = arith.mulf %228, %232 : vector<32x32xf32>
      %234 = vector.broadcast %213 : vector<1x32xf32> to vector<32x32xf32>
      %235 = arith.mulf %233, %234 : vector<32x32xf32>
      %236 = vector.broadcast %215 : vector<1x32xf32> to vector<32x32xf32>
      %237 = arith.addf %235, %236 : vector<32x32xf32>
      %c0_106 = arith.constant 0 : index
      %c0_107 = arith.constant 0 : index
      %238 = vector.load %arg16[%c0_106, %c0_107] : memref<32x32xf32, #tpu.memory_space<vmem>>, vector<32x32xf32>
      tpu.vector_store %arg16[%c0_106, %c0_107], %237 {strides = array<i32>} : memref<32x32xf32, #tpu.memory_space<vmem>>, vector<32x32xf32>,
    } else {
    }
    return
  }
  func.func @transform_0(%arg0: i32, %arg1: i32) -> (i32, i32, i32) {
    %c0_i32 = arith.constant 0 : i32
    %c0_i32_0 = arith.constant 0 : i32
    %c0_i32_1 = arith.constant 0 : i32
    return %arg0, %c0_i32, %c0_i32_0 : i32, i32, i32
  }
  func.func @transform_1(%arg0: i32, %arg1: i32) -> (i32, i32, i32) {
    %c1_i32 = arith.constant 1 : i32
    %0 = arith.minsi %arg1, %c1_i32 : i32
    %c0_i32 = arith.constant 0 : i32
    %c0_i32_0 = arith.constant 0 : i32
    %c0_i32_1 = arith.constant 0 : i32
    return %0, %c0_i32, %c0_i32_0 : i32, i32, i32
  }
  func.func @transform_2(%arg0: i32, %arg1: i32) -> (i32, i32, i32) {
    %c1_i32 = arith.constant 1 : i32
    %0 = arith.minsi %arg1, %c1_i32 : i32
    %c0_i32 = arith.constant 0 : i32
    %c0_i32_0 = arith.constant 0 : i32
    %c0_i32_1 = arith.constant 0 : i32
    return %0, %c0_i32, %c0_i32_0 : i32, i32, i32
  }
  func.func @transform_3(%arg0: i32, %arg1: i32) -> (i32, i32, i32, i32) {
    %c1_i32 = arith.constant 1 : i32
    %0 = arith.minsi %arg1, %c1_i32 : i32
    %c0_i32 = arith.constant 0 : i32
    %c0_i32_0 = arith.constant 0 : i32
    %c0_i32_1 = arith.constant 0 : i32
    %c0_i32_2 = arith.constant 0 : i32
    return %0, %c0_i32, %c0_i32_0, %c0_i32_1 : i32, i32, i32, i32
  }
  func.func @transform_4(%arg0: i32, %arg1: i32) -> (i32, i32, i32) {
    %c1_i32 = arith.constant 1 : i32
    %0 = arith.minsi %arg1, %c1_i32 : i32
    %c0_i32 = arith.constant 0 : i32
    %c0_i32_0 = arith.constant 0 : i32
    %c0_i32_1 = arith.constant 0 : i32
    return %0, %c0_i32, %c0_i32_0 : i32, i32, i32
  }
  func.func @transform_5(%arg0: i32, %arg1: i32) -> (i32, i32, i32) {
    %c1_i32 = arith.constant 1 : i32
    %0 = arith.minsi %arg1, %c1_i32 : i32
    %c0_i32 = arith.constant 0 : i32
    %c0_i32_0 = arith.constant 0 : i32
    %c0_i32_1 = arith.constant 0 : i32
    return %0, %c0_i32, %c0_i32_0 : i32, i32, i32
  }
  func.func @transform_6(%arg0: i32, %arg1: i32) -> (i32, i32, i32) {
    %c1_i32 = arith.constant 1 : i32
    %0 = arith.minsi %arg1, %c1_i32 : i32
    %c0_i32 = arith.constant 0 : i32
    %c0_i32_0 = arith.constant 0 : i32
    %c0_i32_1 = arith.constant 0 : i32
    return %0, %c0_i32, %c0_i32_0 : i32, i32, i32
  }
  func.func @transform_7(%arg0: i32, %arg1: i32) -> (i32, i32, i32) {
    %c1_i32 = arith.constant 1 : i32
    %0 = arith.minsi %arg1, %c1_i32 : i32
    %c0_i32 = arith.constant 0 : i32
    %c0_i32_0 = arith.constant 0 : i32
    %c0_i32_1 = arith.constant 0 : i32
    return %0, %c0_i32, %c0_i32_0 : i32, i32, i32
  }
  func.func @transform_8(%arg0: i32, %arg1: i32) -> (i32, i32, i32) {
    %c1_i32 = arith.constant 1 : i32
    %0 = arith.minsi %arg1, %c1_i32 : i32
    %c0_i32 = arith.constant 0 : i32
    %c0_i32_0 = arith.constant 0 : i32
    %c0_i32_1 = arith.constant 0 : i32
    return %0, %c0_i32, %c0_i32_0 : i32, i32, i32
  }
  func.func @transform_9(%arg0: i32, %arg1: i32) -> (i32, i32, i32) {
    %c1_i32 = arith.constant 1 : i32
    %0 = arith.minsi %arg1, %c1_i32 : i32
    %c0_i32 = arith.constant 0 : i32
    %c0_i32_0 = arith.constant 0 : i32
    %c0_i32_1 = arith.constant 0 : i32
    return %0, %c0_i32, %c0_i32_0 : i32, i32, i32
  }
  func.func @transform_10(%arg0: i32, %arg1: i32) -> (i32, i32, i32) {
    %c1_i32 = arith.constant 1 : i32
    %0 = arith.minsi %arg1, %c1_i32 : i32
    %c0_i32 = arith.constant 0 : i32
    %c0_i32_0 = arith.constant 0 : i32
    %c0_i32_1 = arith.constant 0 : i32
    return %0, %c0_i32, %c0_i32_0 : i32, i32, i32
  }
  func.func @transform_11(%arg0: i32, %arg1: i32) -> (i32, i32, i32) {
    %c1_i32 = arith.constant 1 : i32
    %0 = arith.minsi %arg1, %c1_i32 : i32
    %c0_i32 = arith.constant 0 : i32
    %c0_i32_0 = arith.constant 0 : i32
    %c0_i32_1 = arith.constant 0 : i32
    return %0, %c0_i32, %c0_i32_0 : i32, i32, i32
  }
  func.func @transform_12(%arg0: i32, %arg1: i32) -> (i32, i32, i32) {
    %c1_i32 = arith.constant 1 : i32
    %0 = arith.minsi %arg1, %c1_i32 : i32
    %c0_i32 = arith.constant 0 : i32
    %c0_i32_0 = arith.constant 0 : i32
    %c0_i32_1 = arith.constant 0 : i32
    return %0, %c0_i32, %c0_i32_0 : i32, i32, i32
  }
  func.func @transform_13(%arg0: i32, %arg1: i32) -> (i32, i32, i32, i32) {
    %c0_i32 = arith.constant 0 : i32
    %c0_i32_0 = arith.constant 0 : i32
    %c0_i32_1 = arith.constant 0 : i32
    return %arg1, %arg0, %c0_i32, %c0_i32_0 : i32, i32, i32, i32
  }
}

</mosaic_0001>

<llo_original>
// kernel: hubert_forward.3
$region0: #{hubert_forward.3}
  #allocation0 [shape = 'u32[]', space=smem, size = 0x4, offset = 0x4, fixed_abs, tag = 'smem constant byte address 0x4 - core index']
  #allocation1 [shape = 'u32[72,128]{1,0:T(1,128)}', space=vmem, size = 0x9000, scoped, tag = 'internal scratch']
  #allocation2 [shape = 'f32[32,32]{1,0:T(8,128)}', space=vmem, size = 0x4000, scoped, tag = 'scratch operand']
  %s0 = inlined_call_operand.vmem [shape: f32[2,32,32], index: 0, kind: input, shape index: {}]
  %s1 = inlined_call_operand.vmem [shape: bf16[2,32,96], index: 1, kind: input, shape index: {}]
  %s2 = inlined_call_operand.vmem [shape: f32[2,1,96], index: 2, kind: input, shape index: {}]
  %s3 = inlined_call_operand.vmem [shape: bf16[2,4,8,32], index: 3, kind: input, shape index: {}]
  %s4 = inlined_call_operand.vmem [shape: f32[2,1,32], index: 4, kind: input, shape index: {}]
  %s5 = inlined_call_operand.vmem [shape: f32[2,1,32], index: 5, kind: input, shape index: {}]
  %s6 = inlined_call_operand.vmem [shape: f32[2,1,32], index: 6, kind: input, shape index: {}]
  %s7 = inlined_call_operand.vmem [shape: bf16[2,32,64], index: 7, kind: input, shape index: {}]
  %s8 = inlined_call_operand.vmem [shape: f32[2,1,64], index: 8, kind: input, shape index: {}]
  %s9 = inlined_call_operand.vmem [shape: bf16[2,64,32], index: 9, kind: input, shape index: {}]
  %s10 = inlined_call_operand.vmem [shape: f32[2,1,32], index: 10, kind: input, shape index: {}]
  %s11 = inlined_call_operand.vmem [shape: f32[2,1,32], index: 11, kind: input, shape index: {}]
  %s12 = inlined_call_operand.vmem [shape: f32[2,1,32], index: 12, kind: input, shape index: {}]
  %s13 = inlined_call_operand.hbm [shape: f32[3,2,32,32], index: 13, kind: output, shape index: {}]
  %s14 = sld [smem:[#allocation0]]
  $region93: #{hubert_forward.3} parent=0
    _
  %s16 = ssub.s32 1, %s14
  %s17 = scalar_select 0, %s16, %s14
  $region1: #{hubert_forward.3} parent=0
    #allocation3 [shape = 'u8[32768]{0}', space=vmem, size = 0x8000, scoped, tag = 'output window, operand 0']
    #allocation4 [shape = 's32[2]{0}', space=sflag, size = 0x8, scoped, tag = 'scoped memory for hubert_forward.3']
    %18 = vsyncpa [#allocation4], 0
    %s19 = scalar_lea.sflag [#allocation4], 1
    %20 = vsyncpa %s19, 0
    loop: start=0, step=1, limit=8
    $region2: #{hubert_forward.3} parent=1 // loop_pre_header
      _
    $region3: #{hubert_forward.3} parent=1 // loop_header
      %s22 = sphi 0, %s26
      %p23 = scmp.ge.s32.totalorder %s22, 8
      %s29 = sphi 0, %s41
      %s30 = sphi 0, %s37
      %s31 = sphi 0, %s29
      %s32 = sphi 0, %s30
      %s33 = sphi 0, %s31
      %s34 = sphi 0, %s32
      %s44 = sphi 0, %s46
      %s47 = sphi 0, %s44
      %s48 = sphi 0, %s47
      %s64 = sphi 0, %s48
      %s74 = sphi 0, %s76
      %s77 = sphi 0, %s74
      %s78 = sphi 0, %s77
      %s94 = sphi 0, %s78
      %s104 = sphi 0, %s106
      %s107 = sphi 0, %s104
      %s108 = sphi 0, %s107
      %s124 = sphi 0, %s108
      %s134 = sphi 0, %s136
      %s137 = sphi 0, %s134
      %s138 = sphi 0, %s137
      %s154 = sphi 0, %s138
      %s164 = sphi 0, %s166
      %s167 = sphi 0, %s164
      %s168 = sphi 0, %s167
      %s184 = sphi 0, %s168
      %s194 = sphi 0, %s196
      %s197 = sphi 0, %s194
      %s198 = sphi 0, %s197
      %s214 = sphi 0, %s198
      %s224 = sphi 0, %s226
      %s227 = sphi 0, %s224
      %s228 = sphi 0, %s227
      %s244 = sphi 0, %s228
      %s254 = sphi 0, %s256
      %s257 = sphi 0, %s254
      %s258 = sphi 0, %s257
      %s274 = sphi 0, %s258
      %s284 = sphi 0, %s286
      %s287 = sphi 0, %s284
      %s288 = sphi 0, %s287
      %s304 = sphi 0, %s288
      %s314 = sphi 0, %s316
      %s317 = sphi 0, %s314
      %s318 = sphi 0, %s317
      %s334 = sphi 0, %s318
      %s344 = sphi 0, %s346
      %s347 = sphi 0, %s344
      %s348 = sphi 0, %s347
      %s364 = sphi 0, %s348
      %s374 = sphi 0, %s376
      %s377 = sphi 0, %s374
      %s378 = sphi 0, %s377
      %s394 = sphi 0, %s378
      %s404 = sphi 0, %s406
      %s407 = sphi 0, %s404
      %s408 = sphi 0, %s407
      %s424 = sphi 0, %s408
      %s432 = sphi 0, %s434
      %s435 = sphi 0, %s432
      %s436 = sphi 0, %s435
      %s452 = sphi 0, %s436
    $region4: #{hubert_forward.3} parent=1 // loop_header_branch
      %25 = sbr.rel (%p23) target = $region8
    $region5: #{hubert_forward.3} parent=1 // loop_body
      %s27 = ssub.s32 %s22, 1
      %s28 = ssub.s32 %s22, 2
      %s35 = sadd.s32 1, %s30
      %p36 = scmp.ge.s32.totalorder %s35, 3
      %s37 = scalar_select %p36, 0, %s35
      %s38 = sadd.s32 1, %s29
      %s39 = scalar_select %p36, %s38, %s29
      %p40 = scmp.ge.s32.totalorder %s39, 2
      %s41 = scalar_select %p40, 0, %s39
      %s42 = ssub.s32 %s29, %s41
      %p43 = scmp.eq.s32.totalorder %s42, 0
      %s45 = sadd.s32 %s44, 1
      %s46 = scalar_select %p43, %s44, %s45
      %p49 = pneg %p43
      %p50 = scmp.eq.s32.totalorder %s22, 5
      %p51 = por %p49, %p50
      %p52 = scmp.ne.s32.totalorder %s44, %s47
      %p53 = scmp.eq.s32.totalorder %s22, 0
      %p54 = por %p52, %p53
      %p55 = scmp.ne.s32.totalorder %s44, %s47
      %p56 = scmp.eq.s32.totalorder %s27, 5
      %p57 = por %p55, %p56
      %p58 = scmp.ne.s32.totalorder %s47, %s48
      %p59 = scmp.eq.s32.totalorder %s27, 0
      %p60 = por %p58, %p59
      %p61 = scmp.ne.s32.totalorder %s47, %s48
      %p62 = scmp.eq.s32.totalorder %s28, 5
      %p63 = por %p61, %p62
      %p65 = scmp.ne.s32.totalorder %s48, %s64
      %p66 = scmp.eq.s32.totalorder %s28, 0
      %p67 = por %p65, %p66
      %p68 = scmp.lt.s32.totalorder %s30, 1
      %s69 = scalar_select %p68, %s30, 1
      %p70 = scmp.lt.s32.totalorder %s37, 1
      %s71 = scalar_select %p70, %s37, 1
      %s72 = ssub.s32 %s69, %s71
      %p73 = scmp.eq.s32.totalorder %s72, 0
      %s75 = sadd.s32 %s74, 1
      %s76 = scalar_select %p73, %s74, %s75
      %p79 = pneg %p73
      %p80 = scmp.eq.s32.totalorder %s22, 5
      %p81 = por %p79, %p80
      %p82 = scmp.ne.s32.totalorder %s74, %s77
      %p83 = scmp.eq.s32.totalorder %s22, 0
      %p84 = por %p82, %p83
      %p85 = scmp.ne.s32.totalorder %s74, %s77
      %p86 = scmp.eq.s32.totalorder %s27, 5
      %p87 = por %p85, %p86
      %p88 = scmp.ne.s32.totalorder %s77, %s78
      %p89 = scmp.eq.s32.totalorder %s27, 0
      %p90 = por %p88, %p89
      %p91 = scmp.ne.s32.totalorder %s77, %s78
      %p92 = scmp.eq.s32.totalorder %s28, 5
      %p93 = por %p91, %p92
      %p95 = scmp.ne.s32.totalorder %s78, %s94
      %p96 = scmp.eq.s32.totalorder %s28, 0
      %p97 = por %p95, %p96
      %p98 = scmp.lt.s32.totalorder %s30, 1
      %s99 = scalar_select %p98, %s30, 1
      %p100 = scmp.lt.s32.totalorder %s37, 1
      %s101 = scalar_select %p100, %s37, 1
      %s102 = ssub.s32 %s99, %s101
      %p103 = scmp.eq.s32.totalorder %s102, 0
      %s105 = sadd.s32 %s104, 1
      %s106 = scalar_select %p103, %s104, %s105
      %p109 = pneg %p103
      %p110 = scmp.eq.s32.totalorder %s22, 5
      %p111 = por %p109, %p110
      %p112 = scmp.ne.s32.totalorder %s104, %s107
      %p113 = scmp.eq.s32.totalorder %s22, 0
      %p114 = por %p112, %p113
      %p115 = scmp.ne.s32.totalorder %s104, %s107
      %p116 = scmp.eq.s32.totalorder %s27, 5
      %p117 = por %p115, %p116
      %p118 = scmp.ne.s32.totalorder %s107, %s108
      %p119 = scmp.eq.s32.totalorder %s27, 0
      %p120 = por %p118, %p119
      %p121 = scmp.ne.s32.totalorder %s107, %s108
      %p122 = scmp.eq.s32.totalorder %s28, 5
      %p123 = por %p121, %p122
      %p125 = scmp.ne.s32.totalorder %s108, %s124
      %p126 = scmp.eq.s32.totalorder %s28, 0
      %p127 = por %p125, %p126
      %p128 = scmp.lt.s32.totalorder %s30, 1
      %s129 = scalar_select %p128, %s30, 1
      %p130 = scmp.lt.s32.totalorder %s37, 1
      %s131 = scalar_select %p130, %s37, 1
      %s132 = ssub.s32 %s129, %s131
      %p133 = scmp.eq.s32.totalorder %s132, 0
      %s135 = sadd.s32 %s134, 1
      %s136 = scalar_select %p133, %s134, %s135
      %p139 = pneg %p133
      %p140 = scmp.eq.s32.totalorder %s22, 5
      %p141 = por %p139, %p140
      %p142 = scmp.ne.s32.totalorder %s134, %s137
      %p143 = scmp.eq.s32.totalorder %s22, 0
      %p144 = por %p142, %p143
      %p145 = scmp.ne.s32.totalorder %s134, %s137
      %p146 = scmp.eq.s32.totalorder %s27, 5
      %p147 = por %p145, %p146
      %p148 = scmp.ne.s32.totalorder %s137, %s138
      %p149 = scmp.eq.s32.totalorder %s27, 0
      %p150 = por %p148, %p149
      %p151 = scmp.ne.s32.totalorder %s137, %s138
      %p152 = scmp.eq.s32.totalorder %s28, 5
      %p153 = por %p151, %p152
      %p155 = scmp.ne.s32.totalorder %s138, %s154
      %p156 = scmp.eq.s32.totalorder %s28, 0
      %p157 = por %p155, %p156
      %p158 = scmp.lt.s32.totalorder %s30, 1
      %s159 = scalar_select %p158, %s30, 1
      %p160 = scmp.lt.s32.totalorder %s37, 1
      %s161 = scalar_select %p160, %s37, 1
      %s162 = ssub.s32 %s159, %s161
      %p163 = scmp.eq.s32.totalorder %s162, 0
      %s165 = sadd.s32 %s164, 1
      %s166 = scalar_select %p163, %s164, %s165
      %p169 = pneg %p163
      %p170 = scmp.eq.s32.totalorder %s22, 5
      %p171 = por %p169, %p170
      %p172 = scmp.ne.s32.totalorder %s164, %s167
      %p173 = scmp.eq.s32.totalorder %s22, 0
      %p174 = por %p172, %p173
      %p175 = scmp.ne.s32.totalorder %s164, %s167
      %p176 = scmp.eq.s32.totalorder %s27, 5
      %p177 = por %p175, %p176
      %p178 = scmp.ne.s32.totalorder %s167, %s168
      %p179 = scmp.eq.s32.totalorder %s27, 0
      %p180 = por %p178, %p179
      %p181 = scmp.ne.s32.totalorder %s167, %s168
      %p182 = scmp.eq.s32.totalorder %s28, 5
      %p183 = por %p181, %p182
      %p185 = scmp.ne.s32.totalorder %s168, %s184
      %p186 = scmp.eq.s32.totalorder %s28, 0
      %p187 = por %p185, %p186
      %p188 = scmp.lt.s32.totalorder %s30, 1
      %s189 = scalar_select %p188, %s30, 1
      %p190 = scmp.lt.s32.totalorder %s37, 1
      %s191 = scalar_select %p190, %s37, 1
      %s192 = ssub.s32 %s189, %s191
      %p193 = scmp.eq.s32.totalorder %s192, 0
      %s195 = sadd.s32 %s194, 1
      %s196 = scalar_select %p193, %s194, %s195
      %p199 = pneg %p193
      %p200 = scmp.eq.s32.totalorder %s22, 5
      %p201 = por %p199, %p200
      %p202 = scmp.ne.s32.totalorder %s194, %s197
      %p203 = scmp.eq.s32.totalorder %s22, 0
      %p204 = por %p202, %p203
      %p205 = scmp.ne.s32.totalorder %s194, %s197
      %p206 = scmp.eq.s32.totalorder %s27, 5
      %p207 = por %p205, %p206
      %p208 = scmp.ne.s32.totalorder %s197, %s198
      %p209 = scmp.eq.s32.totalorder %s27, 0
      %p210 = por %p208, %p209
      %p211 = scmp.ne.s32.totalorder %s197, %s198
      %p212 = scmp.eq.s32.totalorder %s28, 5
      %p213 = por %p211, %p212
      %p215 = scmp.ne.s32.totalorder %s198, %s214
      %p216 = scmp.eq.s32.totalorder %s28, 0
      %p217 = por %p215, %p216
      %p218 = scmp.lt.s32.totalorder %s30, 1
      %s219 = scalar_select %p218, %s30, 1
      %p220 = scmp.lt.s32.totalorder %s37, 1
      %s221 = scalar_select %p220, %s37, 1
      %s222 = ssub.s32 %s219, %s221
      %p223 = scmp.eq.s32.totalorder %s222, 0
      %s225 = sadd.s32 %s224, 1
      %s226 = scalar_select %p223, %s224, %s225
      %p229 = pneg %p223
      %p230 = scmp.eq.s32.totalorder %s22, 5
      %p231 = por %p229, %p230
      %p232 = scmp.ne.s32.totalorder %s224, %s227
      %p233 = scmp.eq.s32.totalorder %s22, 0
      %p234 = por %p232, %p233
      %p235 = scmp.ne.s32.totalorder %s224, %s227
      %p236 = scmp.eq.s32.totalorder %s27, 5
      %p237 = por %p235, %p236
      %p238 = scmp.ne.s32.totalorder %s227, %s228
      %p239 = scmp.eq.s32.totalorder %s27, 0
      %p240 = por %p238, %p239
      %p241 = scmp.ne.s32.totalorder %s227, %s228
      %p242 = scmp.eq.s32.totalorder %s28, 5
      %p243 = por %p241, %p242
      %p245 = scmp.ne.s32.totalorder %s228, %s244
      %p246 = scmp.eq.s32.totalorder %s28, 0
      %p247 = por %p245, %p246
      %p248 = scmp.lt.s32.totalorder %s30, 1
      %s249 = scalar_select %p248, %s30, 1
      %p250 = scmp.lt.s32.totalorder %s37, 1
      %s251 = scalar_select %p250, %s37, 1
      %s252 = ssub.s32 %s249, %s251
      %p253 = scmp.eq.s32.totalorder %s252, 0
      %s255 = sadd.s32 %s254, 1
      %s256 = scalar_select %p253, %s254, %s255
      %p259 = pneg %p253
      %p260 = scmp.eq.s32.totalorder %s22, 5
      %p261 = por %p259, %p260
      %p262 = scmp.ne.s32.totalorder %s254, %s257
      %p263 = scmp.eq.s32.totalorder %s22, 0
      %p264 = por %p262, %p263
      %p265 = scmp.ne.s32.totalorder %s254, %s257
      %p266 = scmp.eq.s32.totalorder %s27, 5
      %p267 = por %p265, %p266
      %p268 = scmp.ne.s32.totalorder %s257, %s258
      %p269 = scmp.eq.s32.totalorder %s27, 0
      %p270 = por %p268, %p269
      %p271 = scmp.ne.s32.totalorder %s257, %s258
      %p272 = scmp.eq.s32.totalorder %s28, 5
      %p273 = por %p271, %p272
      %p275 = scmp.ne.s32.totalorder %s258, %s274
      %p276 = scmp.eq.s32.totalorder %s28, 0
      %p277 = por %p275, %p276
      %p278 = scmp.lt.s32.totalorder %s30, 1
      %s279 = scalar_select %p278, %s30, 1
      %p280 = scmp.lt.s32.totalorder %s37, 1
      %s281 = scalar_select %p280, %s37, 1
      %s282 = ssub.s32 %s279, %s281
      %p283 = scmp.eq.s32.totalorder %s282, 0
      %s285 = sadd.s32 %s284, 1
      %s286 = scalar_select %p283, %s284, %s285
      %p289 = pneg %p283
      %p290 = scmp.eq.s32.totalorder %s22, 5
      %p291 = por %p289, %p290
      %p292 = scmp.ne.s32.totalorder %s284, %s287
      %p293 = scmp.eq.s32.totalorder %s22, 0
      %p294 = por %p292, %p293
      %p295 = scmp.ne.s32.totalorder %s284, %s287
      %p296 = scmp.eq.s32.totalorder %s27, 5
      %p297 = por %p295, %p296
      %p298 = scmp.ne.s32.totalorder %s287, %s288
      %p299 = scmp.eq.s32.totalorder %s27, 0
      %p300 = por %p298, %p299
      %p301 = scmp.ne.s32.totalorder %s287, %s288
      %p302 = scmp.eq.s32.totalorder %s28, 5
      %p303 = por %p301, %p302
      %p305 = scmp.ne.s32.totalorder %s288, %s304
      %p306 = scmp.eq.s32.totalorder %s28, 0
      %p307 = por %p305, %p306
      %p308 = scmp.lt.s32.totalorder %s30, 1
      %s309 = scalar_select %p308, %s30, 1
      %p310 = scmp.lt.s32.totalorder %s37, 1
      %s311 = scalar_select %p310, %s37, 1
      %s312 = ssub.s32 %s309, %s311
      %p313 = scmp.eq.s32.totalorder %s312, 0
      %s315 = sadd.s32 %s314, 1
      %s316 = scalar_select %p313, %s314, %s315
      %p319 = pneg %p313
      %p320 = scmp.eq.s32.totalorder %s22, 5
      %p321 = por %p319, %p320
      %p322 = scmp.ne.s32.totalorder %s314, %s317
      %p323 = scmp.eq.s32.totalorder %s22, 0
      %p324 = por %p322, %p323
      %p325 = scmp.ne.s32.totalorder %s314, %s317
      %p326 = scmp.eq.s32.totalorder %s27, 5
      %p327 = por %p325, %p326
      %p328 = scmp.ne.s32.totalorder %s317, %s318
      %p329 = scmp.eq.s32.totalorder %s27, 0
      %p330 = por %p328, %p329
      %p331 = scmp.ne.s32.totalorder %s317, %s318
      %p332 = scmp.eq.s32.totalorder %s28, 5
      %p333 = por %p331, %p332
      %p335 = scmp.ne.s32.totalorder %s318, %s334
      %p336 = scmp.eq.s32.totalorder %s28, 0
      %p337 = por %p335, %p336
      %p338 = scmp.lt.s32.totalorder %s30, 1
      %s339 = scalar_select %p338, %s30, 1
      %p340 = scmp.lt.s32.totalorder %s37, 1
      %s341 = scalar_select %p340, %s37, 1
      %s342 = ssub.s32 %s339, %s341
      %p343 = scmp.eq.s32.totalorder %s342, 0
      %s345 = sadd.s32 %s344, 1
      %s346 = scalar_select %p343, %s344, %s345
      %p349 = pneg %p343
      %p350 = scmp.eq.s32.totalorder %s22, 5
      %p351 = por %p349, %p350
      %p352 = scmp.ne.s32.totalorder %s344, %s347
      %p353 = scmp.eq.s32.totalorder %s22, 0
      %p354 = por %p352, %p353
      %p355 = scmp.ne.s32.totalorder %s344, %s347
      %p356 = scmp.eq.s32.totalorder %s27, 5
      %p357 = por %p355, %p356
      %p358 = scmp.ne.s32.totalorder %s347, %s348
      %p359 = scmp.eq.s32.totalorder %s27, 0
      %p360 = por %p358, %p359
      %p361 = scmp.ne.s32.totalorder %s347, %s348
      %p362 = scmp.eq.s32.totalorder %s28, 5
      %p363 = por %p361, %p362
      %p365 = scmp.ne.s32.totalorder %s348, %s364
      %p366 = scmp.eq.s32.totalorder %s28, 0
      %p367 = por %p365, %p366
      %p368 = scmp.lt.s32.totalorder %s30, 1
      %s369 = scalar_select %p368, %s30, 1
      %p370 = scmp.lt.s32.totalorder %s37, 1
      %s371 = scalar_select %p370, %s37, 1
      %s372 = ssub.s32 %s369, %s371
      %p373 = scmp.eq.s32.totalorder %s372, 0
      %s375 = sadd.s32 %s374, 1
      %s376 = scalar_select %p373, %s374, %s375
      %p379 = pneg %p373
      %p380 = scmp.eq.s32.totalorder %s22, 5
      %p381 = por %p379, %p380
      %p382 = scmp.ne.s32.totalorder %s374, %s377
      %p383 = scmp.eq.s32.totalorder %s22, 0
      %p384 = por %p382, %p383
      %p385 = scmp.ne.s32.totalorder %s374, %s377
      %p386 = scmp.eq.s32.totalorder %s27, 5
      %p387 = por %p385, %p386
      %p388 = scmp.ne.s32.totalorder %s377, %s378
      %p389 = scmp.eq.s32.totalorder %s27, 0
      %p390 = por %p388, %p389
      %p391 = scmp.ne.s32.totalorder %s377, %s378
      %p392 = scmp.eq.s32.totalorder %s28, 5
      %p393 = por %p391, %p392
      %p395 = scmp.ne.s32.totalorder %s378, %s394
      %p396 = scmp.eq.s32.totalorder %s28, 0
      %p397 = por %p395, %p396
      %p398 = scmp.lt.s32.totalorder %s30, 1
      %s399 = scalar_select %p398, %s30, 1
      %p400 = scmp.lt.s32.totalorder %s37, 1
      %s401 = scalar_select %p400, %s37, 1
      %s402 = ssub.s32 %s399, %s401
      %p403 = scmp.eq.s32.totalorder %s402, 0
      %s405 = sadd.s32 %s404, 1
      %s406 = scalar_select %p403, %s404, %s405
      %p409 = pneg %p403
      %p410 = scmp.eq.s32.totalorder %s22, 5
      %p411 = por %p409, %p410
      %p412 = scmp.ne.s32.totalorder %s404, %s407
      %p413 = scmp.eq.s32.totalorder %s22, 0
      %p414 = por %p412, %p413
      %p415 = scmp.ne.s32.totalorder %s404, %s407
      %p416 = scmp.eq.s32.totalorder %s27, 5
      %p417 = por %p415, %p416
      %p418 = scmp.ne.s32.totalorder %s407, %s408
      %p419 = scmp.eq.s32.totalorder %s27, 0
      %p420 = por %p418, %p419
      %p421 = scmp.ne.s32.totalorder %s407, %s408
      %p422 = scmp.eq.s32.totalorder %s28, 5
      %p423 = por %p421, %p422
      %p425 = scmp.ne.s32.totalorder %s408, %s424
      %p426 = scmp.eq.s32.totalorder %s28, 0
      %p427 = por %p425, %p426
      %s428 = ssub.s32 %s30, %s37
      %s429 = ssub.s32 %s29, %s41
      %s430 = sor.u32 %s428, %s429
      %p431 = scmp.eq.s32.totalorder %s430, 0
      %s433 = sadd.s32 %s432, 1
      %s434 = scalar_select %p431, %s432, %s433
      %p437 = pneg %p431
      %p438 = scmp.eq.s32.totalorder %s22, 5
      %p439 = por %p437, %p438
      %p440 = scmp.ne.s32.totalorder %s432, %s435
      %p441 = scmp.eq.s32.totalorder %s22, 0
      %p442 = por %p440, %p441
      %p443 = scmp.ne.s32.totalorder %s432, %s435
      %p444 = scmp.eq.s32.totalorder %s27, 5
      %p445 = por %p443, %p444
      %p446 = scmp.ne.s32.totalorder %s435, %s436
      %p447 = scmp.eq.s32.totalorder %s27, 0
      %p448 = por %p446, %p447
      %p449 = scmp.ne.s32.totalorder %s435, %s436
      %p450 = scmp.eq.s32.totalorder %s28, 5
      %p451 = por %p449, %p450
      %p453 = scmp.ne.s32.totalorder %s436, %s452
      %p454 = scmp.eq.s32.totalorder %s28, 0
      %p455 = por %p453, %p454
      %p456 = scmp.le.s32.totalorder 1, %s22
      %p457 = scmp.lt.s32.totalorder %s22, 7
      %p458 = pnand %p456, %p457
      %p459 = pneg %p458
      // Predicated region
      $region9: #{hubert_forward.3} parent=5 // pred_check
        _
      $region10: #{hubert_forward.3} parent=5 // pred_check_branch
        %461 = sbr.rel (%p458) target = $region12
      $region11: #{hubert_forward.3} parent=5 // pred_region
        %s462 = ssub.s32 %s22, 1
      $region12: #{hubert_forward.3} parent=5 // pred_fallthru
        _
      %p463 = scmp.lt.s32.totalorder %s22, 6
      // Predicated region
      $region13: #{hubert_forward.3} parent=5 // pred_check
        %p464 = pneg %p463
      $region14: #{hubert_forward.3} parent=5 // pred_check_branch
        %466 = sbr.rel (%p464) target = $region16
      $region15: #{hubert_forward.3} parent=5 // pred_region
        // Predicated region
        $region17: #{hubert_forward.3} parent=15 // pred_check
          %p467 = pneg %p54
        $region18: #{hubert_forward.3} parent=15 // pred_check_branch
          %469 = sbr.rel (%p467) target = $region20
        $region19: #{hubert_forward.3} parent=15 // pred_region
          %p470 = scmp.lt.s32.totalorder %s29, 1
          %s471 = scalar_select %p470, %s29, 1
          %s472 = smul.addr %s471, 4
          %s473 = smul.addr %s472, 8
          %s474 = scalar_lea.vmem %s0, %s473
        $region20: #{hubert_forward.3} parent=15 // pred_fallthru
          _
        // Predicated region
        $region21: #{hubert_forward.3} parent=15 // pred_check
          %p475 = pneg %p84
        $region22: #{hubert_forward.3} parent=15 // pred_check_branch
          %477 = sbr.rel (%p475) target = $region24
        $region23: #{hubert_forward.3} parent=15 // pred_region
          %p478 = scmp.lt.s32.totalorder %s30, 1
          %s479 = scalar_select %p478, %s30, 1
          %p480 = scmp.lt.s32.totalorder %s479, 1
          %s481 = scalar_select %p480, %s479, 1
          %s482 = smul.addr %s481, 4
          %s483 = smul.addr %s482, 4
          %s484 = scalar_lea.vmem %s1, %s483
          %p485 = scmp.lt.s32.totalorder %s30, 1
          %s486 = scalar_select %p485, %s30, 1
        $region24: #{hubert_forward.3} parent=15 // pred_fallthru
          _
        // Predicated region
        $region25: #{hubert_forward.3} parent=15 // pred_check
          %p487 = pneg %p114
        $region26: #{hubert_forward.3} parent=15 // pred_check_branch
          %489 = sbr.rel (%p487) target = $region28
        $region27: #{hubert_forward.3} parent=15 // pred_region
          %p490 = scmp.lt.s32.totalorder %s30, 1
          %s491 = scalar_select %p490, %s30, 1
          %p492 = scmp.lt.s32.totalorder %s491, 1
          %s493 = scalar_select %p492, %s491, 1
          %s494 = scalar_lea.vmem %s2, %s493
          %p495 = scmp.lt.s32.totalorder %s30, 1
          %s496 = scalar_select %p495, %s30, 1
        $region28: #{hubert_forward.3} parent=15 // pred_fallthru
          _
        // Predicated region
        $region29: #{hubert_forward.3} parent=15 // pred_check
          %p497 = pneg %p144
        $region30: #{hubert_forward.3} parent=15 // pred_check_branch
          %499 = sbr.rel (%p497) target = $region32
        $region31: #{hubert_forward.3} parent=15 // pred_region
          %p500 = scmp.lt.s32.totalorder %s30, 1
          %s501 = scalar_select %p500, %s30, 1
          %p502 = scmp.lt.s32.totalorder %s501, 1
          %s503 = scalar_select %p502, %s501, 1
          %s504 = smul.addr %s503, 4
          %s505 = smul.addr %s504, 4
          %s506 = scalar_lea.vmem %s3, %s505
          %p507 = scmp.lt.s32.totalorder %s30, 1
          %s508 = scalar_select %p507, %s30, 1
        $region32: #{hubert_forward.3} parent=15 // pred_fallthru
          _
        // Predicated region
        $region33: #{hubert_forward.3} parent=15 // pred_check
          %p509 = pneg %p174
        $region34: #{hubert_forward.3} parent=15 // pred_check_branch
          %511 = sbr.rel (%p509) target = $region36
        $region35: #{hubert_forward.3} parent=15 // pred_region
          %p512 = scmp.lt.s32.totalorder %s30, 1
          %s513 = scalar_select %p512, %s30, 1
          %p514 = scmp.lt.s32.totalorder %s513, 1
          %s515 = scalar_select %p514, %s513, 1
          %s516 = scalar_lea.vmem %s4, %s515
          %p517 = scmp.lt.s32.totalorder %s30, 1
          %s518 = scalar_select %p517, %s30, 1
        $region36: #{hubert_forward.3} parent=15 // pred_fallthru
          _
        // Predicated region
        $region37: #{hubert_forward.3} parent=15 // pred_check
          %p519 = pneg %p204
        $region38: #{hubert_forward.3} parent=15 // pred_check_branch
          %521 = sbr.rel (%p519) target = $region40
        $region39: #{hubert_forward.3} parent=15 // pred_region
          %p522 = scmp.lt.s32.totalorder %s30, 1
          %s523 = scalar_select %p522, %s30, 1
          %p524 = scmp.lt.s32.totalorder %s523, 1
          %s525 = scalar_select %p524, %s523, 1
          %s526 = scalar_lea.vmem %s5, %s525
          %p527 = scmp.lt.s32.totalorder %s30, 1
          %s528 = scalar_select %p527, %s30, 1
        $region40: #{hubert_forward.3} parent=15 // pred_fallthru
          _
        // Predicated region
        $region41: #{hubert_forward.3} parent=15 // pred_check
          %p529 = pneg %p234
        $region42: #{hubert_forward.3} parent=15 // pred_check_branch
          %531 = sbr.rel (%p529) target = $region44
        $region43: #{hubert_forward.3} parent=15 // pred_region
          %p532 = scmp.lt.s32.totalorder %s30, 1
          %s533 = scalar_select %p532, %s30, 1
          %p534 = scmp.lt.s32.totalorder %s533, 1
          %s535 = scalar_select %p534, %s533, 1
          %s536 = scalar_lea.vmem %s6, %s535
          %p537 = scmp.lt.s32.totalorder %s30, 1
          %s538 = scalar_select %p537, %s30, 1
        $region44: #{hubert_forward.3} parent=15 // pred_fallthru
          _
        // Predicated region
        $region45: #{hubert_forward.3} parent=15 // pred_check
          %p539 = pneg %p264
        $region46: #{hubert_forward.3} parent=15 // pred_check_branch
          %541 = sbr.rel (%p539) target = $region48
        $region47: #{hubert_forward.3} parent=15 // pred_region
          %p542 = scmp.lt.s32.totalorder %s30, 1
          %s543 = scalar_select %p542, %s30, 1
          %p544 = scmp.lt.s32.totalorder %s543, 1
          %s545 = scalar_select %p544, %s543, 1
          %s546 = smul.addr %s545, 4
          %s547 = smul.addr %s546, 4
          %s548 = scalar_lea.vmem %s7, %s547
          %p549 = scmp.lt.s32.totalorder %s30, 1
          %s550 = scalar_select %p549, %s30, 1
        $region48: #{hubert_forward.3} parent=15 // pred_fallthru
          _
        // Predicated region
        $region49: #{hubert_forward.3} parent=15 // pred_check
          %p551 = pneg %p294
        $region50: #{hubert_forward.3} parent=15 // pred_check_branch
          %553 = sbr.rel (%p551) target = $region52
        $region51: #{hubert_forward.3} parent=15 // pred_region
          %p554 = scmp.lt.s32.totalorder %s30, 1
          %s555 = scalar_select %p554, %s30, 1
          %p556 = scmp.lt.s32.totalorder %s555, 1
          %s557 = scalar_select %p556, %s555, 1
          %s558 = scalar_lea.vmem %s8, %s557
          %p559 = scmp.lt.s32.totalorder %s30, 1
          %s560 = scalar_select %p559, %s30, 1
        $region52: #{hubert_forward.3} parent=15 // pred_fallthru
          _
        // Predicated region
        $region53: #{hubert_forward.3} parent=15 // pred_check
          %p561 = pneg %p324
        $region54: #{hubert_forward.3} parent=15 // pred_check_branch
          %563 = sbr.rel (%p561) target = $region56
        $region55: #{hubert_forward.3} parent=15 // pred_region
          %p564 = scmp.lt.s32.totalorder %s30, 1
          %s565 = scalar_select %p564, %s30, 1
          %p566 = scmp.lt.s32.totalorder %s565, 1
          %s567 = scalar_select %p566, %s565, 1
          %s568 = smul.addr %s567, 8
          %s569 = smul.addr %s568, 4
          %s570 = scalar_lea.vmem %s9, %s569
          %p571 = scmp.lt.s32.totalorder %s30, 1
          %s572 = scalar_select %p571, %s30, 1
        $region56: #{hubert_forward.3} parent=15 // pred_fallthru
          _
        // Predicated region
        $region57: #{hubert_forward.3} parent=15 // pred_check
          %p573 = pneg %p354
        $region58: #{hubert_forward.3} parent=15 // pred_check_branch
          %575 = sbr.rel (%p573) target = $region60
        $region59: #{hubert_forward.3} parent=15 // pred_region
          %p576 = scmp.lt.s32.totalorder %s30, 1
          %s577 = scalar_select %p576, %s30, 1
          %p578 = scmp.lt.s32.totalorder %s577, 1
          %s579 = scalar_select %p578, %s577, 1
          %s580 = scalar_lea.vmem %s10, %s579
          %p581 = scmp.lt.s32.totalorder %s30, 1
          %s582 = scalar_select %p581, %s30, 1
        $region60: #{hubert_forward.3} parent=15 // pred_fallthru
          _
        // Predicated region
        $region61: #{hubert_forward.3} parent=15 // pred_check
          %p583 = pneg %p384
        $region62: #{hubert_forward.3} parent=15 // pred_check_branch
          %585 = sbr.rel (%p583) target = $region64
        $region63: #{hubert_forward.3} parent=15 // pred_region
          %p586 = scmp.lt.s32.totalorder %s30, 1
          %s587 = scalar_select %p586, %s30, 1
          %p588 = scmp.lt.s32.totalorder %s587, 1
          %s589 = scalar_select %p588, %s587, 1
          %s590 = scalar_lea.vmem %s11, %s589
          %p591 = scmp.lt.s32.totalorder %s30, 1
          %s592 = scalar_select %p591, %s30, 1
        $region64: #{hubert_forward.3} parent=15 // pred_fallthru
          _
        // Predicated region
        $region65: #{hubert_forward.3} parent=15 // pred_check
          %p593 = pneg %p414
        $region66: #{hubert_forward.3} parent=15 // pred_check_branch
          %595 = sbr.rel (%p593) target = $region68
        $region67: #{hubert_forward.3} parent=15 // pred_region
          %p596 = scmp.lt.s32.totalorder %s30, 1
          %s597 = scalar_select %p596, %s30, 1
          %p598 = scmp.lt.s32.totalorder %s597, 1
          %s599 = scalar_select %p598, %s597, 1
          %s600 = scalar_lea.vmem %s12, %s599
          %p601 = scmp.lt.s32.totalorder %s30, 1
          %s602 = scalar_select %p601, %s30, 1
        $region68: #{hubert_forward.3} parent=15 // pred_fallthru
          _
      $region16: #{hubert_forward.3} parent=5 // pred_fallthru
        _
      %p603 = scmp.le.s32.totalorder 1, %s22
      %p604 = scmp.lt.s32.totalorder %s22, 7
      %p605 = pnand %p603, %p604
      %p606 = pneg %p605
      // Predicated region
      $region69: #{hubert_forward.3} parent=5 // pred_check
        _
      $region70: #{hubert_forward.3} parent=5 // pred_check_branch
        %608 = sbr.rel (%p605) target = $region72
      $region71: #{hubert_forward.3} parent=5 // pred_region
        %s609 = ssub.s32 %s22, 1
        %p610 = scmp.lt.s32.totalorder %s31, 1
        %s611 = scalar_select %p610, %s31, 1
        %s612 = smul.addr %s611, 4
        %s613 = smul.addr %s612, 8
        %s614 = scalar_lea.vmem %s0, %s613
        %p615 = pneg %p60
        %p616 = pneg %p57
        %p617 = scmp.lt.s32.totalorder %s32, 1
        %s618 = scalar_select %p617, %s32, 1
        %p619 = scmp.lt.s32.totalorder %s618, 1
        %s620 = scalar_select %p619, %s618, 1
        %s621 = smul.addr %s620, 4
        %s622 = smul.addr %s621, 4
        %s623 = scalar_lea.vmem %s1, %s622
        %p624 = pneg %p90
        %p625 = pneg %p87
        %p626 = scmp.lt.s32.totalorder %s32, 1
        %s627 = scalar_select %p626, %s32, 1
        %p628 = scmp.lt.s32.totalorder %s627, 1
        %s629 = scalar_select %p628, %s627, 1
        %s630 = scalar_lea.vmem %s2, %s629
        %p631 = pneg %p120
        %p632 = pneg %p117
        %p633 = scmp.lt.s32.totalorder %s32, 1
        %s634 = scalar_select %p633, %s32, 1
        %p635 = scmp.lt.s32.totalorder %s634, 1
        %s636 = scalar_select %p635, %s634, 1
        %s637 = smul.addr %s636, 4
        %s638 = smul.addr %s637, 4
        %s639 = scalar_lea.vmem %s3, %s638
        %p640 = pneg %p150
        %p641 = pneg %p147
        %p642 = scmp.lt.s32.totalorder %s32, 1
        %s643 = scalar_select %p642, %s32, 1
        %p644 = scmp.lt.s32.totalorder %s643, 1
        %s645 = scalar_select %p644, %s643, 1
        %s646 = scalar_lea.vmem %s4, %s645
        %p647 = pneg %p180
        %p648 = pneg %p177
        %p649 = scmp.lt.s32.totalorder %s32, 1
        %s650 = scalar_select %p649, %s32, 1
        %p651 = scmp.lt.s32.totalorder %s650, 1
        %s652 = scalar_select %p651, %s650, 1
        %s653 = scalar_lea.vmem %s5, %s652
        %p654 = pneg %p210
        %p655 = pneg %p207
        %p656 = scmp.lt.s32.totalorder %s32, 1
        %s657 = scalar_select %p656, %s32, 1
        %p658 = scmp.lt.s32.totalorder %s657, 1
        %s659 = scalar_select %p658, %s657, 1
        %s660 = scalar_lea.vmem %s6, %s659
        %p661 = pneg %p240
        %p662 = pneg %p237
        %p663 = scmp.lt.s32.totalorder %s32, 1
        %s664 = scalar_select %p663, %s32, 1
        %p665 = scmp.lt.s32.totalorder %s664, 1
        %s666 = scalar_select %p665, %s664, 1
        %s667 = smul.addr %s666, 4
        %s668 = smul.addr %s667, 4
        %s669 = scalar_lea.vmem %s7, %s668
        %p670 = pneg %p270
        %p671 = pneg %p267
        %p672 = scmp.lt.s32.totalorder %s32, 1
        %s673 = scalar_select %p672, %s32, 1
        %p674 = scmp.lt.s32.totalorder %s673, 1
        %s675 = scalar_select %p674, %s673, 1
        %s676 = scalar_lea.vmem %s8, %s675
        %p677 = pneg %p300
        %p678 = pneg %p297
        %p679 = scmp.lt.s32.totalorder %s32, 1
        %s680 = scalar_select %p679, %s32, 1
        %p681 = scmp.lt.s32.totalorder %s680, 1
        %s682 = scalar_select %p681, %s680, 1
        %s683 = smul.addr %s682, 8
        %s684 = smul.addr %s683, 4
        %s685 = scalar_lea.vmem %s9, %s684
        %p686 = pneg %p330
        %p687 = pneg %p327
        %p688 = scmp.lt.s32.totalorder %s32, 1
        %s689 = scalar_select %p688, %s32, 1
        %p690 = scmp.lt.s32.totalorder %s689, 1
        %s691 = scalar_select %p690, %s689, 1
        %s692 = scalar_lea.vmem %s10, %s691
        %p693 = pneg %p360
        %p694 = pneg %p357
        %p695 = scmp.lt.s32.totalorder %s32, 1
        %s696 = scalar_select %p695, %s32, 1
        %p697 = scmp.lt.s32.totalorder %s696, 1
        %s698 = scalar_select %p697, %s696, 1
        %s699 = scalar_lea.vmem %s11, %s698
        %p700 = pneg %p390
        %p701 = pneg %p387
        %p702 = scmp.lt.s32.totalorder %s32, 1
        %s703 = scalar_select %p702, %s32, 1
        %p704 = scmp.lt.s32.totalorder %s703, 1
        %s705 = scalar_select %p704, %s703, 1
        %s706 = scalar_lea.vmem %s12, %s705
        %p707 = pneg %p420
        %p708 = pneg %p417
        %p709 = pneg %p448
        %p710 = pneg %p445
        %s711 = sand.u32 %s435, 1
        %s712 = scalar_lea.sflag [#allocation4], %s711
        %s713 = sand.u32 %s435, 1
        %s714 = smul.addr %s713, 32
        %s715 = scalar_lea.vmem [#allocation3], %s714
        %p716 = scmp.lt.s32.totalorder %s31, 1
        %s717 = scalar_select %p716, %s31, 1
        %s718 = smul.addr %s717, 4
        %s719 = smul.addr %s718, 8
        %s720 = scalar_lea.vmem %s0, %s719
        %p721 = scmp.lt.s32.totalorder %s32, 1
        %s722 = scalar_select %p721, %s32, 1
        %p723 = scmp.lt.s32.totalorder %s722, 1
        %s724 = scalar_select %p723, %s722, 1
        %s725 = smul.addr %s724, 4
        %s726 = smul.addr %s725, 4
        %s727 = scalar_lea.vmem %s1, %s726
        %p728 = scmp.lt.s32.totalorder %s32, 1
        %s729 = scalar_select %p728, %s32, 1
        %p730 = scmp.lt.s32.totalorder %s32, 1
        %s731 = scalar_select %p730, %s32, 1
        %p732 = scmp.lt.s32.totalorder %s731, 1
        %s733 = scalar_select %p732, %s731, 1
        %s734 = scalar_lea.vmem %s2, %s733
        %p735 = scmp.lt.s32.totalorder %s32, 1
        %s736 = scalar_select %p735, %s32, 1
        %p737 = scmp.lt.s32.totalorder %s32, 1
        %s738 = scalar_select %p737, %s32, 1
        %p739 = scmp.lt.s32.totalorder %s738, 1
        %s740 = scalar_select %p739, %s738, 1
        %s741 = smul.addr %s740, 4
        %s742 = smul.addr %s741, 4
        %s743 = scalar_lea.vmem %s3, %s742
        %p744 = scmp.lt.s32.totalorder %s32, 1
        %s745 = scalar_select %p744, %s32, 1
        %p746 = scmp.lt.s32.totalorder %s32, 1
        %s747 = scalar_select %p746, %s32, 1
        %p748 = scmp.lt.s32.totalorder %s747, 1
        %s749 = scalar_select %p748, %s747, 1
        %s750 = scalar_lea.vmem %s4, %s749
        %p751 = scmp.lt.s32.totalorder %s32, 1
        %s752 = scalar_select %p751, %s32, 1
        %p753 = scmp.lt.s32.totalorder %s32, 1
        %s754 = scalar_select %p753, %s32, 1
        %p755 = scmp.lt.s32.totalorder %s754, 1
        %s756 = scalar_select %p755, %s754, 1
        %s757 = scalar_lea.vmem %s5, %s756
        %p758 = scmp.lt.s32.totalorder %s32, 1
        %s759 = scalar_select %p758, %s32, 1
        %p760 = scmp.lt.s32.totalorder %s32, 1
        %s761 = scalar_select %p760, %s32, 1
        %p762 = scmp.lt.s32.totalorder %s761, 1
        %s763 = scalar_select %p762, %s761, 1
        %s764 = scalar_lea.vmem %s6, %s763
        %p765 = scmp.lt.s32.totalorder %s32, 1
        %s766 = scalar_select %p765, %s32, 1
        %p767 = scmp.lt.s32.totalorder %s32, 1
        %s768 = scalar_select %p767, %s32, 1
        %p769 = scmp.lt.s32.totalorder %s768, 1
        %s770 = scalar_select %p769, %s768, 1
        %s771 = smul.addr %s770, 4
        %s772 = smul.addr %s771, 4
        %s773 = scalar_lea.vmem %s7, %s772
        %p774 = scmp.lt.s32.totalorder %s32, 1
        %s775 = scalar_select %p774, %s32, 1
        %p776 = scmp.lt.s32.totalorder %s32, 1
        %s777 = scalar_select %p776, %s32, 1
        %p778 = scmp.lt.s32.totalorder %s777, 1
        %s779 = scalar_select %p778, %s777, 1
        %s780 = scalar_lea.vmem %s8, %s779
        %p781 = scmp.lt.s32.totalorder %s32, 1
        %s782 = scalar_select %p781, %s32, 1
        %p783 = scmp.lt.s32.totalorder %s32, 1
        %s784 = scalar_select %p783, %s32, 1
        %p785 = scmp.lt.s32.totalorder %s784, 1
        %s786 = scalar_select %p785, %s784, 1
        %s787 = smul.addr %s786, 8
        %s788 = smul.addr %s787, 4
        %s789 = scalar_lea.vmem %s9, %s788
        %p790 = scmp.lt.s32.totalorder %s32, 1
        %s791 = scalar_select %p790, %s32, 1
        %p792 = scmp.lt.s32.totalorder %s32, 1
        %s793 = scalar_select %p792, %s32, 1
        %p794 = scmp.lt.s32.totalorder %s793, 1
        %s795 = scalar_select %p794, %s793, 1
        %s796 = scalar_lea.vmem %s10, %s795
        %p797 = scmp.lt.s32.totalorder %s32, 1
        %s798 = scalar_select %p797, %s32, 1
        %p799 = scmp.lt.s32.totalorder %s32, 1
        %s800 = scalar_select %p799, %s32, 1
        %p801 = scmp.lt.s32.totalorder %s800, 1
        %s802 = scalar_select %p801, %s800, 1
        %s803 = scalar_lea.vmem %s11, %s802
        %p804 = scmp.lt.s32.totalorder %s32, 1
        %s805 = scalar_select %p804, %s32, 1
        %p806 = scmp.lt.s32.totalorder %s32, 1
        %s807 = scalar_select %p806, %s32, 1
        %p808 = scmp.lt.s32.totalorder %s807, 1
        %s809 = scalar_select %p808, %s807, 1
        %s810 = scalar_lea.vmem %s12, %s809
        %p811 = scmp.lt.s32.totalorder %s32, 1
        %s812 = scalar_select %p811, %s32, 1
        %p814 = scmp.eq.s32.totalorder %s32, 0
        // Predicated region
        $region73: #{hubert_forward.3} parent=71 // pred_check
          %p815 = pneg %p814
        $region74: #{hubert_forward.3} parent=71 // pred_check_branch
          %817 = sbr.rel (%p815) target = $region76
        $region75: #{hubert_forward.3} parent=71 // pred_region
          %v818 = vld [vmem:[%s720] sm:$0xff]
          %v819 = vld [vmem:[%s720 + $0x8] sm:$0xff]
          %v820 = vld [vmem:[%s720 + $0x10] sm:$0xff]
          %v821 = vld [vmem:[%s720 + $0x18] sm:$0xff]
          %vm822 = vcmask 261120
          %823 = vst.msk [vmem:[#allocation2] sm:$0xff] %vm822, %v818
          %824 = vst.msk [vmem:[#allocation2 + $0x8] sm:$0xff] %vm822, %v819
          %825 = vst.msk [vmem:[#allocation2 + $0x10] sm:$0xff] %vm822, %v820
          %826 = vst.msk [vmem:[#allocation2 + $0x18] sm:$0xff] %vm822, %v821
        $region76: #{hubert_forward.3} parent=71 // pred_fallthru
          _
        %v827 = vld [vmem:[#allocation2] sm:$0xff]
        %v828 = vld [vmem:[#allocation2 + $0x8] sm:$0xff]
        %v829 = vld [vmem:[#allocation2 + $0x10] sm:$0xff]
        %v830 = vld [vmem:[#allocation2 + $0x18] sm:$0xff]
        %vm831 = vcmask 261120
        %832 = vst.msk [vmem:[%s715] sm:$0xff] %vm831, %v827
        %833 = vst.msk [vmem:[%s715 + $0x8] sm:$0xff] %vm831, %v828
        %834 = vst.msk [vmem:[%s715 + $0x10] sm:$0xff] %vm831, %v829
        %835 = vst.msk [vmem:[%s715 + $0x18] sm:$0xff] %vm831, %v830
        %p836 = scmp.lt.s32.totalorder %s32, 2
        // Predicated region
        $region77: #{hubert_forward.3} parent=71 // pred_check
          %p837 = pneg %p836
        $region78: #{hubert_forward.3} parent=71 // pred_check_branch
          %839 = sbr.rel (%p837) target = $region80
        $region79: #{hubert_forward.3} parent=71 // pred_region
          %v840 = vpack.c.bf16 %v828, %v827
          %v841 = vpack.c.bf16 %v830, %v829
          %v842 = vld [vmem:[%s727] sm:$0xf]
          %v843 = vld [vmem:[%s727 + $0x4] sm:$0xf]
          %v844 = vld [vmem:[%s727 + $0x8] sm:$0xf]
          %v845 = vld [vmem:[%s727 + $0xc] sm:$0xf]
          %v846 = vld [vmem:[%s734] sm:$0x1]
          %v848 = vperm.slane %v846, 0
          %v854 = vunpack.c.l.b16 %v842
          %v855 = vunpack.c.l.b16 %v843
          %v856 = vunpack.c.l.b16 %v844
          %v857 = vunpack.c.l.b16 %v845
          %v858 = vpack.c.b16 %v855, %v854
          %v859 = vpack.c.b16 %v857, %v856
          %v863 = vsel %vm831, %v840, 0
          %v866 = vsel %vm831, %v841, 0
          %868 = vmatpush.bf16.msra.mxu0 0
          %869 = vmatpush.bf16.msra.mxu0 0
          %870 = vmatpush.bf16.msra.mxu0 0
          %871 = vmatpush.bf16.msra.mxu0 0
          %872 = vmatpush.bf16.msra.mxu0 0
          %873 = vmatpush.bf16.msra.mxu0 0
          %874 = vmatpush.bf16.msra.mxu0 %v859
          %875 = vmatpush.bf16.msra.mxu0 %v858
          %876 = vmatmul.bf16.gmra.mxu0 %v863
          %v877 = vpop.f32.mrf.mxu0
          %v878 = vadd.f32 %v848, %v877
          %v879 = vpop.f32.mrf.mxu0
          %v880 = vadd.f32 %v848, %v879
          %881 = vmatmul.bf16.gmra.mxu0 %v866
          %v882 = vpop.f32.mrf.mxu0
          %v883 = vadd.f32 %v848, %v882
          %v884 = vpop.f32.mrf.mxu0
          %v885 = vadd.f32 %v848, %v884
          %886 = vdwg.mxu0
          %v887 = vmul.f32 %v878, 0.35355338
          %v888 = vmul.f32 %v880, 0.35355338
          %v889 = vmul.f32 %v883, 0.35355338
          %v890 = vmul.f32 %v885, 0.35355338
          %v891 = vpack.c.bf16 %v888, %v887
          %v892 = vpack.c.bf16 %v890, %v889
          %v893 = vpack.c.bf16 %v880, %v878
          %v894 = vpack.c.bf16 %v885, %v883
          %897 = vrot.lane.b32.xlu0 %v893, 96
          %v898 = vpop.permute.xlu0 %897
          %899 = vrot.lane.b32.xlu0 %v894, 96
          %v900 = vpop.permute.xlu0 %899
          %vm901 = vcmask 64512
          %v903 = vsel %vm901, %v891, 0
          %v906 = vsel %vm901, %v892, 0
          %v909 = vsel %vm901, %v898, 0
          %v912 = vsel %vm901, %v900, 0
          %914 = vmatpush.bf16.xpose.msra.mxu0 0
          %915 = vmatpush.bf16.xpose.msra.mxu0 0
          %916 = vmatpush.bf16.xpose.msra.mxu0 0
          %917 = vmatpush.bf16.xpose.msra.mxu0 0
          %918 = vmatpush.bf16.xpose.msra.mxu0 0
          %919 = vmatpush.bf16.xpose.msra.mxu0 0
          %920 = vmatpush.bf16.xpose.msra.mxu0 %v912
          %921 = vmatpush.bf16.xpose.msra.mxu0 %v909
          %922 = vmatmul.bf16.gmra.mxu0 %v903
          %v923 = vpop.f32.mrf.mxu0
          %v924 = vadd.f32 0.0, %v923
          %v925 = vpop.f32.mrf.mxu0
          %v926 = vadd.f32 0.0, %v925
          %927 = vmatmul.bf16.gmra.mxu0 %v906
          %v928 = vpop.f32.mrf.mxu0
          %v929 = vadd.f32 0.0, %v928
          %v930 = vpop.f32.mrf.mxu0
          %v931 = vadd.f32 0.0, %v930
          %932 = vdwg.mxu0
          %v933 = vsel %vm831, %v924, -inf
          %934 = vmax.xlane.f32.xlu0 %v933
          %v935 = vpop.xlane.xlu0 %934
          %v936 = vsel %vm831, %v926, -inf
          %937 = vmax.xlane.f32.xlu0 %v936
          %v938 = vpop.xlane.xlu0 %937
          %v939 = vsel %vm831, %v929, -inf
          %940 = vmax.xlane.f32.xlu0 %v939
          %v941 = vpop.xlane.xlu0 %940
          %v942 = vsel %vm831, %v931, -inf
          %943 = vmax.xlane.f32.xlu0 %v942
          %v944 = vpop.xlane.xlu0 %943
          %v945 = vsub.f32 %v924, %v935
          %v946 = vsub.f32 %v926, %v938
          %v947 = vsub.f32 %v929, %v941
          %v948 = vsub.f32 %v931, %v944
          %v949 = vmul.f32 %v945, 1.442695
          %v950 = vpow.pop %v949
          %v951 = vmul.f32 %v946, 1.442695
          %v952 = vpow.pop %v951
          %v953 = vmul.f32 %v947, 1.442695
          %v954 = vpow.pop %v953
          %v955 = vmul.f32 %v948, 1.442695
          %v956 = vpow.pop %v955
          %v957 = vsel %vm831, %v950, 0.0
          %958 = vadd.xlane.f32.xlu0 %v957
          %v959 = vpop.xlane.xlu0 %958
          %v960 = vsel %vm831, %v952, 0.0
          %961 = vadd.xlane.f32.xlu0 %v960
          %v962 = vpop.xlane.xlu0 %961
          %v963 = vsel %vm831, %v954, 0.0
          %964 = vadd.xlane.f32.xlu0 %v963
          %v965 = vpop.xlane.xlu0 %964
          %v966 = vsel %vm831, %v956, 0.0
          %967 = vadd.xlane.f32.xlu0 %v966
          %v968 = vpop.xlane.xlu0 %967
          %v969 = vrcp.pop %v959
          %v970 = vrcp.pop %v962
          %v971 = vrcp.pop %v965
          %v972 = vrcp.pop %v968
          %v973 = vmul.f32 %v950, %v969
          %v974 = vmul.f32 %v952, %v970
          %v975 = vmul.f32 %v954, %v971
          %v976 = vmul.f32 %v956, %v972
          %v977 = vpack.c.bf16 %v974, %v973
          %v978 = vpack.c.bf16 %v976, %v975
          %979 = vrot.lane.b32.xlu0 %v893, 64
          %v980 = vpop.permute.xlu0 %979
          %981 = vrot.lane.b32.xlu0 %v894, 64
          %v982 = vpop.permute.xlu0 %981
          %v986 = vsel %vm831, %v977, 0
          %v989 = vsel %vm831, %v978, 0
          %991 = vmatpush.bf16.msra.mxu0 0
          %992 = vmatpush.bf16.msra.mxu0 0
          %993 = vmatpush.bf16.msra.mxu0 0
          %994 = vmatpush.bf16.msra.mxu0 0
          %995 = vmatpush.bf16.msra.mxu0 0
          %996 = vmatpush.bf16.msra.mxu0 0
          %997 = vmatpush.bf16.msra.mxu0 %v982
          %998 = vmatpush.bf16.msra.mxu0 %v980
          %999 = vmatmul.bf16.gmra.mxu0 %v986
          %v1000 = vpop.f32.mrf.mxu0
          %v1001 = vadd.f32 0.0, %v1000
          %v1002 = vpop.f32.mrf.mxu0
          %v1003 = vadd.f32 0.0, %v1002
          %1004 = vmatmul.bf16.gmra.mxu0 %v989
          %v1005 = vpop.f32.mrf.mxu0
          %v1006 = vadd.f32 0.0, %v1005
          %v1007 = vpop.f32.mrf.mxu0
          %v1008 = vadd.f32 0.0, %v1007
          %1009 = vdwg.mxu0
          %v1010 = vpack.c.bf16 %v1003, %v1001
          %v1011 = vpack.c.bf16 %v1008, %v1006
          %v1012 = vld [vmem:[%s743] sm:$0xf]
          %1015 = vrot.lane.b32.xlu0 %v891, 120
          %v1016 = vpop.permute.xlu0 %1015
          %1017 = vrot.lane.b32.xlu0 %v892, 120
          %v1018 = vpop.permute.xlu0 %1017
          %1019 = vrot.lane.b32.xlu0 %v893, 88
          %v1020 = vpop.permute.xlu0 %1019
          %1021 = vrot.lane.b32.xlu0 %v894, 88
          %v1022 = vpop.permute.xlu0 %1021
          %v1024 = vsel %vm901, %v1016, 0
          %v1027 = vsel %vm901, %v1018, 0
          %v1030 = vsel %vm901, %v1020, 0
          %v1033 = vsel %vm901, %v1022, 0
          %1035 = vmatpush.bf16.xpose.msra.mxu0 0
          %1036 = vmatpush.bf16.xpose.msra.mxu0 0
          %1037 = vmatpush.bf16.xpose.msra.mxu0 0
          %1038 = vmatpush.bf16.xpose.msra.mxu0 0
          %1039 = vmatpush.bf16.xpose.msra.mxu0 0
          %1040 = vmatpush.bf16.xpose.msra.mxu0 0
          %1041 = vmatpush.bf16.xpose.msra.mxu0 %v1033
          %1042 = vmatpush.bf16.xpose.msra.mxu0 %v1030
          %1043 = vmatmul.bf16.gmra.mxu0 %v1024
          %v1044 = vpop.f32.mrf.mxu0
          %v1045 = vadd.f32 0.0, %v1044
          %v1046 = vpop.f32.mrf.mxu0
          %v1047 = vadd.f32 0.0, %v1046
          %1048 = vmatmul.bf16.gmra.mxu0 %v1027
          %v1049 = vpop.f32.mrf.mxu0
          %v1050 = vadd.f32 0.0, %v1049
          %v1051 = vpop.f32.mrf.mxu0
          %v1052 = vadd.f32 0.0, %v1051
          %1053 = vdwg.mxu0
          %v1054 = vsel %vm831, %v1045, -inf
          %1055 = vmax.xlane.f32.xlu0 %v1054
          %v1056 = vpop.xlane.xlu0 %1055
          %v1057 = vsel %vm831, %v1047, -inf
          %1058 = vmax.xlane.f32.xlu0 %v1057
          %v1059 = vpop.xlane.xlu0 %1058
          %v1060 = vsel %vm831, %v1050, -inf
          %1061 = vmax.xlane.f32.xlu0 %v1060
          %v1062 = vpop.xlane.xlu0 %1061
          %v1063 = vsel %vm831, %v1052, -inf
          %1064 = vmax.xlane.f32.xlu0 %v1063
          %v1065 = vpop.xlane.xlu0 %1064
          %v1066 = vsub.f32 %v1045, %v1056
          %v1067 = vsub.f32 %v1047, %v1059
          %v1068 = vsub.f32 %v1050, %v1062
          %v1069 = vsub.f32 %v1052, %v1065
          %v1070 = vmul.f32 %v1066, 1.442695
          %v1071 = vpow.pop %v1070
          %v1072 = vmul.f32 %v1067, 1.442695
          %v1073 = vpow.pop %v1072
          %v1074 = vmul.f32 %v1068, 1.442695
          %v1075 = vpow.pop %v1074
          %v1076 = vmul.f32 %v1069, 1.442695
          %v1077 = vpow.pop %v1076
          %v1078 = vsel %vm831, %v1071, 0.0
          %1079 = vadd.xlane.f32.xlu0 %v1078
          %v1080 = vpop.xlane.xlu0 %1079
          %v1081 = vsel %vm831, %v1073, 0.0
          %1082 = vadd.xlane.f32.xlu0 %v1081
          %v1083 = vpop.xlane.xlu0 %1082
          %v1084 = vsel %vm831, %v1075, 0.0
          %1085 = vadd.xlane.f32.xlu0 %v1084
          %v1086 = vpop.xlane.xlu0 %1085
          %v1087 = vsel %vm831, %v1077, 0.0
          %1088 = vadd.xlane.f32.xlu0 %v1087
          %v1089 = vpop.xlane.xlu0 %1088
          %v1090 = vrcp.pop %v1080
          %v1091 = vrcp.pop %v1083
          %v1092 = vrcp.pop %v1086
          %v1093 = vrcp.pop %v1089
          %v1094 = vmul.f32 %v1071, %v1090
          %v1095 = vmul.f32 %v1073, %v1091
          %v1096 = vmul.f32 %v1075, %v1092
          %v1097 = vmul.f32 %v1077, %v1093
          %v1098 = vpack.c.bf16 %v1095, %v1094
          %v1099 = vpack.c.bf16 %v1097, %v1096
          %1100 = vrot.lane.b32.xlu0 %v893, 56
          %v1101 = vpop.permute.xlu0 %1100
          %1102 = vrot.lane.b32.xlu0 %v894, 56
          %v1103 = vpop.permute.xlu0 %1102
          %v1107 = vsel %vm831, %v1098, 0
          %v1110 = vsel %vm831, %v1099, 0
          %1112 = vmatpush.bf16.msra.mxu0 0
          %1113 = vmatpush.bf16.msra.mxu0 0
          %1114 = vmatpush.bf16.msra.mxu0 0
          %1115 = vmatpush.bf16.msra.mxu0 0
          %1116 = vmatpush.bf16.msra.mxu0 0
          %1117 = vmatpush.bf16.msra.mxu0 0
          %1118 = vmatpush.bf16.msra.mxu0 %v1103
          %1119 = vmatpush.bf16.msra.mxu0 %v1101
          %1120 = vmatmul.bf16.gmra.mxu0 %v1107
          %v1121 = vpop.f32.mrf.mxu0
          %v1122 = vadd.f32 0.0, %v1121
          %v1123 = vpop.f32.mrf.mxu0
          %v1124 = vadd.f32 0.0, %v1123
          %1125 = vmatmul.bf16.gmra.mxu0 %v1110
          %v1126 = vpop.f32.mrf.mxu0
          %v1127 = vadd.f32 0.0, %v1126
          %v1128 = vpop.f32.mrf.mxu0
          %v1129 = vadd.f32 0.0, %v1128
          %1130 = vdwg.mxu0
          %v1131 = vpack.c.bf16 %v1124, %v1122
          %v1132 = vpack.c.bf16 %v1129, %v1127
          %s1133 = scalar_lea.vmem %s743, 4
          %v1134 = vld [vmem:[%s1133] sm:$0xf]
          %v1136 = vsel %vm901, %v1131, 0
          %v1139 = vsel %vm901, %v1132, 0
          %vm1141 = vcmask 1043456
          %v1143 = vsel %vm1141, %v1134, 0
          %1145 = vmatpush.bf16.msra.mxu0 0
          %1146 = vmatpush.bf16.msra.mxu0 0
          %1147 = vmatpush.bf16.msra.mxu0 0
          %1148 = vmatpush.bf16.msra.mxu0 0
          %1149 = vmatpush.bf16.msra.mxu0 0
          %1150 = vmatpush.bf16.msra.mxu0 0
          %1151 = vmatpush.bf16.msra.mxu0 0
          %1152 = vmatpush.bf16.msra.mxu0 %v1143
          %1153 = vmatmul.bf16.gmra.mxu0 %v1136
          %v1154 = vpop.f32.mrf.mxu0
          %v1155 = vadd.f32 0.0, %v1154
          %v1156 = vpop.f32.mrf.mxu0
          %v1157 = vadd.f32 0.0, %v1156
          %1158 = vmatmul.bf16.gmra.mxu0 %v1139
          %v1159 = vpop.f32.mrf.mxu0
          %v1160 = vadd.f32 0.0, %v1159
          %v1161 = vpop.f32.mrf.mxu0
          %v1162 = vadd.f32 0.0, %v1161
          %1163 = vdwg.mxu0
          %v1165 = vsel %vm901, %v1010, 0
          %v1168 = vsel %vm901, %v1011, 0
          %v1171 = vsel %vm1141, %v1012, 0
          %1173 = vmatpush.bf16.msra.mxu0 0
          %1174 = vmatpush.bf16.msra.mxu0 0
          %1175 = vmatpush.bf16.msra.mxu0 0
          %1176 = vmatpush.bf16.msra.mxu0 0
          %1177 = vmatpush.bf16.msra.mxu0 0
          %1178 = vmatpush.bf16.msra.mxu0 0
          %1179 = vmatpush.bf16.msra.mxu0 0
          %1180 = vmatpush.bf16.msra.mxu0 %v1171
          %1181 = vmatmul.bf16.gmra.mxu0 %v1165
          %v1182 = vpop.f32.mrf.mxu0
          %v1183 = vadd.f32 %v1155, %v1182
          %v1184 = vpop.f32.mrf.mxu0
          %v1185 = vadd.f32 %v1157, %v1184
          %1186 = vmatmul.bf16.gmra.mxu0 %v1168
          %v1187 = vpop.f32.mrf.mxu0
          %v1188 = vadd.f32 %v1160, %v1187
          %v1189 = vpop.f32.mrf.mxu0
          %v1190 = vadd.f32 %v1162, %v1189
          %1191 = vdwg.mxu0
          %1192 = vrot.lane.b32.xlu0 %v891, 112
          %v1193 = vpop.permute.xlu0 %1192
          %1194 = vrot.lane.b32.xlu0 %v892, 112
          %v1195 = vpop.permute.xlu0 %1194
          %1196 = vrot.lane.b32.xlu0 %v893, 80
          %v1197 = vpop.permute.xlu0 %1196
          %1198 = vrot.lane.b32.xlu0 %v894, 80
          %v1199 = vpop.permute.xlu0 %1198
          %v1201 = vsel %vm901, %v1193, 0
          %v1204 = vsel %vm901, %v1195, 0
          %v1207 = vsel %vm901, %v1197, 0
          %v1210 = vsel %vm901, %v1199, 0
          %1212 = vmatpush.bf16.xpose.msra.mxu0 0
          %1213 = vmatpush.bf16.xpose.msra.mxu0 0
          %1214 = vmatpush.bf16.xpose.msra.mxu0 0
          %1215 = vmatpush.bf16.xpose.msra.mxu0 0
          %1216 = vmatpush.bf16.xpose.msra.mxu0 0
          %1217 = vmatpush.bf16.xpose.msra.mxu0 0
          %1218 = vmatpush.bf16.xpose.msra.mxu0 %v1210
          %1219 = vmatpush.bf16.xpose.msra.mxu0 %v1207
          %1220 = vmatmul.bf16.gmra.mxu0 %v1201
          %v1221 = vpop.f32.mrf.mxu0
          %v1222 = vadd.f32 0.0, %v1221
          %v1223 = vpop.f32.mrf.mxu0
          %v1224 = vadd.f32 0.0, %v1223
          %1225 = vmatmul.bf16.gmra.mxu0 %v1204
          %v1226 = vpop.f32.mrf.mxu0
          %v1227 = vadd.f32 0.0, %v1226
          %v1228 = vpop.f32.mrf.mxu0
          %v1229 = vadd.f32 0.0, %v1228
          %1230 = vdwg.mxu0
          %v1231 = vsel %vm831, %v1222, -inf
          %1232 = vmax.xlane.f32.xlu0 %v1231
          %v1233 = vpop.xlane.xlu0 %1232
          %v1234 = vsel %vm831, %v1224, -inf
          %1235 = vmax.xlane.f32.xlu0 %v1234
          %v1236 = vpop.xlane.xlu0 %1235
          %v1237 = vsel %vm831, %v1227, -inf
          %1238 = vmax.xlane.f32.xlu0 %v1237
          %v1239 = vpop.xlane.xlu0 %1238
          %v1240 = vsel %vm831, %v1229, -inf
          %1241 = vmax.xlane.f32.xlu0 %v1240
          %v1242 = vpop.xlane.xlu0 %1241
          %v1243 = vsub.f32 %v1222, %v1233
          %v1244 = vsub.f32 %v1224, %v1236
          %v1245 = vsub.f32 %v1227, %v1239
          %v1246 = vsub.f32 %v1229, %v1242
          %v1247 = vmul.f32 %v1243, 1.442695
          %v1248 = vpow.pop %v1247
          %v1249 = vmul.f32 %v1244, 1.442695
          %v1250 = vpow.pop %v1249
          %v1251 = vmul.f32 %v1245, 1.442695
          %v1252 = vpow.pop %v1251
          %v1253 = vmul.f32 %v1246, 1.442695
          %v1254 = vpow.pop %v1253
          %v1255 = vsel %vm831, %v1248, 0.0
          %1256 = vadd.xlane.f32.xlu0 %v1255
          %v1257 = vpop.xlane.xlu0 %1256
          %v1258 = vsel %vm831, %v1250, 0.0
          %1259 = vadd.xlane.f32.xlu0 %v1258
          %v1260 = vpop.xlane.xlu0 %1259
          %v1261 = vsel %vm831, %v1252, 0.0
          %1262 = vadd.xlane.f32.xlu0 %v1261
          %v1263 = vpop.xlane.xlu0 %1262
          %v1264 = vsel %vm831, %v1254, 0.0
          %1265 = vadd.xlane.f32.xlu0 %v1264
          %v1266 = vpop.xlane.xlu0 %1265
          %v1267 = vrcp.pop %v1257
          %v1268 = vrcp.pop %v1260
          %v1269 = vrcp.pop %v1263
          %v1270 = vrcp.pop %v1266
          %v1271 = vmul.f32 %v1248, %v1267
          %v1272 = vmul.f32 %v1250, %v1268
          %v1273 = vmul.f32 %v1252, %v1269
          %v1274 = vmul.f32 %v1254, %v1270
          %v1275 = vpack.c.bf16 %v1272, %v1271
          %v1276 = vpack.c.bf16 %v1274, %v1273
          %1277 = vrot.lane.b32.xlu0 %v893, 48
          %v1278 = vpop.permute.xlu0 %1277
          %1279 = vrot.lane.b32.xlu0 %v894, 48
          %v1280 = vpop.permute.xlu0 %1279
          %v1284 = vsel %vm831, %v1275, 0
          %v1287 = vsel %vm831, %v1276, 0
          %1289 = vmatpush.bf16.msra.mxu0 0
          %1290 = vmatpush.bf16.msra.mxu0 0
          %1291 = vmatpush.bf16.msra.mxu0 0
          %1292 = vmatpush.bf16.msra.mxu0 0
          %1293 = vmatpush.bf16.msra.mxu0 0
          %1294 = vmatpush.bf16.msra.mxu0 0
          %1295 = vmatpush.bf16.msra.mxu0 %v1280
          %1296 = vmatpush.bf16.msra.mxu0 %v1278
          %1297 = vmatmul.bf16.gmra.mxu0 %v1284
          %v1298 = vpop.f32.mrf.mxu0
          %v1299 = vadd.f32 0.0, %v1298
          %v1300 = vpop.f32.mrf.mxu0
          %v1301 = vadd.f32 0.0, %v1300
          %1302 = vmatmul.bf16.gmra.mxu0 %v1287
          %v1303 = vpop.f32.mrf.mxu0
          %v1304 = vadd.f32 0.0, %v1303
          %v1305 = vpop.f32.mrf.mxu0
          %v1306 = vadd.f32 0.0, %v1305
          %1307 = vdwg.mxu0
          %v1308 = vpack.c.bf16 %v1301, %v1299
          %v1309 = vpack.c.bf16 %v1306, %v1304
          %s1310 = scalar_lea.vmem %s743, 8
          %v1311 = vld [vmem:[%s1310] sm:$0xf]
          %v1313 = vsel %vm901, %v1308, 0
          %v1316 = vsel %vm901, %v1309, 0
          %v1319 = vsel %vm1141, %v1311, 0
          %1321 = vmatpush.bf16.msra.mxu0 0
          %1322 = vmatpush.bf16.msra.mxu0 0
          %1323 = vmatpush.bf16.msra.mxu0 0
          %1324 = vmatpush.bf16.msra.mxu0 0
          %1325 = vmatpush.bf16.msra.mxu0 0
          %1326 = vmatpush.bf16.msra.mxu0 0
          %1327 = vmatpush.bf16.msra.mxu0 0
          %1328 = vmatpush.bf16.msra.mxu0 %v1319
          %1329 = vmatmul.bf16.gmra.mxu0 %v1313
          %v1330 = vpop.f32.mrf.mxu0
          %v1331 = vadd.f32 0.0, %v1330
          %v1332 = vpop.f32.mrf.mxu0
          %v1333 = vadd.f32 0.0, %v1332
          %1334 = vmatmul.bf16.gmra.mxu0 %v1316
          %v1335 = vpop.f32.mrf.mxu0
          %v1336 = vadd.f32 0.0, %v1335
          %v1337 = vpop.f32.mrf.mxu0
          %v1338 = vadd.f32 0.0, %v1337
          %1339 = vdwg.mxu0
          %v1340 = vadd.f32 %v1183, %v1331
          %v1341 = vadd.f32 %v1185, %v1333
          %v1342 = vadd.f32 %v1188, %v1336
          %v1343 = vadd.f32 %v1190, %v1338
          %1344 = vrot.lane.b32.xlu0 %v891, 104
          %v1345 = vpop.permute.xlu0 %1344
          %1346 = vrot.lane.b32.xlu0 %v892, 104
          %v1347 = vpop.permute.xlu0 %1346
          %1348 = vrot.lane.b32.xlu0 %v893, 72
          %v1349 = vpop.permute.xlu0 %1348
          %1350 = vrot.lane.b32.xlu0 %v894, 72
          %v1351 = vpop.permute.xlu0 %1350
          %v1353 = vsel %vm901, %v1345, 0
          %v1356 = vsel %vm901, %v1347, 0
          %v1359 = vsel %vm901, %v1349, 0
          %v1362 = vsel %vm901, %v1351, 0
          %1364 = vmatpush.bf16.xpose.msra.mxu0 0
          %1365 = vmatpush.bf16.xpose.msra.mxu0 0
          %1366 = vmatpush.bf16.xpose.msra.mxu0 0
          %1367 = vmatpush.bf16.xpose.msra.mxu0 0
          %1368 = vmatpush.bf16.xpose.msra.mxu0 0
          %1369 = vmatpush.bf16.xpose.msra.mxu0 0
          %1370 = vmatpush.bf16.xpose.msra.mxu0 %v1362
          %1371 = vmatpush.bf16.xpose.msra.mxu0 %v1359
          %1372 = vmatmul.bf16.gmra.mxu0 %v1353
          %v1373 = vpop.f32.mrf.mxu0
          %v1374 = vadd.f32 0.0, %v1373
          %v1375 = vpop.f32.mrf.mxu0
          %v1376 = vadd.f32 0.0, %v1375
          %1377 = vmatmul.bf16.gmra.mxu0 %v1356
          %v1378 = vpop.f32.mrf.mxu0
          %v1379 = vadd.f32 0.0, %v1378
          %v1380 = vpop.f32.mrf.mxu0
          %v1381 = vadd.f32 0.0, %v1380
          %1382 = vdwg.mxu0
          %v1383 = vsel %vm831, %v1374, -inf
          %1384 = vmax.xlane.f32.xlu0 %v1383
          %v1385 = vpop.xlane.xlu0 %1384
          %v1386 = vsel %vm831, %v1376, -inf
          %1387 = vmax.xlane.f32.xlu0 %v1386
          %v1388 = vpop.xlane.xlu0 %1387
          %v1389 = vsel %vm831, %v1379, -inf
          %1390 = vmax.xlane.f32.xlu0 %v1389
          %v1391 = vpop.xlane.xlu0 %1390
          %v1392 = vsel %vm831, %v1381, -inf
          %1393 = vmax.xlane.f32.xlu0 %v1392
          %v1394 = vpop.xlane.xlu0 %1393
          %v1395 = vsub.f32 %v1374, %v1385
          %v1396 = vsub.f32 %v1376, %v1388
          %v1397 = vsub.f32 %v1379, %v1391
          %v1398 = vsub.f32 %v1381, %v1394
          %v1399 = vmul.f32 %v1395, 1.442695
          %v1400 = vpow.pop %v1399
          %v1401 = vmul.f32 %v1396, 1.442695
          %v1402 = vpow.pop %v1401
          %v1403 = vmul.f32 %v1397, 1.442695
          %v1404 = vpow.pop %v1403
          %v1405 = vmul.f32 %v1398, 1.442695
          %v1406 = vpow.pop %v1405
          %v1407 = vsel %vm831, %v1400, 0.0
          %1408 = vadd.xlane.f32.xlu0 %v1407
          %v1409 = vpop.xlane.xlu0 %1408
          %v1410 = vsel %vm831, %v1402, 0.0
          %1411 = vadd.xlane.f32.xlu0 %v1410
          %v1412 = vpop.xlane.xlu0 %1411
          %v1413 = vsel %vm831, %v1404, 0.0
          %1414 = vadd.xlane.f32.xlu0 %v1413
          %v1415 = vpop.xlane.xlu0 %1414
          %v1416 = vsel %vm831, %v1406, 0.0
          %1417 = vadd.xlane.f32.xlu0 %v1416
          %v1418 = vpop.xlane.xlu0 %1417
          %v1419 = vrcp.pop %v1409
          %v1420 = vrcp.pop %v1412
          %v1421 = vrcp.pop %v1415
          %v1422 = vrcp.pop %v1418
          %v1423 = vmul.f32 %v1400, %v1419
          %v1424 = vmul.f32 %v1402, %v1420
          %v1425 = vmul.f32 %v1404, %v1421
          %v1426 = vmul.f32 %v1406, %v1422
          %v1427 = vpack.c.bf16 %v1424, %v1423
          %v1428 = vpack.c.bf16 %v1426, %v1425
          %1429 = vrot.lane.b32.xlu0 %v893, 40
          %v1430 = vpop.permute.xlu0 %1429
          %1431 = vrot.lane.b32.xlu0 %v894, 40
          %v1432 = vpop.permute.xlu0 %1431
          %v1436 = vsel %vm831, %v1427, 0
          %v1439 = vsel %vm831, %v1428, 0
          %1441 = vmatpush.bf16.msra.mxu0 0
          %1442 = vmatpush.bf16.msra.mxu0 0
          %1443 = vmatpush.bf16.msra.mxu0 0
          %1444 = vmatpush.bf16.msra.mxu0 0
          %1445 = vmatpush.bf16.msra.mxu0 0
          %1446 = vmatpush.bf16.msra.mxu0 0
          %1447 = vmatpush.bf16.msra.mxu0 %v1432
          %1448 = vmatpush.bf16.msra.mxu0 %v1430
          %1449 = vmatmul.bf16.gmra.mxu0 %v1436
          %v1450 = vpop.f32.mrf.mxu0
          %v1451 = vadd.f32 0.0, %v1450
          %v1452 = vpop.f32.mrf.mxu0
          %v1453 = vadd.f32 0.0, %v1452
          %1454 = vmatmul.bf16.gmra.mxu0 %v1439
          %v1455 = vpop.f32.mrf.mxu0
          %v1456 = vadd.f32 0.0, %v1455
          %v1457 = vpop.f32.mrf.mxu0
          %v1458 = vadd.f32 0.0, %v1457
          %1459 = vdwg.mxu0
          %v1460 = vpack.c.bf16 %v1453, %v1451
          %v1461 = vpack.c.bf16 %v1458, %v1456
          %s1462 = scalar_lea.vmem %s743, 12
          %v1463 = vld [vmem:[%s1462] sm:$0xf]
          %v1465 = vsel %vm901, %v1460, 0
          %v1468 = vsel %vm901, %v1461, 0
          %v1471 = vsel %vm1141, %v1463, 0
          %1473 = vmatpush.bf16.msra.mxu0 0
          %1474 = vmatpush.bf16.msra.mxu0 0
          %1475 = vmatpush.bf16.msra.mxu0 0
          %1476 = vmatpush.bf16.msra.mxu0 0
          %1477 = vmatpush.bf16.msra.mxu0 0
          %1478 = vmatpush.bf16.msra.mxu0 0
          %1479 = vmatpush.bf16.msra.mxu0 0
          %1480 = vmatpush.bf16.msra.mxu0 %v1471
          %1481 = vmatmul.bf16.gmra.mxu0 %v1465
          %v1482 = vpop.f32.mrf.mxu0
          %v1483 = vadd.f32 0.0, %v1482
          %v1484 = vpop.f32.mrf.mxu0
          %v1485 = vadd.f32 0.0, %v1484
          %1486 = vmatmul.bf16.gmra.mxu0 %v1468
          %v1487 = vpop.f32.mrf.mxu0
          %v1488 = vadd.f32 0.0, %v1487
          %v1489 = vpop.f32.mrf.mxu0
          %v1490 = vadd.f32 0.0, %v1489
          %1491 = vdwg.mxu0
          %v1492 = vadd.f32 %v1340, %v1483
          %v1493 = vadd.f32 %v1341, %v1485
          %v1494 = vadd.f32 %v1342, %v1488
          %v1495 = vadd.f32 %v1343, %v1490
          %v1496 = vld [vmem:[%s750] sm:$0x1]
          %v1498 = vperm.slane %v1496, 0
          %v1500 = vadd.f32 %v1492, %v1498
          %v1501 = vadd.f32 %v1493, %v1498
          %v1502 = vadd.f32 %v1494, %v1498
          %v1503 = vadd.f32 %v1495, %v1498
          %v1504 = vadd.f32 %v827, %v1500
          %v1505 = vadd.f32 %v828, %v1501
          %v1506 = vadd.f32 %v829, %v1502
          %v1507 = vadd.f32 %v830, %v1503
          %v1508 = vld [vmem:[%s757] sm:$0x1]
          %v1509 = vld [vmem:[%s764] sm:$0x1]
          %v1510 = vsel %vm831, %v1504, 0.0
          %1511 = vadd.xlane.f32.xlu0 %v1510
          %v1512 = vpop.xlane.xlu0 %1511
          %v1513 = vsel %vm831, %v1505, 0.0
          %1514 = vadd.xlane.f32.xlu0 %v1513
          %v1515 = vpop.xlane.xlu0 %1514
          %v1516 = vsel %vm831, %v1506, 0.0
          %1517 = vadd.xlane.f32.xlu0 %v1516
          %v1518 = vpop.xlane.xlu0 %1517
          %v1519 = vsel %vm831, %v1507, 0.0
          %1520 = vadd.xlane.f32.xlu0 %v1519
          %v1521 = vpop.xlane.xlu0 %1520
          %v1522 = vrcp.pop 32.0
          %v1523 = vmul.f32 32.0, %v1522
          %v1524 = vsub.f32 1.0, %v1523
          %v1525 = vmul.f32 %v1522, %v1524
          %v1526 = vadd.f32 %v1522, %v1525
          %vm1527 = vweird.f32 %v1522
          %v1528 = vsel %vm1527, %v1522, %v1526
          %v1529 = vmul.f32 %v1512, %v1528
          %v1530 = vmul.f32 %v1515, %v1528
          %v1531 = vmul.f32 %v1518, %v1528
          %v1532 = vmul.f32 %v1521, %v1528
          %v1533 = vsub.f32 %v1504, %v1529
          %v1534 = vsub.f32 %v1505, %v1530
          %v1535 = vsub.f32 %v1506, %v1531
          %v1536 = vsub.f32 %v1507, %v1532
          %v1537 = vmul.f32 %v1533, %v1533
          %v1538 = vmul.f32 %v1534, %v1534
          %v1539 = vmul.f32 %v1535, %v1535
          %v1540 = vmul.f32 %v1536, %v1536
          %v1541 = vsel %vm831, %v1537, 0.0
          %1542 = vadd.xlane.f32.xlu0 %v1541
          %v1543 = vpop.xlane.xlu0 %1542
          %v1544 = vsel %vm831, %v1538, 0.0
          %1545 = vadd.xlane.f32.xlu0 %v1544
          %v1546 = vpop.xlane.xlu0 %1545
          %v1547 = vsel %vm831, %v1539, 0.0
          %1548 = vadd.xlane.f32.xlu0 %v1547
          %v1549 = vpop.xlane.xlu0 %1548
          %v1550 = vsel %vm831, %v1540, 0.0
          %1551 = vadd.xlane.f32.xlu0 %v1550
          %v1552 = vpop.xlane.xlu0 %1551
          %v1553 = vmul.f32 %v1543, %v1528
          %v1554 = vmul.f32 %v1546, %v1528
          %v1555 = vmul.f32 %v1549, %v1528
          %v1556 = vmul.f32 %v1552, %v1528
          %v1557 = vadd.f32 %v1553, 1e-05
          %v1558 = vadd.f32 %v1554, 1e-05
          %v1559 = vadd.f32 %v1555, 1e-05
          %v1560 = vadd.f32 %v1556, 1e-05
          %v1561 = vrsqrt.pop %v1557
          %v1562 = vmul.f32 %v1561, %v1557
          %v1563 = vmul.f32 %v1562, %v1561
          %v1564 = vmul.f32 0.5, %v1563
          %v1565 = vsub.f32 1.5, %v1564
          %v1566 = vmul.f32 %v1561, %v1565
          %vm1567 = vweird.f32 %v1557
          %vm1568 = vweird.f32 %v1561
          %vm1569 = vmor %vm1567, %vm1568
          %v1570 = vsel %vm1569, %v1561, %v1566
          %v1571 = vrsqrt.pop %v1558
          %v1572 = vmul.f32 %v1571, %v1558
          %v1573 = vmul.f32 %v1572, %v1571
          %v1574 = vmul.f32 0.5, %v1573
          %v1575 = vsub.f32 1.5, %v1574
          %v1576 = vmul.f32 %v1571, %v1575
          %vm1577 = vweird.f32 %v1558
          %vm1578 = vweird.f32 %v1571
          %vm1579 = vmor %vm1577, %vm1578
          %v1580 = vsel %vm1579, %v1571, %v1576
          %v1581 = vrsqrt.pop %v1559
          %v1582 = vmul.f32 %v1581, %v1559
          %v1583 = vmul.f32 %v1582, %v1581
          %v1584 = vmul.f32 0.5, %v1583
          %v1585 = vsub.f32 1.5, %v1584
          %v1586 = vmul.f32 %v1581, %v1585
          %vm1587 = vweird.f32 %v1559
          %vm1588 = vweird.f32 %v1581
          %vm1589 = vmor %vm1587, %vm1588
          %v1590 = vsel %vm1589, %v1581, %v1586
          %v1591 = vrsqrt.pop %v1560
          %v1592 = vmul.f32 %v1591, %v1560
          %v1593 = vmul.f32 %v1592, %v1591
          %v1594 = vmul.f32 0.5, %v1593
          %v1595 = vsub.f32 1.5, %v1594
          %v1596 = vmul.f32 %v1591, %v1595
          %vm1597 = vweird.f32 %v1560
          %vm1598 = vweird.f32 %v1591
          %vm1599 = vmor %vm1597, %vm1598
          %v1600 = vsel %vm1599, %v1591, %v1596
          %v1601 = vmul.f32 %v1533, %v1570
          %v1602 = vmul.f32 %v1534, %v1580
          %v1603 = vmul.f32 %v1535, %v1590
          %v1604 = vmul.f32 %v1536, %v1600
          %v1606 = vperm.slane %v1508, 0
          %v1608 = vmul.f32 %v1601, %v1606
          %v1609 = vmul.f32 %v1602, %v1606
          %v1610 = vmul.f32 %v1603, %v1606
          %v1611 = vmul.f32 %v1604, %v1606
          %v1613 = vperm.slane %v1509, 0
          %v1615 = vadd.f32 %v1608, %v1613
          %v1616 = vadd.f32 %v1609, %v1613
          %v1617 = vadd.f32 %v1610, %v1613
          %v1618 = vadd.f32 %v1611, %v1613
          %v1619 = vpack.c.bf16 %v1616, %v1615
          %v1620 = vpack.c.bf16 %v1618, %v1617
          %v1621 = vld [vmem:[%s773] sm:$0xf]
          %v1622 = vld [vmem:[%s773 + $0x4] sm:$0xf]
          %v1623 = vld [vmem:[%s773 + $0x8] sm:$0xf]
          %v1624 = vld [vmem:[%s773 + $0xc] sm:$0xf]
          %v1625 = vld [vmem:[%s780] sm:$0x1]
          %v1627 = vperm.slane %v1625, 0
          %v1633 = vunpack.c.l.b16 %v1621
          %v1634 = vunpack.c.l.b16 %v1622
          %v1635 = vunpack.c.l.b16 %v1623
          %v1636 = vunpack.c.l.b16 %v1624
          %v1637 = vpack.c.b16 %v1634, %v1633
          %v1638 = vpack.c.b16 %v1636, %v1635
          %v1642 = vsel %vm831, %v1619, 0
          %v1645 = vsel %vm831, %v1620, 0
          %1647 = vmatpush.bf16.msra.mxu0 0
          %1648 = vmatpush.bf16.msra.mxu0 0
          %1649 = vmatpush.bf16.msra.mxu0 0
          %1650 = vmatpush.bf16.msra.mxu0 0
          %1651 = vmatpush.bf16.msra.mxu0 0
          %1652 = vmatpush.bf16.msra.mxu0 0
          %1653 = vmatpush.bf16.msra.mxu0 %v1638
          %1654 = vmatpush.bf16.msra.mxu0 %v1637
          %1655 = vmatmul.bf16.gmra.mxu0 %v1642
          %v1656 = vpop.f32.mrf.mxu0
          %v1657 = vadd.f32 %v1627, %v1656
          %v1658 = vpop.f32.mrf.mxu0
          %v1659 = vadd.f32 %v1627, %v1658
          %1660 = vmatmul.bf16.gmra.mxu0 %v1645
          %v1661 = vpop.f32.mrf.mxu0
          %v1662 = vadd.f32 %v1627, %v1661
          %v1663 = vpop.f32.mrf.mxu0
          %v1664 = vadd.f32 %v1627, %v1663
          %1665 = vdwg.mxu0
          %v1666 = vmul.f32 %v1657, 0.5
          %v1667 = vmul.f32 %v1659, 0.5
          %v1668 = vmul.f32 %v1662, 0.5
          %v1669 = vmul.f32 %v1664, 0.5
          %v1670 = vmul.f32 %v1657, 0.70710677
          %v1671 = vmul.f32 %v1659, 0.70710677
          %v1672 = vmul.f32 %v1662, 0.70710677
          %v1673 = vmul.f32 %v1664, 0.70710677
          %vm1674 = vcmp.lt.f32.partialorder %v1670, 0.0
          %vm1675 = vcmp.lt.f32.partialorder %v1671, 0.0
          %vm1676 = vcmp.lt.f32.partialorder %v1672, 0.0
          %vm1677 = vcmp.lt.f32.partialorder %v1673, 0.0
          %v1678 = vsel %vm1674, -1.0, 1.0
          %v1679 = vsel %vm1675, -1.0, 1.0
          %v1680 = vsel %vm1676, -1.0, 1.0
          %v1681 = vsel %vm1677, -1.0, 1.0
          %v1682 = vand.u32 2147483647, %v1670
          %v1683 = vand.u32 2147483647, %v1671
          %v1684 = vand.u32 2147483647, %v1672
          %v1685 = vand.u32 2147483647, %v1673
          %v1686 = vmul.f32 %v1682, 0.3275911
          %v1687 = vmul.f32 %v1683, 0.3275911
          %v1688 = vmul.f32 %v1684, 0.3275911
          %v1689 = vmul.f32 %v1685, 0.3275911
          %v1690 = vadd.f32 %v1686, 1.0
          %v1691 = vadd.f32 %v1687, 1.0
          %v1692 = vadd.f32 %v1688, 1.0
          %v1693 = vadd.f32 %v1689, 1.0
          %v1694 = vrcp.pop %v1690
          %v1695 = vmul.f32 %v1690, %v1694
          %v1696 = vsub.f32 1.0, %v1695
          %v1697 = vmul.f32 %v1694, %v1696
          %v1698 = vadd.f32 %v1694, %v1697
          %vm1699 = vweird.f32 %v1690
          %vm1700 = vweird.f32 %v1694
          %vm1701 = vmor %vm1699, %vm1700
          %v1702 = vsel %vm1701, %v1694, %v1698
          %v1703 = vand.u32 2147483647, %v1690
          %vm1704 = vcmp.eq.f32.partialorder %v1703, 8.507059e+37
          %v1705 = vand.u32 %v1690, 2147483648
          %v1706 = vor.u32 1.1754944e-38, %v1705
          %v1707 = vsel %vm1704, %v1706, %v1702
          %v1708 = vmul.f32 1.0, %v1707
          %v1709 = vrcp.pop %v1691
          %v1710 = vmul.f32 %v1691, %v1709
          %v1711 = vsub.f32 1.0, %v1710
          %v1712 = vmul.f32 %v1709, %v1711
          %v1713 = vadd.f32 %v1709, %v1712
          %vm1714 = vweird.f32 %v1691
          %vm1715 = vweird.f32 %v1709
          %vm1716 = vmor %vm1714, %vm1715
          %v1717 = vsel %vm1716, %v1709, %v1713
          %v1718 = vand.u32 2147483647, %v1691
          %vm1719 = vcmp.eq.f32.partialorder %v1718, 8.507059e+37
          %v1720 = vand.u32 %v1691, 2147483648
          %v1721 = vor.u32 1.1754944e-38, %v1720
          %v1722 = vsel %vm1719, %v1721, %v1717
          %v1723 = vmul.f32 1.0, %v1722
          %v1724 = vrcp.pop %v1692
          %v1725 = vmul.f32 %v1692, %v1724
          %v1726 = vsub.f32 1.0, %v1725
          %v1727 = vmul.f32 %v1724, %v1726
          %v1728 = vadd.f32 %v1724, %v1727
          %vm1729 = vweird.f32 %v1692
          %vm1730 = vweird.f32 %v1724
          %vm1731 = vmor %vm1729, %vm1730
          %v1732 = vsel %vm1731, %v1724, %v1728
          %v1733 = vand.u32 2147483647, %v1692
          %vm1734 = vcmp.eq.f32.partialorder %v1733, 8.507059e+37
          %v1735 = vand.u32 %v1692, 2147483648
          %v1736 = vor.u32 1.1754944e-38, %v1735
          %v1737 = vsel %vm1734, %v1736, %v1732
          %v1738 = vmul.f32 1.0, %v1737
          %v1739 = vrcp.pop %v1693
          %v1740 = vmul.f32 %v1693, %v1739
          %v1741 = vsub.f32 1.0, %v1740
          %v1742 = vmul.f32 %v1739, %v1741
          %v1743 = vadd.f32 %v1739, %v1742
          %vm1744 = vweird.f32 %v1693
          %vm1745 = vweird.f32 %v1739
          %vm1746 = vmor %vm1744, %vm1745
          %v1747 = vsel %vm1746, %v1739, %v1743
          %v1748 = vand.u32 2147483647, %v1693
          %vm1749 = vcmp.eq.f32.partialorder %v1748, 8.507059e+37
          %v1750 = vand.u32 %v1693, 2147483648
          %v1751 = vor.u32 1.1754944e-38, %v1750
          %v1752 = vsel %vm1749, %v1751, %v1747
          %v1753 = vmul.f32 1.0, %v1752
          %v1754 = vmul.f32 %v1708, 1.0614054
          %v1755 = vmul.f32 %v1723, 1.0614054
          %v1756 = vmul.f32 %v1738, 1.0614054
          %v1757 = vmul.f32 %v1753, 1.0614054
          %v1758 = vadd.f32 %v1754, -1.4531521
          %v1759 = vadd.f32 %v1755, -1.4531521
          %v1760 = vadd.f32 %v1756, -1.4531521
          %v1761 = vadd.f32 %v1757, -1.4531521
          %v1762 = vmul.f32 %v1708, %v1758
          %v1763 = vmul.f32 %v1723, %v1759
          %v1764 = vmul.f32 %v1738, %v1760
          %v1765 = vmul.f32 %v1753, %v1761
          %v1766 = vadd.f32 %v1762, 1.4214138
          %v1767 = vadd.f32 %v1763, 1.4214138
          %v1768 = vadd.f32 %v1764, 1.4214138
          %v1769 = vadd.f32 %v1765, 1.4214138
          %v1770 = vmul.f32 %v1708, %v1766
          %v1771 = vmul.f32 %v1723, %v1767
          %v1772 = vmul.f32 %v1738, %v1768
          %v1773 = vmul.f32 %v1753, %v1769
          %v1774 = vadd.f32 %v1770, -0.28449672
          %v1775 = vadd.f32 %v1771, -0.28449672
          %v1776 = vadd.f32 %v1772, -0.28449672
          %v1777 = vadd.f32 %v1773, -0.28449672
          %v1778 = vmul.f32 %v1708, %v1774
          %v1779 = vmul.f32 %v1723, %v1775
          %v1780 = vmul.f32 %v1738, %v1776
          %v1781 = vmul.f32 %v1753, %v1777
          %v1782 = vadd.f32 %v1778, 0.2548296
          %v1783 = vadd.f32 %v1779, 0.2548296
          %v1784 = vadd.f32 %v1780, 0.2548296
          %v1785 = vadd.f32 %v1781, 0.2548296
          %v1786 = vmul.f32 %v1708, %v1782
          %v1787 = vmul.f32 %v1723, %v1783
          %v1788 = vmul.f32 %v1738, %v1784
          %v1789 = vmul.f32 %v1753, %v1785
          %v1790 = vsub.f32 0.0, %v1682
          %v1791 = vsub.f32 0.0, %v1683
          %v1792 = vsub.f32 0.0, %v1684
          %v1793 = vsub.f32 0.0, %v1685
          %v1794 = vmul.f32 %v1790, %v1682
          %v1795 = vmul.f32 %v1791, %v1683
          %v1796 = vmul.f32 %v1792, %v1684
          %v1797 = vmul.f32 %v1793, %v1685
          %v1798 = vmul.f32 %v1794, 1.442695
          %v1799 = vpow.pop %v1798
          %v1800 = vmul.f32 %v1795, 1.442695
          %v1801 = vpow.pop %v1800
          %v1802 = vmul.f32 %v1796, 1.442695
          %v1803 = vpow.pop %v1802
          %v1804 = vmul.f32 %v1797, 1.442695
          %v1805 = vpow.pop %v1804
          %v1806 = vmul.f32 %v1786, %v1799
          %v1807 = vmul.f32 %v1787, %v1801
          %v1808 = vmul.f32 %v1788, %v1803
          %v1809 = vmul.f32 %v1789, %v1805
          %v1810 = vsub.f32 1.0, %v1806
          %v1811 = vsub.f32 1.0, %v1807
          %v1812 = vsub.f32 1.0, %v1808
          %v1813 = vsub.f32 1.0, %v1809
          %v1814 = vmul.f32 %v1678, %v1810
          %v1815 = vmul.f32 %v1679, %v1811
          %v1816 = vmul.f32 %v1680, %v1812
          %v1817 = vmul.f32 %v1681, %v1813
          %v1818 = vadd.f32 %v1814, 1.0
          %v1819 = vadd.f32 %v1815, 1.0
          %v1820 = vadd.f32 %v1816, 1.0
          %v1821 = vadd.f32 %v1817, 1.0
          %v1822 = vmul.f32 %v1666, %v1818
          %v1823 = vmul.f32 %v1667, %v1819
          %v1824 = vmul.f32 %v1668, %v1820
          %v1825 = vmul.f32 %v1669, %v1821
          %v1826 = vpack.c.bf16 %v1823, %v1822
          %v1827 = vpack.c.bf16 %v1825, %v1824
          %v1828 = vld [vmem:[%s789] sm:$0xf]
          %v1829 = vld [vmem:[%s789 + $0x4] sm:$0xf]
          %v1830 = vld [vmem:[%s789 + $0x8] sm:$0xf]
          %v1831 = vld [vmem:[%s789 + $0xc] sm:$0xf]
          %v1832 = vld [vmem:[%s789 + $0x10] sm:$0xf]
          %v1833 = vld [vmem:[%s789 + $0x14] sm:$0xf]
          %v1834 = vld [vmem:[%s789 + $0x18] sm:$0xf]
          %v1835 = vld [vmem:[%s789 + $0x1c] sm:$0xf]
          %v1836 = vld [vmem:[%s796] sm:$0x1]
          %v1838 = vperm.slane %v1836, 0
          %v1848 = vunpack.c.l.b16 %v1828
          %v1849 = vunpack.c.l.b16 %v1829
          %v1850 = vunpack.c.l.b16 %v1830
          %v1851 = vunpack.c.l.b16 %v1831
          %v1852 = vunpack.c.l.b16 %v1832
          %v1853 = vunpack.c.l.b16 %v1833
          %v1854 = vunpack.c.l.b16 %v1834
          %v1855 = vunpack.c.l.b16 %v1835
          %v1856 = vpack.c.b16 %v1849, %v1848
          %v1857 = vpack.c.b16 %v1851, %v1850
          %v1858 = vpack.c.b16 %v1853, %v1852
          %v1859 = vpack.c.b16 %v1855, %v1854
          %vm1864 = vcmask 523264
          %v1866 = vsel %vm1864, %v1826, 0
          %v1869 = vsel %vm1864, %v1827, 0
          %1871 = vmatpush.bf16.msra.mxu0 0
          %1872 = vmatpush.bf16.msra.mxu0 0
          %1873 = vmatpush.bf16.msra.mxu0 0
          %1874 = vmatpush.bf16.msra.mxu0 0
          %1875 = vmatpush.bf16.msra.mxu0 %v1859
          %1876 = vmatpush.bf16.msra.mxu0 %v1858
          %1877 = vmatpush.bf16.msra.mxu0 %v1857
          %1878 = vmatpush.bf16.msra.mxu0 %v1856
          %1879 = vmatmul.bf16.gmra.mxu0 %v1866
          %v1880 = vpop.f32.mrf.mxu0
          %v1881 = vadd.f32 %v1838, %v1880
          %v1882 = vpop.f32.mrf.mxu0
          %v1883 = vadd.f32 %v1838, %v1882
          %1884 = vmatmul.bf16.gmra.mxu0 %v1869
          %v1885 = vpop.f32.mrf.mxu0
          %v1886 = vadd.f32 %v1838, %v1885
          %v1887 = vpop.f32.mrf.mxu0
          %v1888 = vadd.f32 %v1838, %v1887
          %1889 = vdwg.mxu0
          %v1890 = vadd.f32 %v1615, %v1881
          %v1891 = vadd.f32 %v1616, %v1883
          %v1892 = vadd.f32 %v1617, %v1886
          %v1893 = vadd.f32 %v1618, %v1888
          %v1894 = vld [vmem:[%s803] sm:$0x1]
          %v1895 = vld [vmem:[%s810] sm:$0x1]
          %v1896 = vsel %vm831, %v1890, 0.0
          %1897 = vadd.xlane.f32.xlu0 %v1896
          %v1898 = vpop.xlane.xlu0 %1897
          %v1899 = vsel %vm831, %v1891, 0.0
          %1900 = vadd.xlane.f32.xlu0 %v1899
          %v1901 = vpop.xlane.xlu0 %1900
          %v1902 = vsel %vm831, %v1892, 0.0
          %1903 = vadd.xlane.f32.xlu0 %v1902
          %v1904 = vpop.xlane.xlu0 %1903
          %v1905 = vsel %vm831, %v1893, 0.0
          %1906 = vadd.xlane.f32.xlu0 %v1905
          %v1907 = vpop.xlane.xlu0 %1906
          %v1908 = vmul.f32 %v1898, %v1528
          %v1909 = vmul.f32 %v1901, %v1528
          %v1910 = vmul.f32 %v1904, %v1528
          %v1911 = vmul.f32 %v1907, %v1528
          %v1912 = vsub.f32 %v1890, %v1908
          %v1913 = vsub.f32 %v1891, %v1909
          %v1914 = vsub.f32 %v1892, %v1910
          %v1915 = vsub.f32 %v1893, %v1911
          %v1916 = vmul.f32 %v1912, %v1912
          %v1917 = vmul.f32 %v1913, %v1913
          %v1918 = vmul.f32 %v1914, %v1914
          %v1919 = vmul.f32 %v1915, %v1915
          %v1920 = vsel %vm831, %v1916, 0.0
          %1921 = vadd.xlane.f32.xlu0 %v1920
          %v1922 = vpop.xlane.xlu0 %1921
          %v1923 = vsel %vm831, %v1917, 0.0
          %1924 = vadd.xlane.f32.xlu0 %v1923
          %v1925 = vpop.xlane.xlu0 %1924
          %v1926 = vsel %vm831, %v1918, 0.0
          %1927 = vadd.xlane.f32.xlu0 %v1926
          %v1928 = vpop.xlane.xlu0 %1927
          %v1929 = vsel %vm831, %v1919, 0.0
          %1930 = vadd.xlane.f32.xlu0 %v1929
          %v1931 = vpop.xlane.xlu0 %1930
          %v1932 = vmul.f32 %v1922, %v1528
          %v1933 = vmul.f32 %v1925, %v1528
          %v1934 = vmul.f32 %v1928, %v1528
          %v1935 = vmul.f32 %v1931, %v1528
          %v1936 = vadd.f32 %v1932, 1e-05
          %v1937 = vadd.f32 %v1933, 1e-05
          %v1938 = vadd.f32 %v1934, 1e-05
          %v1939 = vadd.f32 %v1935, 1e-05
          %v1940 = vrsqrt.pop %v1936
          %v1941 = vmul.f32 %v1940, %v1936
          %v1942 = vmul.f32 %v1941, %v1940
          %v1943 = vmul.f32 0.5, %v1942
          %v1944 = vsub.f32 1.5, %v1943
          %v1945 = vmul.f32 %v1940, %v1944
          %vm1946 = vweird.f32 %v1936
          %vm1947 = vweird.f32 %v1940
          %vm1948 = vmor %vm1946, %vm1947
          %v1949 = vsel %vm1948, %v1940, %v1945
          %v1950 = vrsqrt.pop %v1937
          %v1951 = vmul.f32 %v1950, %v1937
          %v1952 = vmul.f32 %v1951, %v1950
          %v1953 = vmul.f32 0.5, %v1952
          %v1954 = vsub.f32 1.5, %v1953
          %v1955 = vmul.f32 %v1950, %v1954
          %vm1956 = vweird.f32 %v1937
          %vm1957 = vweird.f32 %v1950
          %vm1958 = vmor %vm1956, %vm1957
          %v1959 = vsel %vm1958, %v1950, %v1955
          %v1960 = vrsqrt.pop %v1938
          %v1961 = vmul.f32 %v1960, %v1938
          %v1962 = vmul.f32 %v1961, %v1960
          %v1963 = vmul.f32 0.5, %v1962
          %v1964 = vsub.f32 1.5, %v1963
          %v1965 = vmul.f32 %v1960, %v1964
          %vm1966 = vweird.f32 %v1938
          %vm1967 = vweird.f32 %v1960
          %vm1968 = vmor %vm1966, %vm1967
          %v1969 = vsel %vm1968, %v1960, %v1965
          %v1970 = vrsqrt.pop %v1939
          %v1971 = vmul.f32 %v1970, %v1939
          %v1972 = vmul.f32 %v1971, %v1970
          %v1973 = vmul.f32 0.5, %v1972
          %v1974 = vsub.f32 1.5, %v1973
          %v1975 = vmul.f32 %v1970, %v1974
          %vm1976 = vweird.f32 %v1939
          %vm1977 = vweird.f32 %v1970
          %vm1978 = vmor %vm1976, %vm1977
          %v1979 = vsel %vm1978, %v1970, %v1975
          %v1980 = vmul.f32 %v1912, %v1949
          %v1981 = vmul.f32 %v1913, %v1959
          %v1982 = vmul.f32 %v1914, %v1969
          %v1983 = vmul.f32 %v1915, %v1979
          %v1985 = vperm.slane %v1894, 0
          %v1987 = vmul.f32 %v1980, %v1985
          %v1988 = vmul.f32 %v1981, %v1985
          %v1989 = vmul.f32 %v1982, %v1985
          %v1990 = vmul.f32 %v1983, %v1985
          %v1992 = vperm.slane %v1895, 0
          %v1994 = vadd.f32 %v1987, %v1992
          %v1995 = vadd.f32 %v1988, %v1992
          %v1996 = vadd.f32 %v1989, %v1992
          %v1997 = vadd.f32 %v1990, %v1992
          %1998 = vst.msk [vmem:[#allocation2] sm:$0xff] %vm831, %v1994
          %1999 = vst.msk [vmem:[#allocation2 + $0x8] sm:$0xff] %vm831, %v1995
          %2000 = vst.msk [vmem:[#allocation2 + $0x10] sm:$0xff] %vm831, %v1996
          %2001 = vst.msk [vmem:[#allocation2 + $0x18] sm:$0xff] %vm831, %v1997
        $region80: #{hubert_forward.3} parent=71 // pred_fallthru
          _
        %s2002 = sand.u32 %s435, 1
        %s2003 = scalar_lea.sflag [#allocation4], %s2002
        %s2004 = sand.u32 %s435, 1
        %s2005 = smul.addr %s2004, 32
        %s2006 = scalar_lea.vmem [#allocation3], %s2005
        // Predicated region
        $region81: #{hubert_forward.3} parent=71 // pred_check
          %p2007 = pneg %p445
        $region82: #{hubert_forward.3} parent=71 // pred_check_branch
          %2009 = sbr.rel (%p2007) target = $region84
        $region83: #{hubert_forward.3} parent=71 // pred_region
          %2011 = vsyncadd %s2003, 0
          %s2012 = smul.addr %s31, 4
          %s2013 = smul.addr %s32, 8
          %s2014 = sadd.s32 %s2012, %s2013
          %s2015 = smul.addr %s2014, 8
          %s2016 = scalar_lea.hbm %s13, %s2015
          %s2017 = sshll.u32 %s2006, 4
          %s2018 = int_to_ptr.vmem [resolvable:$true] %s2017
          %s2019 = sshll.u32 %s2016, 4
          %s2020 = int_to_ptr.hbm [resolvable:$true] %s2019
          %2025 = dma.vmem_to_hbm [thread:$0]  %s2018, 512, %s2020, %s2003, 128, 128, 8
        $region84: #{hubert_forward.3} parent=71 // pred_fallthru
          _
      $region72: #{hubert_forward.3} parent=5 // pred_fallthru
        _
      %p2026 = scmp.le.s32.totalorder 2, %s22
      // Predicated region
      $region85: #{hubert_forward.3} parent=5 // pred_check
        %p2027 = pneg %p2026
      $region86: #{hubert_forward.3} parent=5 // pred_check_branch
        %2029 = sbr.rel (%p2027) target = $region88
      $region87: #{hubert_forward.3} parent=5 // pred_region
        %s2030 = ssub.s32 %s22, 2
        // Predicated region
        $region89: #{hubert_forward.3} parent=87 // pred_check
          %p2031 = pneg %p451
        $region90: #{hubert_forward.3} parent=87 // pred_check_branch
          %2033 = sbr.rel (%p2031) target = $region92
        $region91: #{hubert_forward.3} parent=87 // pred_region
          %s2034 = sand.u32 %s436, 1
          %s2035 = scalar_lea.sflag [#allocation4], %s2034
          %s2036 = sand.u32 %s436, 1
          %s2037 = smul.addr %s2036, 32
          %s2038 = scalar_lea.vmem [#allocation3], %s2037
          %2040 = dma.done %s2035, 512
        $region92: #{hubert_forward.3} parent=87 // pred_fallthru
          _
      $region88: #{hubert_forward.3} parent=5 // pred_fallthru
        _
    $region6: #{hubert_forward.3} parent=1 // loop_footer
      %s26 = sadd.s32 1, %s22
    $region7: #{hubert_forward.3} parent=1 // loop_footer_branch
      %21 = sbr.rel target = $region3
    $region8: #{hubert_forward.3} parent=1 // loop_exit
      _
    %2041 = vsyncpa [#allocation4], 1
    %s2042 = scalar_lea.sflag [#allocation4], 1
    %2043 = vsyncpa %s2042, 1

// kernel: hubert_forward.2
$region0: #{hubert_forward.2}
  #allocation0 [shape = 'u32[]', space=smem, size = 0x4, offset = 0x4, fixed_abs, tag = 'smem constant byte address 0x4 - core index']
  #allocation1 [shape = 'u32[72,128]{1,0:T(1,128)}', space=vmem, size = 0x9000, scoped, tag = 'internal scratch']
  %s0 = inlined_call_operand.vmem [shape: f32[2,66,5], index: 0, kind: input, shape index: {}]
  %s1 = inlined_call_operand.hbm [shape: bf16[5,32], index: 1, kind: input, shape index: {}]
  %s2 = inlined_call_operand.hbm [shape: bf16[5,32], index: 2, kind: input, shape index: {}]
  %s3 = inlined_call_operand.vmem [shape: f32[1,32], index: 3, kind: input, shape index: {}]
  %s4 = inlined_call_operand.vmem [shape: f32[1,32], index: 4, kind: input, shape index: {}]
  %s5 = inlined_call_operand.hbm [shape: f32[3,32,65], index: 5, kind: input, shape index: {}]
  %s6 = inlined_call_operand.hbm [shape: bf16[3,32,32], index: 6, kind: input, shape index: {}]
  %s7 = inlined_call_operand.vmem [shape: f32[1,32], index: 7, kind: input, shape index: {}]
  %s8 = inlined_call_operand.vmem [shape: f32[1,32], index: 8, kind: input, shape index: {}]
  %s9 = inlined_call_operand.hbm [shape: bf16[32,32], index: 9, kind: input, shape index: {}]
  %s10 = inlined_call_operand.hbm [shape: f32[1,32], index: 10, kind: input, shape index: {}]
  %s11 = inlined_call_operand.vmem [shape: f32[5,32,32], index: 11, kind: input, shape index: {}]
  %s12 = inlined_call_operand.hbm [shape: bf16[5,32,32], index: 12, kind: input, shape index: {}]
  %s13 = inlined_call_operand.hbm [shape: f32[1,32], index: 13, kind: input, shape index: {}]
  %s14 = inlined_call_operand.vmem [shape: f32[1,32], index: 14, kind: input, shape index: {}]
  %s15 = inlined_call_operand.vmem [shape: f32[1,32], index: 15, kind: input, shape index: {}]
  %s16 = inlined_call_operand.vmem [shape: f32[2,32,32], index: 16, kind: output, shape index: {}]
  %s17 = sld [smem:[#allocation0]]
  $region129: #{hubert_forward.2} parent=0
    _
  %s19 = ssub.s32 1, %s17
  %s20 = scalar_select 0, %s19, %s17
  $region1: #{hubert_forward.2} parent=0
    #allocation2 [shape = 'u8[2048]{0}', space=vmem, size = 0x800, scoped, tag = 'input window, operand 1, single buffered']
    #allocation3 [shape = 's32[2]{0}', space=sflag, size = 0x8, scoped, tag = 'scoped memory for hubert_forward.2']
    #allocation4 [shape = 'u8[2048]{0}', space=vmem, size = 0x800, scoped, tag = 'input window, operand 2, single buffered']
    #allocation5 [shape = 's32[1]{0}', space=sflag, size = 0x4, scoped, tag = 'scoped memory for hubert_forward.2']
    #allocation6 [shape = 'u8[49152]{0}', space=vmem, size = 0xc000, scoped, tag = 'input window, operand 5, single buffered']
    #allocation7 [shape = 'u8[24576]{0}', space=vmem, size = 0x6000, scoped, tag = 'input window, operand 6, single buffered']
    #allocation8 [shape = 's32[1]{0}', space=sflag, size = 0x4, scoped, tag = 'scoped memory for hubert_forward.2']
    #allocation9 [shape = 'u8[8192]{0}', space=vmem, size = 0x2000, scoped, tag = 'input window, operand 9, single buffered']
    #allocation10 [shape = 'u8[512]{0}', space=vmem, size = 0x400, scoped, tag = 'input window, operand 10, single buffered']
    #allocation11 [shape = 's32[1]{0}', space=sflag, size = 0x4, scoped, tag = 'scoped memory for hubert_forward.2']
    #allocation12 [shape = 'u8[40960]{0}', space=vmem, size = 0xa000, scoped, tag = 'input window, operand 12, single buffered']
    #allocation13 [shape = 'u8[512]{0}', space=vmem, size = 0x400, scoped, tag = 'input window, operand 13, single buffered']
    #allocation14 [shape = 's32[1]{0}', space=sflag, size = 0x4, scoped, tag = 'scoped memory for hubert_forward.2']
    %21 = vsyncpa [#allocation3], 0
    %22 = vsyncpa [#allocation5], 0
    %23 = vsyncpa [#allocation8], 0
    %24 = vsyncpa [#allocation11], 0
    %25 = vsyncpa [#allocation14], 0
    loop: start=0, step=1, limit=4
    $region2: #{hubert_forward.2} parent=1 // loop_pre_header
      _
    $region3: #{hubert_forward.2} parent=1 // loop_header
      %s27 = sphi 0, %s31
      %p28 = scmp.ge.s32.totalorder %s27, 4
      %s37 = sphi 0, %s39
      %s40 = sphi 0, %s37
      %s41 = sphi 0, %s40
      %s57 = sphi 0, %s41
      %s61 = sphi 0, %s61
      %s63 = sphi 0, %s61
      %s64 = sphi 0, %s63
      %s78 = sphi 0, %s64
      %s82 = sphi 0, %s82
      %s84 = sphi 0, %s82
      %s85 = sphi 0, %s84
      %s99 = sphi 0, %s85
      %s103 = sphi 0, %s103
      %s105 = sphi 0, %s103
      %s106 = sphi 0, %s105
      %s120 = sphi 0, %s106
      %s124 = sphi 0, %s124
      %s126 = sphi 0, %s124
      %s127 = sphi 0, %s126
      %s141 = sphi 0, %s127
      %s145 = sphi 0, %s145
      %s147 = sphi 0, %s145
      %s148 = sphi 0, %s147
      %s162 = sphi 0, %s148
      %s166 = sphi 0, %s166
      %s168 = sphi 0, %s166
      %s169 = sphi 0, %s168
      %s183 = sphi 0, %s169
      %s187 = sphi 0, %s187
      %s189 = sphi 0, %s187
      %s190 = sphi 0, %s189
      %s204 = sphi 0, %s190
      %s208 = sphi 0, %s208
      %s210 = sphi 0, %s208
      %s211 = sphi 0, %s210
      %s225 = sphi 0, %s211
      %s229 = sphi 0, %s229
      %s231 = sphi 0, %s229
      %s232 = sphi 0, %s231
      %s246 = sphi 0, %s232
      %s250 = sphi 0, %s250
      %s252 = sphi 0, %s250
      %s253 = sphi 0, %s252
      %s267 = sphi 0, %s253
      %s271 = sphi 0, %s271
      %s273 = sphi 0, %s271
      %s274 = sphi 0, %s273
      %s288 = sphi 0, %s274
      %s292 = sphi 0, %s292
      %s294 = sphi 0, %s292
      %s295 = sphi 0, %s294
      %s309 = sphi 0, %s295
      %s313 = sphi 0, %s313
      %s315 = sphi 0, %s313
      %s316 = sphi 0, %s315
      %s330 = sphi 0, %s316
      %s334 = sphi 0, %s334
      %s336 = sphi 0, %s334
      %s337 = sphi 0, %s336
      %s351 = sphi 0, %s337
      %s355 = sphi 0, %s355
      %s357 = sphi 0, %s355
      %s358 = sphi 0, %s357
      %s372 = sphi 0, %s358
      %s378 = sphi 0, %s380
      %s381 = sphi 0, %s378
      %s382 = sphi 0, %s381
      %s398 = sphi 0, %s382
    $region4: #{hubert_forward.2} parent=1 // loop_header_branch
      %30 = sbr.rel (%p28) target = $region8
    $region5: #{hubert_forward.2} parent=1 // loop_body
      %s32 = ssub.s32 %s27, 1
      %s33 = ssub.s32 %s27, 2
      %s34 = sadd.s32 %s27, 1
      %s35 = ssub.s32 %s27, %s34
      %p36 = scmp.eq.s32.totalorder %s35, 0
      %s38 = sadd.s32 %s37, 1
      %s39 = scalar_select %p36, %s37, %s38
      %p42 = pneg %p36
      %p43 = scmp.eq.s32.totalorder %s27, 1
      %p44 = por %p42, %p43
      %p45 = scmp.ne.s32.totalorder %s37, %s40
      %p46 = scmp.eq.s32.totalorder %s27, 0
      %p47 = por %p45, %p46
      %p48 = scmp.ne.s32.totalorder %s37, %s40
      %p49 = scmp.eq.s32.totalorder %s32, 1
      %p50 = por %p48, %p49
      %p51 = scmp.ne.s32.totalorder %s40, %s41
      %p52 = scmp.eq.s32.totalorder %s32, 0
      %p53 = por %p51, %p52
      %p54 = scmp.ne.s32.totalorder %s40, %s41
      %p55 = scmp.eq.s32.totalorder %s33, 1
      %p56 = por %p54, %p55
      %p58 = scmp.ne.s32.totalorder %s41, %s57
      %p59 = scmp.eq.s32.totalorder %s33, 0
      %p60 = por %p58, %p59
      %s62 = sadd.s32 %s61, 1
      %p65 = scmp.eq.s32.totalorder %s27, 1
      %p66 = scmp.ne.s32.totalorder %s61, %s63
      %p67 = scmp.eq.s32.totalorder %s27, 0
      %p68 = por %p66, %p67
      %p69 = scmp.ne.s32.totalorder %s61, %s63
      %p70 = scmp.eq.s32.totalorder %s32, 1
      %p71 = por %p69, %p70
      %p72 = scmp.ne.s32.totalorder %s63, %s64
      %p73 = scmp.eq.s32.totalorder %s32, 0
      %p74 = por %p72, %p73
      %p75 = scmp.ne.s32.totalorder %s63, %s64
      %p76 = scmp.eq.s32.totalorder %s33, 1
      %p77 = por %p75, %p76
      %p79 = scmp.ne.s32.totalorder %s64, %s78
      %p80 = scmp.eq.s32.totalorder %s33, 0
      %p81 = por %p79, %p80
      %s83 = sadd.s32 %s82, 1
      %p86 = scmp.eq.s32.totalorder %s27, 1
      %p87 = scmp.ne.s32.totalorder %s82, %s84
      %p88 = scmp.eq.s32.totalorder %s27, 0
      %p89 = por %p87, %p88
      %p90 = scmp.ne.s32.totalorder %s82, %s84
      %p91 = scmp.eq.s32.totalorder %s32, 1
      %p92 = por %p90, %p91
      %p93 = scmp.ne.s32.totalorder %s84, %s85
      %p94 = scmp.eq.s32.totalorder %s32, 0
      %p95 = por %p93, %p94
      %p96 = scmp.ne.s32.totalorder %s84, %s85
      %p97 = scmp.eq.s32.totalorder %s33, 1
      %p98 = por %p96, %p97
      %p100 = scmp.ne.s32.totalorder %s85, %s99
      %p101 = scmp.eq.s32.totalorder %s33, 0
      %p102 = por %p100, %p101
      %s104 = sadd.s32 %s103, 1
      %p107 = scmp.eq.s32.totalorder %s27, 1
      %p108 = scmp.ne.s32.totalorder %s103, %s105
      %p109 = scmp.eq.s32.totalorder %s27, 0
      %p110 = por %p108, %p109
      %p111 = scmp.ne.s32.totalorder %s103, %s105
      %p112 = scmp.eq.s32.totalorder %s32, 1
      %p113 = por %p111, %p112
      %p114 = scmp.ne.s32.totalorder %s105, %s106
      %p115 = scmp.eq.s32.totalorder %s32, 0
      %p116 = por %p114, %p115
      %p117 = scmp.ne.s32.totalorder %s105, %s106
      %p118 = scmp.eq.s32.totalorder %s33, 1
      %p119 = por %p117, %p118
      %p121 = scmp.ne.s32.totalorder %s106, %s120
      %p122 = scmp.eq.s32.totalorder %s33, 0
      %p123 = por %p121, %p122
      %s125 = sadd.s32 %s124, 1
      %p128 = scmp.eq.s32.totalorder %s27, 1
      %p129 = scmp.ne.s32.totalorder %s124, %s126
      %p130 = scmp.eq.s32.totalorder %s27, 0
      %p131 = por %p129, %p130
      %p132 = scmp.ne.s32.totalorder %s124, %s126
      %p133 = scmp.eq.s32.totalorder %s32, 1
      %p134 = por %p132, %p133
      %p135 = scmp.ne.s32.totalorder %s126, %s127
      %p136 = scmp.eq.s32.totalorder %s32, 0
      %p137 = por %p135, %p136
      %p138 = scmp.ne.s32.totalorder %s126, %s127
      %p139 = scmp.eq.s32.totalorder %s33, 1
      %p140 = por %p138, %p139
      %p142 = scmp.ne.s32.totalorder %s127, %s141
      %p143 = scmp.eq.s32.totalorder %s33, 0
      %p144 = por %p142, %p143
      %s146 = sadd.s32 %s145, 1
      %p149 = scmp.eq.s32.totalorder %s27, 1
      %p150 = scmp.ne.s32.totalorder %s145, %s147
      %p151 = scmp.eq.s32.totalorder %s27, 0
      %p152 = por %p150, %p151
      %p153 = scmp.ne.s32.totalorder %s145, %s147
      %p154 = scmp.eq.s32.totalorder %s32, 1
      %p155 = por %p153, %p154
      %p156 = scmp.ne.s32.totalorder %s147, %s148
      %p157 = scmp.eq.s32.totalorder %s32, 0
      %p158 = por %p156, %p157
      %p159 = scmp.ne.s32.totalorder %s147, %s148
      %p160 = scmp.eq.s32.totalorder %s33, 1
      %p161 = por %p159, %p160
      %p163 = scmp.ne.s32.totalorder %s148, %s162
      %p164 = scmp.eq.s32.totalorder %s33, 0
      %p165 = por %p163, %p164
      %s167 = sadd.s32 %s166, 1
      %p170 = scmp.eq.s32.totalorder %s27, 1
      %p171 = scmp.ne.s32.totalorder %s166, %s168
      %p172 = scmp.eq.s32.totalorder %s27, 0
      %p173 = por %p171, %p172
      %p174 = scmp.ne.s32.totalorder %s166, %s168
      %p175 = scmp.eq.s32.totalorder %s32, 1
      %p176 = por %p174, %p175
      %p177 = scmp.ne.s32.totalorder %s168, %s169
      %p178 = scmp.eq.s32.totalorder %s32, 0
      %p179 = por %p177, %p178
      %p180 = scmp.ne.s32.totalorder %s168, %s169
      %p181 = scmp.eq.s32.totalorder %s33, 1
      %p182 = por %p180, %p181
      %p184 = scmp.ne.s32.totalorder %s169, %s183
      %p185 = scmp.eq.s32.totalorder %s33, 0
      %p186 = por %p184, %p185
      %s188 = sadd.s32 %s187, 1
      %p191 = scmp.eq.s32.totalorder %s27, 1
      %p192 = scmp.ne.s32.totalorder %s187, %s189
      %p193 = scmp.eq.s32.totalorder %s27, 0
      %p194 = por %p192, %p193
      %p195 = scmp.ne.s32.totalorder %s187, %s189
      %p196 = scmp.eq.s32.totalorder %s32, 1
      %p197 = por %p195, %p196
      %p198 = scmp.ne.s32.totalorder %s189, %s190
      %p199 = scmp.eq.s32.totalorder %s32, 0
      %p200 = por %p198, %p199
      %p201 = scmp.ne.s32.totalorder %s189, %s190
      %p202 = scmp.eq.s32.totalorder %s33, 1
      %p203 = por %p201, %p202
      %p205 = scmp.ne.s32.totalorder %s190, %s204
      %p206 = scmp.eq.s32.totalorder %s33, 0
      %p207 = por %p205, %p206
      %s209 = sadd.s32 %s208, 1
      %p212 = scmp.eq.s32.totalorder %s27, 1
      %p213 = scmp.ne.s32.totalorder %s208, %s210
      %p214 = scmp.eq.s32.totalorder %s27, 0
      %p215 = por %p213, %p214
      %p216 = scmp.ne.s32.totalorder %s208, %s210
      %p217 = scmp.eq.s32.totalorder %s32, 1
      %p218 = por %p216, %p217
      %p219 = scmp.ne.s32.totalorder %s210, %s211
      %p220 = scmp.eq.s32.totalorder %s32, 0
      %p221 = por %p219, %p220
      %p222 = scmp.ne.s32.totalorder %s210, %s211
      %p223 = scmp.eq.s32.totalorder %s33, 1
      %p224 = por %p222, %p223
      %p226 = scmp.ne.s32.totalorder %s211, %s225
      %p227 = scmp.eq.s32.totalorder %s33, 0
      %p228 = por %p226, %p227
      %s230 = sadd.s32 %s229, 1
      %p233 = scmp.eq.s32.totalorder %s27, 1
      %p234 = scmp.ne.s32.totalorder %s229, %s231
      %p235 = scmp.eq.s32.totalorder %s27, 0
      %p236 = por %p234, %p235
      %p237 = scmp.ne.s32.totalorder %s229, %s231
      %p238 = scmp.eq.s32.totalorder %s32, 1
      %p239 = por %p237, %p238
      %p240 = scmp.ne.s32.totalorder %s231, %s232
      %p241 = scmp.eq.s32.totalorder %s32, 0
      %p242 = por %p240, %p241
      %p243 = scmp.ne.s32.totalorder %s231, %s232
      %p244 = scmp.eq.s32.totalorder %s33, 1
      %p245 = por %p243, %p244
      %p247 = scmp.ne.s32.totalorder %s232, %s246
      %p248 = scmp.eq.s32.totalorder %s33, 0
      %p249 = por %p247, %p248
      %s251 = sadd.s32 %s250, 1
      %p254 = scmp.eq.s32.totalorder %s27, 1
      %p255 = scmp.ne.s32.totalorder %s250, %s252
      %p256 = scmp.eq.s32.totalorder %s27, 0
      %p257 = por %p255, %p256
      %p258 = scmp.ne.s32.totalorder %s250, %s252
      %p259 = scmp.eq.s32.totalorder %s32, 1
      %p260 = por %p258, %p259
      %p261 = scmp.ne.s32.totalorder %s252, %s253
      %p262 = scmp.eq.s32.totalorder %s32, 0
      %p263 = por %p261, %p262
      %p264 = scmp.ne.s32.totalorder %s252, %s253
      %p265 = scmp.eq.s32.totalorder %s33, 1
      %p266 = por %p264, %p265
      %p268 = scmp.ne.s32.totalorder %s253, %s267
      %p269 = scmp.eq.s32.totalorder %s33, 0
      %p270 = por %p268, %p269
      %s272 = sadd.s32 %s271, 1
      %p275 = scmp.eq.s32.totalorder %s27, 1
      %p276 = scmp.ne.s32.totalorder %s271, %s273
      %p277 = scmp.eq.s32.totalorder %s27, 0
      %p278 = por %p276, %p277
      %p279 = scmp.ne.s32.totalorder %s271, %s273
      %p280 = scmp.eq.s32.totalorder %s32, 1
      %p281 = por %p279, %p280
      %p282 = scmp.ne.s32.totalorder %s273, %s274
      %p283 = scmp.eq.s32.totalorder %s32, 0
      %p284 = por %p282, %p283
      %p285 = scmp.ne.s32.totalorder %s273, %s274
      %p286 = scmp.eq.s32.totalorder %s33, 1
      %p287 = por %p285, %p286
      %p289 = scmp.ne.s32.totalorder %s274, %s288
      %p290 = scmp.eq.s32.totalorder %s33, 0
      %p291 = por %p289, %p290
      %s293 = sadd.s32 %s292, 1
      %p296 = scmp.eq.s32.totalorder %s27, 1
      %p297 = scmp.ne.s32.totalorder %s292, %s294
      %p298 = scmp.eq.s32.totalorder %s27, 0
      %p299 = por %p297, %p298
      %p300 = scmp.ne.s32.totalorder %s292, %s294
      %p301 = scmp.eq.s32.totalorder %s32, 1
      %p302 = por %p300, %p301
      %p303 = scmp.ne.s32.totalorder %s294, %s295
      %p304 = scmp.eq.s32.totalorder %s32, 0
      %p305 = por %p303, %p304
      %p306 = scmp.ne.s32.totalorder %s294, %s295
      %p307 = scmp.eq.s32.totalorder %s33, 1
      %p308 = por %p306, %p307
      %p310 = scmp.ne.s32.totalorder %s295, %s309
      %p311 = scmp.eq.s32.totalorder %s33, 0
      %p312 = por %p310, %p311
      %s314 = sadd.s32 %s313, 1
      %p317 = scmp.eq.s32.totalorder %s27, 1
      %p318 = scmp.ne.s32.totalorder %s313, %s315
      %p319 = scmp.eq.s32.totalorder %s27, 0
      %p320 = por %p318, %p319
      %p321 = scmp.ne.s32.totalorder %s313, %s315
      %p322 = scmp.eq.s32.totalorder %s32, 1
      %p323 = por %p321, %p322
      %p324 = scmp.ne.s32.totalorder %s315, %s316
      %p325 = scmp.eq.s32.totalorder %s32, 0
      %p326 = por %p324, %p325
      %p327 = scmp.ne.s32.totalorder %s315, %s316
      %p328 = scmp.eq.s32.totalorder %s33, 1
      %p329 = por %p327, %p328
      %p331 = scmp.ne.s32.totalorder %s316, %s330
      %p332 = scmp.eq.s32.totalorder %s33, 0
      %p333 = por %p331, %p332
      %s335 = sadd.s32 %s334, 1
      %p338 = scmp.eq.s32.totalorder %s27, 1
      %p339 = scmp.ne.s32.totalorder %s334, %s336
      %p340 = scmp.eq.s32.totalorder %s27, 0
      %p341 = por %p339, %p340
      %p342 = scmp.ne.s32.totalorder %s334, %s336
      %p343 = scmp.eq.s32.totalorder %s32, 1
      %p344 = por %p342, %p343
      %p345 = scmp.ne.s32.totalorder %s336, %s337
      %p346 = scmp.eq.s32.totalorder %s32, 0
      %p347 = por %p345, %p346
      %p348 = scmp.ne.s32.totalorder %s336, %s337
      %p349 = scmp.eq.s32.totalorder %s33, 1
      %p350 = por %p348, %p349
      %p352 = scmp.ne.s32.totalorder %s337, %s351
      %p353 = scmp.eq.s32.totalorder %s33, 0
      %p354 = por %p352, %p353
      %s356 = sadd.s32 %s355, 1
      %p359 = scmp.eq.s32.totalorder %s27, 1
      %p360 = scmp.ne.s32.totalorder %s355, %s357
      %p361 = scmp.eq.s32.totalorder %s27, 0
      %p362 = por %p360, %p361
      %p363 = scmp.ne.s32.totalorder %s355, %s357
      %p364 = scmp.eq.s32.totalorder %s32, 1
      %p365 = por %p363, %p364
      %p366 = scmp.ne.s32.totalorder %s357, %s358
      %p367 = scmp.eq.s32.totalorder %s32, 0
      %p368 = por %p366, %p367
      %p369 = scmp.ne.s32.totalorder %s357, %s358
      %p370 = scmp.eq.s32.totalorder %s33, 1
      %p371 = por %p369, %p370
      %p373 = scmp.ne.s32.totalorder %s358, %s372
      %p374 = scmp.eq.s32.totalorder %s33, 0
      %p375 = por %p373, %p374
      %s376 = ssub.s32 %s27, %s34
      %p377 = scmp.eq.s32.totalorder %s376, 0
      %s379 = sadd.s32 %s378, 1
      %s380 = scalar_select %p377, %s378, %s379
      %p383 = pneg %p377
      %p384 = scmp.eq.s32.totalorder %s27, 1
      %p385 = por %p383, %p384
      %p386 = scmp.ne.s32.totalorder %s378, %s381
      %p387 = scmp.eq.s32.totalorder %s27, 0
      %p388 = por %p386, %p387
      %p389 = scmp.ne.s32.totalorder %s378, %s381
      %p390 = scmp.eq.s32.totalorder %s32, 1
      %p391 = por %p389, %p390
      %p392 = scmp.ne.s32.totalorder %s381, %s382
      %p393 = scmp.eq.s32.totalorder %s32, 0
      %p394 = por %p392, %p393
      %p395 = scmp.ne.s32.totalorder %s381, %s382
      %p396 = scmp.eq.s32.totalorder %s33, 1
      %p397 = por %p395, %p396
      %p399 = scmp.ne.s32.totalorder %s382, %s398
      %p400 = scmp.eq.s32.totalorder %s33, 0
      %p401 = por %p399, %p400
      %p402 = scmp.le.s32.totalorder 1, %s27
      %p403 = scmp.lt.s32.totalorder %s27, 3
      %p404 = pnand %p402, %p403
      %p405 = pneg %p404
      // Predicated region
      $region9: #{hubert_forward.2} parent=5 // pred_check
        _
      $region10: #{hubert_forward.2} parent=5 // pred_check_branch
        %407 = sbr.rel (%p404) target = $region12
      $region11: #{hubert_forward.2} parent=5 // pred_region
        %s408 = ssub.s32 %s27, 1
        // Predicated region
        $region13: #{hubert_forward.2} parent=11 // pred_check
          %p409 = pneg %p74
        $region14: #{hubert_forward.2} parent=11 // pred_check_branch
          %411 = sbr.rel (%p409) target = $region16
        $region15: #{hubert_forward.2} parent=11 // pred_region
          %413 = vsyncadd [#allocation3], 0
          %s415 = sshll.u32 %s1, 4
          %s416 = int_to_ptr.hbm [resolvable:$true] %s415
          %s417 = sshll.u32 [#allocation2], 4
          %s418 = int_to_ptr.vmem [resolvable:$true] %s417
          %420 = dma.hbm_to_vmem [thread:$0]  %s416, 64, %s418, [#allocation3]
        $region16: #{hubert_forward.2} parent=11 // pred_fallthru
          _
        // Predicated region
        $region17: #{hubert_forward.2} parent=11 // pred_check
          %p421 = pneg %p95
        $region18: #{hubert_forward.2} parent=11 // pred_check_branch
          %423 = sbr.rel (%p421) target = $region20
        $region19: #{hubert_forward.2} parent=11 // pred_region
          %425 = vsyncadd [#allocation5], 0
          %s427 = sshll.u32 %s2, 4
          %s428 = int_to_ptr.hbm [resolvable:$true] %s427
          %s429 = sshll.u32 [#allocation4], 4
          %s430 = int_to_ptr.vmem [resolvable:$true] %s429
          %432 = dma.hbm_to_vmem [thread:$0]  %s428, 64, %s430, [#allocation5]
        $region20: #{hubert_forward.2} parent=11 // pred_fallthru
          _
        // Predicated region
        $region21: #{hubert_forward.2} parent=11 // pred_check
          %p433 = pneg %p116
        $region22: #{hubert_forward.2} parent=11 // pred_check_branch
          %435 = sbr.rel (%p433) target = $region24
        $region23: #{hubert_forward.2} parent=11 // pred_region
          _
        $region24: #{hubert_forward.2} parent=11 // pred_fallthru
          _
        // Predicated region
        $region25: #{hubert_forward.2} parent=11 // pred_check
          %p436 = pneg %p137
        $region26: #{hubert_forward.2} parent=11 // pred_check_branch
          %438 = sbr.rel (%p436) target = $region28
        $region27: #{hubert_forward.2} parent=11 // pred_region
          _
        $region28: #{hubert_forward.2} parent=11 // pred_fallthru
          _
        // Predicated region
        $region29: #{hubert_forward.2} parent=11 // pred_check
          %p439 = pneg %p158
        $region30: #{hubert_forward.2} parent=11 // pred_check_branch
          %441 = sbr.rel (%p439) target = $region32
        $region31: #{hubert_forward.2} parent=11 // pred_region
          %443 = vsyncadd [#allocation5], 0
          %s444 = sshll.u32 %s5, 4
          %s445 = int_to_ptr.hbm [resolvable:$true] %s444
          %s446 = sshll.u32 [#allocation6], 4
          %s447 = int_to_ptr.vmem [resolvable:$true] %s446
          %452 = dma.hbm_to_vmem [thread:$0]  %s445, 1536, %s447, [#allocation5], 128, 128, 8
        $region32: #{hubert_forward.2} parent=11 // pred_fallthru
          _
        // Predicated region
        $region33: #{hubert_forward.2} parent=11 // pred_check
          %p453 = pneg %p179
        $region34: #{hubert_forward.2} parent=11 // pred_check_branch
          %455 = sbr.rel (%p453) target = $region36
        $region35: #{hubert_forward.2} parent=11 // pred_region
          %457 = vsyncadd [#allocation8], 0
          %s458 = sshll.u32 %s6, 4
          %s459 = int_to_ptr.hbm [resolvable:$true] %s458
          %s460 = sshll.u32 [#allocation7], 4
          %s461 = int_to_ptr.vmem [resolvable:$true] %s460
          %466 = dma.hbm_to_vmem [thread:$0]  %s459, 768, %s461, [#allocation8], 64, 64, 4
        $region36: #{hubert_forward.2} parent=11 // pred_fallthru
          _
        // Predicated region
        $region37: #{hubert_forward.2} parent=11 // pred_check
          %p467 = pneg %p200
        $region38: #{hubert_forward.2} parent=11 // pred_check_branch
          %469 = sbr.rel (%p467) target = $region40
        $region39: #{hubert_forward.2} parent=11 // pred_region
          _
        $region40: #{hubert_forward.2} parent=11 // pred_fallthru
          _
        // Predicated region
        $region41: #{hubert_forward.2} parent=11 // pred_check
          %p470 = pneg %p221
        $region42: #{hubert_forward.2} parent=11 // pred_check_branch
          %472 = sbr.rel (%p470) target = $region44
        $region43: #{hubert_forward.2} parent=11 // pred_region
          _
        $region44: #{hubert_forward.2} parent=11 // pred_fallthru
          _
        // Predicated region
        $region45: #{hubert_forward.2} parent=11 // pred_check
          %p473 = pneg %p242
        $region46: #{hubert_forward.2} parent=11 // pred_check_branch
          %475 = sbr.rel (%p473) target = $region48
        $region47: #{hubert_forward.2} parent=11 // pred_region
          %477 = vsyncadd [#allocation8], 0
          %s478 = sshll.u32 %s9, 4
          %s479 = int_to_ptr.hbm [resolvable:$true] %s478
          %s480 = sshll.u32 [#allocation9], 4
          %s481 = int_to_ptr.vmem [resolvable:$true] %s480
          %486 = dma.hbm_to_vmem [thread:$0]  %s479, 256, %s481, [#allocation8], 64, 64, 4
        $region48: #{hubert_forward.2} parent=11 // pred_fallthru
          _
        // Predicated region
        $region49: #{hubert_forward.2} parent=11 // pred_check
          %p487 = pneg %p263
        $region50: #{hubert_forward.2} parent=11 // pred_check_branch
          %489 = sbr.rel (%p487) target = $region52
        $region51: #{hubert_forward.2} parent=11 // pred_region
          %491 = vsyncadd [#allocation11], 0
          %s493 = sshll.u32 %s10, 4
          %s494 = int_to_ptr.hbm [resolvable:$true] %s493
          %s495 = sshll.u32 [#allocation10], 4
          %s496 = int_to_ptr.vmem [resolvable:$true] %s495
          %498 = dma.hbm_to_vmem [thread:$0]  %s494, 16, %s496, [#allocation11]
        $region52: #{hubert_forward.2} parent=11 // pred_fallthru
          _
        // Predicated region
        $region53: #{hubert_forward.2} parent=11 // pred_check
          %p499 = pneg %p284
        $region54: #{hubert_forward.2} parent=11 // pred_check_branch
          %501 = sbr.rel (%p499) target = $region56
        $region55: #{hubert_forward.2} parent=11 // pred_region
          _
        $region56: #{hubert_forward.2} parent=11 // pred_fallthru
          _
        // Predicated region
        $region57: #{hubert_forward.2} parent=11 // pred_check
          %p502 = pneg %p305
        $region58: #{hubert_forward.2} parent=11 // pred_check_branch
          %504 = sbr.rel (%p502) target = $region60
        $region59: #{hubert_forward.2} parent=11 // pred_region
          %506 = vsyncadd [#allocation11], 0
          %s507 = sshll.u32 %s12, 4
          %s508 = int_to_ptr.hbm [resolvable:$true] %s507
          %s509 = sshll.u32 [#allocation12], 4
          %s510 = int_to_ptr.vmem [resolvable:$true] %s509
          %515 = dma.hbm_to_vmem [thread:$0]  %s508, 1280, %s510, [#allocation11], 64, 64, 4
        $region60: #{hubert_forward.2} parent=11 // pred_fallthru
          _
        // Predicated region
        $region61: #{hubert_forward.2} parent=11 // pred_check
          %p516 = pneg %p326
        $region62: #{hubert_forward.2} parent=11 // pred_check_branch
          %518 = sbr.rel (%p516) target = $region64
        $region63: #{hubert_forward.2} parent=11 // pred_region
          %520 = vsyncadd [#allocation14], 0
          %s522 = sshll.u32 %s13, 4
          %s523 = int_to_ptr.hbm [resolvable:$true] %s522
          %s524 = sshll.u32 [#allocation13], 4
          %s525 = int_to_ptr.vmem [resolvable:$true] %s524
          %527 = dma.hbm_to_vmem [thread:$0]  %s523, 16, %s525, [#allocation14]
        $region64: #{hubert_forward.2} parent=11 // pred_fallthru
          _
        // Predicated region
        $region65: #{hubert_forward.2} parent=11 // pred_check
          %p528 = pneg %p347
        $region66: #{hubert_forward.2} parent=11 // pred_check_branch
          %530 = sbr.rel (%p528) target = $region68
        $region67: #{hubert_forward.2} parent=11 // pred_region
          _
        $region68: #{hubert_forward.2} parent=11 // pred_fallthru
          _
        // Predicated region
        $region69: #{hubert_forward.2} parent=11 // pred_check
          %p531 = pneg %p368
        $region70: #{hubert_forward.2} parent=11 // pred_check_branch
          %533 = sbr.rel (%p531) target = $region72
        $region71: #{hubert_forward.2} parent=11 // pred_region
          _
        $region72: #{hubert_forward.2} parent=11 // pred_fallthru
          _
      $region12: #{hubert_forward.2} parent=5 // pred_fallthru
        _
      %p534 = scmp.lt.s32.totalorder %s27, 2
      // Predicated region
      $region73: #{hubert_forward.2} parent=5 // pred_check
        %p535 = pneg %p534
      $region74: #{hubert_forward.2} parent=5 // pred_check_branch
        %537 = sbr.rel (%p535) target = $region76
      $region75: #{hubert_forward.2} parent=5 // pred_region
        // Predicated region
        $region77: #{hubert_forward.2} parent=75 // pred_check
          %p538 = pneg %p47
        $region78: #{hubert_forward.2} parent=75 // pred_check_branch
          %540 = sbr.rel (%p538) target = $region80
        $region79: #{hubert_forward.2} parent=75 // pred_region
          %p541 = scmp.lt.s32.totalorder %s27, 1
          %s542 = scalar_select %p541, %s27, 1
          %s543 = smul.addr %s542, 9
          %s544 = smul.addr %s543, 8
          %s545 = scalar_lea.vmem %s0, %s544
        $region80: #{hubert_forward.2} parent=75 // pred_fallthru
          _
      $region76: #{hubert_forward.2} parent=5 // pred_fallthru
        _
      %p546 = scmp.le.s32.totalorder 1, %s27
      %p547 = scmp.lt.s32.totalorder %s27, 3
      %p548 = pnand %p546, %p547
      %p549 = pneg %p548
      // Predicated region
      $region81: #{hubert_forward.2} parent=5 // pred_check
        _
      $region82: #{hubert_forward.2} parent=5 // pred_check_branch
        %551 = sbr.rel (%p548) target = $region84
      $region83: #{hubert_forward.2} parent=5 // pred_region
        %s552 = ssub.s32 %s27, 1
        // Predicated region
        $region85: #{hubert_forward.2} parent=83 // pred_check
          %p553 = pneg %p74
        $region86: #{hubert_forward.2} parent=83 // pred_check_branch
          %555 = sbr.rel (%p553) target = $region88
        $region87: #{hubert_forward.2} parent=83 // pred_region
          %557 = dma.done [#allocation3], 64
        $region88: #{hubert_forward.2} parent=83 // pred_fallthru
          _
        // Predicated region
        $region89: #{hubert_forward.2} parent=83 // pred_check
          %p558 = pneg %p95
        $region90: #{hubert_forward.2} parent=83 // pred_check_branch
          %560 = sbr.rel (%p558) target = $region92
        $region91: #{hubert_forward.2} parent=83 // pred_region
          %562 = dma.done [#allocation5], 64
        $region92: #{hubert_forward.2} parent=83 // pred_fallthru
          _
        // Predicated region
        $region93: #{hubert_forward.2} parent=83 // pred_check
          %p563 = pneg %p158
        $region94: #{hubert_forward.2} parent=83 // pred_check_branch
          %565 = sbr.rel (%p563) target = $region96
        $region95: #{hubert_forward.2} parent=83 // pred_region
          %567 = dma.done [#allocation5], 1536
        $region96: #{hubert_forward.2} parent=83 // pred_fallthru
          _
        // Predicated region
        $region97: #{hubert_forward.2} parent=83 // pred_check
          %p568 = pneg %p179
        $region98: #{hubert_forward.2} parent=83 // pred_check_branch
          %570 = sbr.rel (%p568) target = $region100
        $region99: #{hubert_forward.2} parent=83 // pred_region
          %572 = dma.done [#allocation8], 768
        $region100: #{hubert_forward.2} parent=83 // pred_fallthru
          _
        // Predicated region
        $region101: #{hubert_forward.2} parent=83 // pred_check
          %p573 = pneg %p242
        $region102: #{hubert_forward.2} parent=83 // pred_check_branch
          %575 = sbr.rel (%p573) target = $region104
        $region103: #{hubert_forward.2} parent=83 // pred_region
          %577 = dma.done [#allocation8], 256
        $region104: #{hubert_forward.2} parent=83 // pred_fallthru
          _
        // Predicated region
        $region105: #{hubert_forward.2} parent=83 // pred_check
          %p578 = pneg %p263
        $region106: #{hubert_forward.2} parent=83 // pred_check_branch
          %580 = sbr.rel (%p578) target = $region108
        $region107: #{hubert_forward.2} parent=83 // pred_region
          %582 = dma.done [#allocation11], 16
        $region108: #{hubert_forward.2} parent=83 // pred_fallthru
          _
        // Predicated region
        $region109: #{hubert_forward.2} parent=83 // pred_check
          %p583 = pneg %p305
        $region110: #{hubert_forward.2} parent=83 // pred_check_branch
          %585 = sbr.rel (%p583) target = $region112
        $region111: #{hubert_forward.2} parent=83 // pred_region
          %587 = dma.done [#allocation11], 1280
        $region112: #{hubert_forward.2} parent=83 // pred_fallthru
          _
        // Predicated region
        $region113: #{hubert_forward.2} parent=83 // pred_check
          %p588 = pneg %p326
        $region114: #{hubert_forward.2} parent=83 // pred_check_branch
          %590 = sbr.rel (%p588) target = $region116
        $region115: #{hubert_forward.2} parent=83 // pred_region
          %592 = dma.done [#allocation14], 16
        $region116: #{hubert_forward.2} parent=83 // pred_fallthru
          _
        %p593 = scmp.lt.s32.totalorder %s32, 1
        %s594 = scalar_select %p593, %s32, 1
        %s595 = smul.addr %s594, 9
        %s596 = smul.addr %s595, 8
        %s597 = scalar_lea.vmem %s0, %s596
        %p598 = pneg %p53
        %p599 = pneg %p50
        %p600 = pneg %p74
        %p601 = pneg %p71
        %p602 = pneg %p95
        %p603 = pneg %p92
        %p604 = pneg %p116
        %p605 = pneg %p113
        %p606 = pneg %p137
        %p607 = pneg %p134
        %p608 = pneg %p158
        %p609 = pneg %p155
        %p610 = pneg %p179
        %p611 = pneg %p176
        %p612 = pneg %p200
        %p613 = pneg %p197
        %p614 = pneg %p221
        %p615 = pneg %p218
        %p616 = pneg %p242
        %p617 = pneg %p239
        %p618 = pneg %p263
        %p619 = pneg %p260
        %p620 = pneg %p284
        %p621 = pneg %p281
        %p622 = pneg %p305
        %p623 = pneg %p302
        %p624 = pneg %p326
        %p625 = pneg %p323
        %p626 = pneg %p347
        %p627 = pneg %p344
        %p628 = pneg %p368
        %p629 = pneg %p365
        %p630 = pneg %p394
        %p631 = pneg %p391
        %p632 = scmp.lt.s32.totalorder %s32, 1
        %s633 = scalar_select %p632, %s32, 1
        %s634 = smul.addr %s633, 4
        %s635 = smul.addr %s634, 8
        %s636 = scalar_lea.vmem %s16, %s635
        %p637 = scmp.lt.s32.totalorder %s32, 1
        %s638 = scalar_select %p637, %s32, 1
        %s639 = smul.addr %s638, 9
        %s640 = smul.addr %s639, 8
        %s641 = scalar_lea.vmem %s0, %s640
        %p642 = scmp.lt.s32.totalorder %s32, 1
        %s643 = scalar_select %p642, %s32, 1
        %s644 = smul.addr %s643, 4
        %s645 = smul.addr %s644, 8
        %s646 = scalar_lea.vmem %s16, %s645
        %v648 = vld [vmem:[%s641] sm:$0xff]
        %v649 = vld [vmem:[%s641 + $0x8] sm:$0xff]
        %v650 = vld [vmem:[%s641 + $0x10] sm:$0xff]
        %v651 = vld [vmem:[%s641 + $0x18] sm:$0xff]
        %v652 = vld [vmem:[%s641 + $0x20] sm:$0xff]
        %v653 = vld [vmem:[%s641 + $0x28] sm:$0xff]
        %v654 = vld [vmem:[%s641 + $0x30] sm:$0xff]
        %v655 = vld [vmem:[%s641 + $0x38] sm:$0xff]
        %v656 = vld [vmem:[%s641 + $0x40] sm:$0x3]
        %vm657 = vcmask 39936
        %v658 = vsel %vm657, %v648, 0.0
        %659 = vadd.xlane.f32.xlu0 %v658
        %v660 = vpop.xlane.xlu0 %659
        %v661 = vsel %vm657, %v649, 0.0
        %662 = vadd.xlane.f32.xlu0 %v661
        %v663 = vpop.xlane.xlu0 %662
        %v664 = vsel %vm657, %v650, 0.0
        %665 = vadd.xlane.f32.xlu0 %v664
        %v666 = vpop.xlane.xlu0 %665
        %v667 = vsel %vm657, %v651, 0.0
        %668 = vadd.xlane.f32.xlu0 %v667
        %v669 = vpop.xlane.xlu0 %668
        %v670 = vsel %vm657, %v652, 0.0
        %671 = vadd.xlane.f32.xlu0 %v670
        %v672 = vpop.xlane.xlu0 %671
        %v673 = vsel %vm657, %v653, 0.0
        %674 = vadd.xlane.f32.xlu0 %v673
        %v675 = vpop.xlane.xlu0 %674
        %v676 = vsel %vm657, %v654, 0.0
        %677 = vadd.xlane.f32.xlu0 %v676
        %v678 = vpop.xlane.xlu0 %677
        %v679 = vsel %vm657, %v655, 0.0
        %680 = vadd.xlane.f32.xlu0 %v679
        %v681 = vpop.xlane.xlu0 %680
        %vm682 = vcmask 33792
        %v683 = vsel %vm682, %v656, 0.0
        %684 = vadd.xlane.f32.xlu0 %v683
        %v685 = vpop.xlane.xlu0 %684
        %v686 = vadd.f32 %v660, %v663
        %v687 = vadd.f32 %v686, %v666
        %v688 = vadd.f32 %v687, %v669
        %v689 = vadd.f32 %v688, %v672
        %v690 = vadd.f32 %v689, %v675
        %v691 = vadd.f32 %v690, %v678
        %v692 = vadd.f32 %v691, %v681
        %vm693 = vcmask 1041408
        %v694 = vsel %vm693, %v685, 0.0
        %v695 = vadd.f32 %v692, %v694
        %v696 = vrot.slane %v695, 4
        %v697 = vadd.f32 %v695, %v696
        %v698 = vrot.slane %v697, 2
        %v699 = vadd.f32 %v697, %v698
        %v700 = vrot.slane %v699, 1
        %v701 = vadd.f32 %v699, %v700
        %v702 = vrcp.pop 330.0
        %v703 = vmul.f32 330.0, %v702
        %v704 = vsub.f32 1.0, %v703
        %v705 = vmul.f32 %v702, %v704
        %v706 = vadd.f32 %v702, %v705
        %vm707 = vweird.f32 %v702
        %v708 = vsel %vm707, %v702, %v706
        %v709 = vmul.f32 %v701, %v708
        %v710 = vsub.f32 %v648, %v709
        %v711 = vsub.f32 %v649, %v709
        %v712 = vsub.f32 %v650, %v709
        %v713 = vsub.f32 %v651, %v709
        %v714 = vsub.f32 %v652, %v709
        %v715 = vsub.f32 %v653, %v709
        %v716 = vsub.f32 %v654, %v709
        %v717 = vsub.f32 %v655, %v709
        %v718 = vsub.f32 %v656, %v709
        %v719 = vmul.f32 %v710, %v710
        %v720 = vmul.f32 %v711, %v711
        %v721 = vmul.f32 %v712, %v712
        %v722 = vmul.f32 %v713, %v713
        %v723 = vmul.f32 %v714, %v714
        %v724 = vmul.f32 %v715, %v715
        %v725 = vmul.f32 %v716, %v716
        %v726 = vmul.f32 %v717, %v717
        %v727 = vmul.f32 %v718, %v718
        %v728 = vsel %vm657, %v719, 0.0
        %729 = vadd.xlane.f32.xlu0 %v728
        %v730 = vpop.xlane.xlu0 %729
        %v731 = vsel %vm657, %v720, 0.0
        %732 = vadd.xlane.f32.xlu0 %v731
        %v733 = vpop.xlane.xlu0 %732
        %v734 = vsel %vm657, %v721, 0.0
        %735 = vadd.xlane.f32.xlu0 %v734
        %v736 = vpop.xlane.xlu0 %735
        %v737 = vsel %vm657, %v722, 0.0
        %738 = vadd.xlane.f32.xlu0 %v737
        %v739 = vpop.xlane.xlu0 %738
        %v740 = vsel %vm657, %v723, 0.0
        %741 = vadd.xlane.f32.xlu0 %v740
        %v742 = vpop.xlane.xlu0 %741
        %v743 = vsel %vm657, %v724, 0.0
        %744 = vadd.xlane.f32.xlu0 %v743
        %v745 = vpop.xlane.xlu0 %744
        %v746 = vsel %vm657, %v725, 0.0
        %747 = vadd.xlane.f32.xlu0 %v746
        %v748 = vpop.xlane.xlu0 %747
        %v749 = vsel %vm657, %v726, 0.0
        %750 = vadd.xlane.f32.xlu0 %v749
        %v751 = vpop.xlane.xlu0 %750
        %v752 = vsel %vm682, %v727, 0.0
        %753 = vadd.xlane.f32.xlu0 %v752
        %v754 = vpop.xlane.xlu0 %753
        %v755 = vadd.f32 %v730, %v733
        %v756 = vadd.f32 %v755, %v736
        %v757 = vadd.f32 %v756, %v739
        %v758 = vadd.f32 %v757, %v742
        %v759 = vadd.f32 %v758, %v745
        %v760 = vadd.f32 %v759, %v748
        %v761 = vadd.f32 %v760, %v751
        %v762 = vsel %vm693, %v754, 0.0
        %v763 = vadd.f32 %v761, %v762
        %v764 = vrot.slane %v763, 4
        %v765 = vadd.f32 %v763, %v764
        %v766 = vrot.slane %v765, 2
        %v767 = vadd.f32 %v765, %v766
        %v768 = vrot.slane %v767, 1
        %v769 = vadd.f32 %v767, %v768
        %v770 = vrcp.pop 329.0
        %v771 = vmul.f32 329.0, %v770
        %v772 = vsub.f32 1.0, %v771
        %v773 = vmul.f32 %v770, %v772
        %v774 = vadd.f32 %v770, %v773
        %vm775 = vweird.f32 %v770
        %v776 = vsel %vm775, %v770, %v774
        %v777 = vmul.f32 %v769, %v776
        %v778 = vrsqrt.pop %v777
        %v779 = vmul.f32 %v778, %v777
        %v780 = vmul.f32 %v779, %v778
        %v781 = vmul.f32 0.5, %v780
        %v782 = vsub.f32 1.5, %v781
        %v783 = vmul.f32 %v778, %v782
        %v784 = vmul.f32 %v777, %v783
        %vm785 = vcmp.eq.f32.partialorder %v777, inf
        %v786 = vsel %vm785, %v777, %v784
        %vm787 = vcmp.eq.f32.partialorder %v777, 0.0
        %v788 = vand.u32 %v777, 2147483648
        %v789 = vsel %vm787, %v788, %v786
        %v790 = vadd.f32 %v789, 1e-05
        %v791 = vrsqrt.pop %v790
        %v792 = vmul.f32 %v791, %v790
        %v793 = vmul.f32 %v792, %v791
        %v794 = vmul.f32 0.5, %v793
        %v795 = vsub.f32 1.5, %v794
        %v796 = vmul.f32 %v791, %v795
        %v797 = vmul.f32 %v790, %v796
        %vm798 = vcmp.eq.f32.partialorder %v790, inf
        %v799 = vsel %vm798, %v790, %v797
        %vm800 = vcmp.eq.f32.partialorder %v790, 0.0
        %v801 = vand.u32 %v790, 2147483648
        %v802 = vsel %vm800, %v801, %v799
        %v803 = vrcp.pop %v802
        %v804 = vmul.f32 %v802, %v803
        %v805 = vsub.f32 1.0, %v804
        %v806 = vmul.f32 %v803, %v805
        %v807 = vadd.f32 %v803, %v806
        %vm808 = vweird.f32 %v802
        %vm809 = vweird.f32 %v803
        %vm810 = vmor %vm808, %vm809
        %v811 = vsel %vm810, %v803, %v807
        %v812 = vand.u32 2147483647, %v802
        %vm813 = vcmp.eq.f32.partialorder %v812, 8.507059e+37
        %v814 = vand.u32 %v802, 2147483648
        %v815 = vor.u32 1.1754944e-38, %v814
        %v816 = vsel %vm813, %v815, %v811
        %v817 = vmul.f32 %v710, %v816
        %v818 = vmul.f32 %v711, %v816
        %v819 = vmul.f32 %v712, %v816
        %v820 = vmul.f32 %v713, %v816
        %v821 = vmul.f32 %v714, %v816
        %v822 = vmul.f32 %v715, %v816
        %v823 = vmul.f32 %v716, %v816
        %v824 = vmul.f32 %v717, %v816
        %v825 = vmul.f32 %v718, %v816
        %v826 = vpack.c.bf16 %v818, %v817
        %v827 = vpack.c.bf16 %v820, %v819
        %v828 = vpack.c.bf16 %v822, %v821
        %v829 = vpack.c.bf16 %v824, %v823
        %v830 = vpack.c.bf16 %v825, %v825
        %v831 = vld [vmem:[#allocation2] sm:$0x7]
        %v833 = vsel %vm657, %v826, 0
        %v836 = vsel %vm657, %v827, 0
        %v839 = vsel %vm657, %v828, 0
        %v842 = vsel %vm657, %v829, 0
        %v845 = vsel %vm657, %v830, 0
        %vm847 = vcmask 1042432
        %v848 = vsel %vm693, 4294967295, 65535
        %v849 = vsel %vm847, %v848, 0
        %v851 = vand.u32 %v831, %v849
        %853 = vmatpush.bf16.msra.mxu0 0
        %854 = vmatpush.bf16.msra.mxu0 0
        %855 = vmatpush.bf16.msra.mxu0 0
        %856 = vmatpush.bf16.msra.mxu0 0
        %857 = vmatpush.bf16.msra.mxu0 0
        %858 = vmatpush.bf16.msra.mxu0 0
        %859 = vmatpush.bf16.msra.mxu0 0
        %860 = vmatpush.bf16.msra.mxu0 %v851
        %861 = vmatmul.bf16.gmra.mxu0 %v833
        %v862 = vpop.f32.mrf.mxu0
        %v863 = vadd.f32 0.0, %v862
        %v864 = vpop.f32.mrf.mxu0
        %v865 = vadd.f32 0.0, %v864
        %866 = vmatmul.bf16.gmra.mxu0 %v836
        %v867 = vpop.f32.mrf.mxu0
        %v868 = vadd.f32 0.0, %v867
        %v869 = vpop.f32.mrf.mxu0
        %v870 = vadd.f32 0.0, %v869
        %871 = vmatmul.bf16.gmra.mxu0 %v839
        %v872 = vpop.f32.mrf.mxu0
        %v873 = vadd.f32 0.0, %v872
        %v874 = vpop.f32.mrf.mxu0
        %v875 = vadd.f32 0.0, %v874
        %876 = vmatmul.bf16.gmra.mxu0 %v842
        %v877 = vpop.f32.mrf.mxu0
        %v878 = vadd.f32 0.0, %v877
        %v879 = vpop.f32.mrf.mxu0
        %v880 = vadd.f32 0.0, %v879
        %881 = vmatmul.bf16.gmra.mxu0 %v845
        %v882 = vpop.f32.mrf.mxu0
        %v883 = vadd.f32 0.0, %v882
        %v884 = vpop.f32.mrf.mxu0
        %885 = vdwg.mxu0
        %v886 = vld [vmem:[#allocation4] sm:$0x7]
        %v888 = vand.u32 %v886, %v849
        %890 = vmatpush.bf16.msra.mxu0 0
        %891 = vmatpush.bf16.msra.mxu0 0
        %892 = vmatpush.bf16.msra.mxu0 0
        %893 = vmatpush.bf16.msra.mxu0 0
        %894 = vmatpush.bf16.msra.mxu0 0
        %895 = vmatpush.bf16.msra.mxu0 0
        %896 = vmatpush.bf16.msra.mxu0 0
        %897 = vmatpush.bf16.msra.mxu0 %v888
        %898 = vmatmul.bf16.gmra.mxu0 %v833
        %v899 = vpop.f32.mrf.mxu0
        %v900 = vadd.f32 0.0, %v899
        %v901 = vpop.f32.mrf.mxu0
        %v902 = vadd.f32 0.0, %v901
        %903 = vmatmul.bf16.gmra.mxu0 %v836
        %v904 = vpop.f32.mrf.mxu0
        %v905 = vadd.f32 0.0, %v904
        %v906 = vpop.f32.mrf.mxu0
        %v907 = vadd.f32 0.0, %v906
        %908 = vmatmul.bf16.gmra.mxu0 %v839
        %v909 = vpop.f32.mrf.mxu0
        %v910 = vadd.f32 0.0, %v909
        %v911 = vpop.f32.mrf.mxu0
        %v912 = vadd.f32 0.0, %v911
        %913 = vmatmul.bf16.gmra.mxu0 %v842
        %v914 = vpop.f32.mrf.mxu0
        %v915 = vadd.f32 0.0, %v914
        %v916 = vpop.f32.mrf.mxu0
        %v917 = vadd.f32 0.0, %v916
        %918 = vmatmul.bf16.gmra.mxu0 %v845
        %v919 = vpop.f32.mrf.mxu0
        %v920 = vadd.f32 0.0, %v919
        %v921 = vpop.f32.mrf.mxu0
        %922 = vdwg.mxu0
        %vm932 = vcmask 1046528
        %v933 = vrot.slane %v900, 1
        %v934 = vrot.slane %v902, 1
        %v935 = vsel %vm932, %v933, %v934
        %v936 = vrot.slane %v905, 1
        %v937 = vsel %vm932, %v934, %v936
        %v938 = vrot.slane %v907, 1
        %v939 = vsel %vm932, %v936, %v938
        %v940 = vrot.slane %v910, 1
        %v941 = vsel %vm932, %v938, %v940
        %v942 = vrot.slane %v912, 1
        %v943 = vsel %vm932, %v940, %v942
        %v944 = vrot.slane %v915, 1
        %v945 = vsel %vm932, %v942, %v944
        %v946 = vrot.slane %v917, 1
        %v947 = vsel %vm932, %v944, %v946
        %v948 = vrot.slane %v920, 1
        %v949 = vsel %vm932, %v946, %v948
        %v959 = vadd.f32 %v863, %v935
        %v960 = vadd.f32 %v865, %v937
        %v961 = vadd.f32 %v868, %v939
        %v962 = vadd.f32 %v870, %v941
        %v963 = vadd.f32 %v873, %v943
        %v964 = vadd.f32 %v875, %v945
        %v965 = vadd.f32 %v878, %v947
        %v966 = vadd.f32 %v880, %v949
        %v967 = vadd.f32 %v883, %v948
        %vm968 = vcmask 261120
        %v969 = vsel %vm968, %v959, 0.0
        %v970 = vsel %vm968, %v960, 0.0
        %v971 = vadd.f32 %v969, %v970
        %v972 = vsel %vm968, %v961, 0.0
        %v973 = vadd.f32 %v971, %v972
        %v974 = vsel %vm968, %v962, 0.0
        %v975 = vadd.f32 %v973, %v974
        %v976 = vsel %vm968, %v963, 0.0
        %v977 = vadd.f32 %v975, %v976
        %v978 = vsel %vm968, %v964, 0.0
        %v979 = vadd.f32 %v977, %v978
        %v980 = vsel %vm968, %v965, 0.0
        %v981 = vadd.f32 %v979, %v980
        %v982 = vsel %vm968, %v966, 0.0
        %v983 = vadd.f32 %v981, %v982
        %vm984 = vcmask 253952
        %v985 = vsel %vm984, %v967, 0.0
        %v986 = vadd.f32 %v983, %v985
        %v987 = vrot.slane %v986, 4
        %v988 = vadd.f32 %v986, %v987
        %v989 = vrot.slane %v988, 2
        %v990 = vadd.f32 %v988, %v989
        %v991 = vrot.slane %v990, 1
        %v992 = vadd.f32 %v990, %v991
        %v993 = vrcp.pop 65.0
        %v994 = vmul.f32 65.0, %v993
        %v995 = vsub.f32 1.0, %v994
        %v996 = vmul.f32 %v993, %v995
        %v997 = vadd.f32 %v993, %v996
        %vm998 = vweird.f32 %v993
        %v999 = vsel %vm998, %v993, %v997
        %v1000 = vmul.f32 %v992, %v999
        %v1001 = vsub.f32 %v959, %v1000
        %v1002 = vsub.f32 %v960, %v1000
        %v1003 = vsub.f32 %v961, %v1000
        %v1004 = vsub.f32 %v962, %v1000
        %v1005 = vsub.f32 %v963, %v1000
        %v1006 = vsub.f32 %v964, %v1000
        %v1007 = vsub.f32 %v965, %v1000
        %v1008 = vsub.f32 %v966, %v1000
        %v1009 = vsub.f32 %v967, %v1000
        %v1010 = vmul.f32 %v1001, %v1001
        %v1011 = vmul.f32 %v1002, %v1002
        %v1012 = vmul.f32 %v1003, %v1003
        %v1013 = vmul.f32 %v1004, %v1004
        %v1014 = vmul.f32 %v1005, %v1005
        %v1015 = vmul.f32 %v1006, %v1006
        %v1016 = vmul.f32 %v1007, %v1007
        %v1017 = vmul.f32 %v1008, %v1008
        %v1018 = vmul.f32 %v1009, %v1009
        %v1019 = vsel %vm968, %v1010, 0.0
        %v1020 = vsel %vm968, %v1011, 0.0
        %v1021 = vadd.f32 %v1019, %v1020
        %v1022 = vsel %vm968, %v1012, 0.0
        %v1023 = vadd.f32 %v1021, %v1022
        %v1024 = vsel %vm968, %v1013, 0.0
        %v1025 = vadd.f32 %v1023, %v1024
        %v1026 = vsel %vm968, %v1014, 0.0
        %v1027 = vadd.f32 %v1025, %v1026
        %v1028 = vsel %vm968, %v1015, 0.0
        %v1029 = vadd.f32 %v1027, %v1028
        %v1030 = vsel %vm968, %v1016, 0.0
        %v1031 = vadd.f32 %v1029, %v1030
        %v1032 = vsel %vm968, %v1017, 0.0
        %v1033 = vadd.f32 %v1031, %v1032
        %v1034 = vsel %vm984, %v1018, 0.0
        %v1035 = vadd.f32 %v1033, %v1034
        %v1036 = vrot.slane %v1035, 4
        %v1037 = vadd.f32 %v1035, %v1036
        %v1038 = vrot.slane %v1037, 2
        %v1039 = vadd.f32 %v1037, %v1038
        %v1040 = vrot.slane %v1039, 1
        %v1041 = vadd.f32 %v1039, %v1040
        %v1042 = vmul.f32 %v1041, %v999
        %v1043 = vadd.f32 %v1042, 1e-05
        %v1044 = vrsqrt.pop %v1043
        %v1045 = vmul.f32 %v1044, %v1043
        %v1046 = vmul.f32 %v1045, %v1044
        %v1047 = vmul.f32 0.5, %v1046
        %v1048 = vsub.f32 1.5, %v1047
        %v1049 = vmul.f32 %v1044, %v1048
        %vm1050 = vweird.f32 %v1043
        %vm1051 = vweird.f32 %v1044
        %vm1052 = vmor %vm1050, %vm1051
        %v1053 = vsel %vm1052, %v1044, %v1049
        %v1054 = vmul.f32 %v1001, %v1053
        %v1055 = vmul.f32 %v1002, %v1053
        %v1056 = vmul.f32 %v1003, %v1053
        %v1057 = vmul.f32 %v1004, %v1053
        %v1058 = vmul.f32 %v1005, %v1053
        %v1059 = vmul.f32 %v1006, %v1053
        %v1060 = vmul.f32 %v1007, %v1053
        %v1061 = vmul.f32 %v1008, %v1053
        %v1062 = vmul.f32 %v1009, %v1053
        %v1063 = vld [vmem:[%s3] sm:$0x1]
        %v1065 = vperm.slane %v1063, 0
        %v1067 = vmul.f32 %v1054, %v1065
        %v1068 = vmul.f32 %v1055, %v1065
        %v1069 = vmul.f32 %v1056, %v1065
        %v1070 = vmul.f32 %v1057, %v1065
        %v1071 = vmul.f32 %v1058, %v1065
        %v1072 = vmul.f32 %v1059, %v1065
        %v1073 = vmul.f32 %v1060, %v1065
        %v1074 = vmul.f32 %v1061, %v1065
        %v1075 = vmul.f32 %v1062, %v1065
        %v1076 = vld [vmem:[%s4] sm:$0x1]
        %v1078 = vperm.slane %v1076, 0
        %v1080 = vadd.f32 %v1067, %v1078
        %v1081 = vadd.f32 %v1068, %v1078
        %v1082 = vadd.f32 %v1069, %v1078
        %v1083 = vadd.f32 %v1070, %v1078
        %v1084 = vadd.f32 %v1071, %v1078
        %v1085 = vadd.f32 %v1072, %v1078
        %v1086 = vadd.f32 %v1073, %v1078
        %v1087 = vadd.f32 %v1074, %v1078
        %v1088 = vadd.f32 %v1075, %v1078
        %v1089 = vmul.f32 %v1080, 0.5
        %v1090 = vmul.f32 %v1081, 0.5
        %v1091 = vmul.f32 %v1082, 0.5
        %v1092 = vmul.f32 %v1083, 0.5
        %v1093 = vmul.f32 %v1084, 0.5
        %v1094 = vmul.f32 %v1085, 0.5
        %v1095 = vmul.f32 %v1086, 0.5
        %v1096 = vmul.f32 %v1087, 0.5
        %v1097 = vmul.f32 %v1088, 0.5
        %v1098 = vmul.f32 %v1080, 0.70710677
        %v1099 = vmul.f32 %v1081, 0.70710677
        %v1100 = vmul.f32 %v1082, 0.70710677
        %v1101 = vmul.f32 %v1083, 0.70710677
        %v1102 = vmul.f32 %v1084, 0.70710677
        %v1103 = vmul.f32 %v1085, 0.70710677
        %v1104 = vmul.f32 %v1086, 0.70710677
        %v1105 = vmul.f32 %v1087, 0.70710677
        %v1106 = vmul.f32 %v1088, 0.70710677
        %vm1107 = vcmp.lt.f32.partialorder %v1098, 0.0
        %vm1108 = vcmp.lt.f32.partialorder %v1099, 0.0
        %vm1109 = vcmp.lt.f32.partialorder %v1100, 0.0
        %vm1110 = vcmp.lt.f32.partialorder %v1101, 0.0
        %vm1111 = vcmp.lt.f32.partialorder %v1102, 0.0
        %vm1112 = vcmp.lt.f32.partialorder %v1103, 0.0
        %vm1113 = vcmp.lt.f32.partialorder %v1104, 0.0
        %vm1114 = vcmp.lt.f32.partialorder %v1105, 0.0
        %vm1115 = vcmp.lt.f32.partialorder %v1106, 0.0
        %v1116 = vsel %vm1107, -1.0, 1.0
        %v1117 = vsel %vm1108, -1.0, 1.0
        %v1118 = vsel %vm1109, -1.0, 1.0
        %v1119 = vsel %vm1110, -1.0, 1.0
        %v1120 = vsel %vm1111, -1.0, 1.0
        %v1121 = vsel %vm1112, -1.0, 1.0
        %v1122 = vsel %vm1113, -1.0, 1.0
        %v1123 = vsel %vm1114, -1.0, 1.0
        %v1124 = vsel %vm1115, -1.0, 1.0
        %v1125 = vand.u32 2147483647, %v1098
        %v1126 = vand.u32 2147483647, %v1099
        %v1127 = vand.u32 2147483647, %v1100
        %v1128 = vand.u32 2147483647, %v1101
        %v1129 = vand.u32 2147483647, %v1102
        %v1130 = vand.u32 2147483647, %v1103
        %v1131 = vand.u32 2147483647, %v1104
        %v1132 = vand.u32 2147483647, %v1105
        %v1133 = vand.u32 2147483647, %v1106
        %v1134 = vmul.f32 %v1125, 0.3275911
        %v1135 = vmul.f32 %v1126, 0.3275911
        %v1136 = vmul.f32 %v1127, 0.3275911
        %v1137 = vmul.f32 %v1128, 0.3275911
        %v1138 = vmul.f32 %v1129, 0.3275911
        %v1139 = vmul.f32 %v1130, 0.3275911
        %v1140 = vmul.f32 %v1131, 0.3275911
        %v1141 = vmul.f32 %v1132, 0.3275911
        %v1142 = vmul.f32 %v1133, 0.3275911
        %v1143 = vadd.f32 %v1134, 1.0
        %v1144 = vadd.f32 %v1135, 1.0
        %v1145 = vadd.f32 %v1136, 1.0
        %v1146 = vadd.f32 %v1137, 1.0
        %v1147 = vadd.f32 %v1138, 1.0
        %v1148 = vadd.f32 %v1139, 1.0
        %v1149 = vadd.f32 %v1140, 1.0
        %v1150 = vadd.f32 %v1141, 1.0
        %v1151 = vadd.f32 %v1142, 1.0
        %v1152 = vrcp.pop %v1143
        %v1153 = vmul.f32 %v1143, %v1152
        %v1154 = vsub.f32 1.0, %v1153
        %v1155 = vmul.f32 %v1152, %v1154
        %v1156 = vadd.f32 %v1152, %v1155
        %vm1157 = vweird.f32 %v1143
        %vm1158 = vweird.f32 %v1152
        %vm1159 = vmor %vm1157, %vm1158
        %v1160 = vsel %vm1159, %v1152, %v1156
        %v1161 = vand.u32 2147483647, %v1143
        %vm1162 = vcmp.eq.f32.partialorder %v1161, 8.507059e+37
        %v1163 = vand.u32 %v1143, 2147483648
        %v1164 = vor.u32 1.1754944e-38, %v1163
        %v1165 = vsel %vm1162, %v1164, %v1160
        %v1166 = vmul.f32 1.0, %v1165
        %v1167 = vrcp.pop %v1144
        %v1168 = vmul.f32 %v1144, %v1167
        %v1169 = vsub.f32 1.0, %v1168
        %v1170 = vmul.f32 %v1167, %v1169
        %v1171 = vadd.f32 %v1167, %v1170
        %vm1172 = vweird.f32 %v1144
        %vm1173 = vweird.f32 %v1167
        %vm1174 = vmor %vm1172, %vm1173
        %v1175 = vsel %vm1174, %v1167, %v1171
        %v1176 = vand.u32 2147483647, %v1144
        %vm1177 = vcmp.eq.f32.partialorder %v1176, 8.507059e+37
        %v1178 = vand.u32 %v1144, 2147483648
        %v1179 = vor.u32 1.1754944e-38, %v1178
        %v1180 = vsel %vm1177, %v1179, %v1175
        %v1181 = vmul.f32 1.0, %v1180
        %v1182 = vrcp.pop %v1145
        %v1183 = vmul.f32 %v1145, %v1182
        %v1184 = vsub.f32 1.0, %v1183
        %v1185 = vmul.f32 %v1182, %v1184
        %v1186 = vadd.f32 %v1182, %v1185
        %vm1187 = vweird.f32 %v1145
        %vm1188 = vweird.f32 %v1182
        %vm1189 = vmor %vm1187, %vm1188
        %v1190 = vsel %vm1189, %v1182, %v1186
        %v1191 = vand.u32 2147483647, %v1145
        %vm1192 = vcmp.eq.f32.partialorder %v1191, 8.507059e+37
        %v1193 = vand.u32 %v1145, 2147483648
        %v1194 = vor.u32 1.1754944e-38, %v1193
        %v1195 = vsel %vm1192, %v1194, %v1190
        %v1196 = vmul.f32 1.0, %v1195
        %v1197 = vrcp.pop %v1146
        %v1198 = vmul.f32 %v1146, %v1197
        %v1199 = vsub.f32 1.0, %v1198
        %v1200 = vmul.f32 %v1197, %v1199
        %v1201 = vadd.f32 %v1197, %v1200
        %vm1202 = vweird.f32 %v1146
        %vm1203 = vweird.f32 %v1197
        %vm1204 = vmor %vm1202, %vm1203
        %v1205 = vsel %vm1204, %v1197, %v1201
        %v1206 = vand.u32 2147483647, %v1146
        %vm1207 = vcmp.eq.f32.partialorder %v1206, 8.507059e+37
        %v1208 = vand.u32 %v1146, 2147483648
        %v1209 = vor.u32 1.1754944e-38, %v1208
        %v1210 = vsel %vm1207, %v1209, %v1205
        %v1211 = vmul.f32 1.0, %v1210
        %v1212 = vrcp.pop %v1147
        %v1213 = vmul.f32 %v1147, %v1212
        %v1214 = vsub.f32 1.0, %v1213
        %v1215 = vmul.f32 %v1212, %v1214
        %v1216 = vadd.f32 %v1212, %v1215
        %vm1217 = vweird.f32 %v1147
        %vm1218 = vweird.f32 %v1212
        %vm1219 = vmor %vm1217, %vm1218
        %v1220 = vsel %vm1219, %v1212, %v1216
        %v1221 = vand.u32 2147483647, %v1147
        %vm1222 = vcmp.eq.f32.partialorder %v1221, 8.507059e+37
        %v1223 = vand.u32 %v1147, 2147483648
        %v1224 = vor.u32 1.1754944e-38, %v1223
        %v1225 = vsel %vm1222, %v1224, %v1220
        %v1226 = vmul.f32 1.0, %v1225
        %v1227 = vrcp.pop %v1148
        %v1228 = vmul.f32 %v1148, %v1227
        %v1229 = vsub.f32 1.0, %v1228
        %v1230 = vmul.f32 %v1227, %v1229
        %v1231 = vadd.f32 %v1227, %v1230
        %vm1232 = vweird.f32 %v1148
        %vm1233 = vweird.f32 %v1227
        %vm1234 = vmor %vm1232, %vm1233
        %v1235 = vsel %vm1234, %v1227, %v1231
        %v1236 = vand.u32 2147483647, %v1148
        %vm1237 = vcmp.eq.f32.partialorder %v1236, 8.507059e+37
        %v1238 = vand.u32 %v1148, 2147483648
        %v1239 = vor.u32 1.1754944e-38, %v1238
        %v1240 = vsel %vm1237, %v1239, %v1235
        %v1241 = vmul.f32 1.0, %v1240
        %v1242 = vrcp.pop %v1149
        %v1243 = vmul.f32 %v1149, %v1242
        %v1244 = vsub.f32 1.0, %v1243
        %v1245 = vmul.f32 %v1242, %v1244
        %v1246 = vadd.f32 %v1242, %v1245
        %vm1247 = vweird.f32 %v1149
        %vm1248 = vweird.f32 %v1242
        %vm1249 = vmor %vm1247, %vm1248
        %v1250 = vsel %vm1249, %v1242, %v1246
        %v1251 = vand.u32 2147483647, %v1149
        %vm1252 = vcmp.eq.f32.partialorder %v1251, 8.507059e+37
        %v1253 = vand.u32 %v1149, 2147483648
        %v1254 = vor.u32 1.1754944e-38, %v1253
        %v1255 = vsel %vm1252, %v1254, %v1250
        %v1256 = vmul.f32 1.0, %v1255
        %v1257 = vrcp.pop %v1150
        %v1258 = vmul.f32 %v1150, %v1257
        %v1259 = vsub.f32 1.0, %v1258
        %v1260 = vmul.f32 %v1257, %v1259
        %v1261 = vadd.f32 %v1257, %v1260
        %vm1262 = vweird.f32 %v1150
        %vm1263 = vweird.f32 %v1257
        %vm1264 = vmor %vm1262, %vm1263
        %v1265 = vsel %vm1264, %v1257, %v1261
        %v1266 = vand.u32 2147483647, %v1150
        %vm1267 = vcmp.eq.f32.partialorder %v1266, 8.507059e+37
        %v1268 = vand.u32 %v1150, 2147483648
        %v1269 = vor.u32 1.1754944e-38, %v1268
        %v1270 = vsel %vm1267, %v1269, %v1265
        %v1271 = vmul.f32 1.0, %v1270
        %v1272 = vrcp.pop %v1151
        %v1273 = vmul.f32 %v1151, %v1272
        %v1274 = vsub.f32 1.0, %v1273
        %v1275 = vmul.f32 %v1272, %v1274
        %v1276 = vadd.f32 %v1272, %v1275
        %vm1277 = vweird.f32 %v1151
        %vm1278 = vweird.f32 %v1272
        %vm1279 = vmor %vm1277, %vm1278
        %v1280 = vsel %vm1279, %v1272, %v1276
        %v1281 = vand.u32 2147483647, %v1151
        %vm1282 = vcmp.eq.f32.partialorder %v1281, 8.507059e+37
        %v1283 = vand.u32 %v1151, 2147483648
        %v1284 = vor.u32 1.1754944e-38, %v1283
        %v1285 = vsel %vm1282, %v1284, %v1280
        %v1286 = vmul.f32 1.0, %v1285
        %v1287 = vmul.f32 %v1166, 1.0614054
        %v1288 = vmul.f32 %v1181, 1.0614054
        %v1289 = vmul.f32 %v1196, 1.0614054
        %v1290 = vmul.f32 %v1211, 1.0614054
        %v1291 = vmul.f32 %v1226, 1.0614054
        %v1292 = vmul.f32 %v1241, 1.0614054
        %v1293 = vmul.f32 %v1256, 1.0614054
        %v1294 = vmul.f32 %v1271, 1.0614054
        %v1295 = vmul.f32 %v1286, 1.0614054
        %v1296 = vadd.f32 %v1287, -1.4531521
        %v1297 = vadd.f32 %v1288, -1.4531521
        %v1298 = vadd.f32 %v1289, -1.4531521
        %v1299 = vadd.f32 %v1290, -1.4531521
        %v1300 = vadd.f32 %v1291, -1.4531521
        %v1301 = vadd.f32 %v1292, -1.4531521
        %v1302 = vadd.f32 %v1293, -1.4531521
        %v1303 = vadd.f32 %v1294, -1.4531521
        %v1304 = vadd.f32 %v1295, -1.4531521
        %v1305 = vmul.f32 %v1166, %v1296
        %v1306 = vmul.f32 %v1181, %v1297
        %v1307 = vmul.f32 %v1196, %v1298
        %v1308 = vmul.f32 %v1211, %v1299
        %v1309 = vmul.f32 %v1226, %v1300
        %v1310 = vmul.f32 %v1241, %v1301
        %v1311 = vmul.f32 %v1256, %v1302
        %v1312 = vmul.f32 %v1271, %v1303
        %v1313 = vmul.f32 %v1286, %v1304
        %v1314 = vadd.f32 %v1305, 1.4214138
        %v1315 = vadd.f32 %v1306, 1.4214138
        %v1316 = vadd.f32 %v1307, 1.4214138
        %v1317 = vadd.f32 %v1308, 1.4214138
        %v1318 = vadd.f32 %v1309, 1.4214138
        %v1319 = vadd.f32 %v1310, 1.4214138
        %v1320 = vadd.f32 %v1311, 1.4214138
        %v1321 = vadd.f32 %v1312, 1.4214138
        %v1322 = vadd.f32 %v1313, 1.4214138
        %v1323 = vmul.f32 %v1166, %v1314
        %v1324 = vmul.f32 %v1181, %v1315
        %v1325 = vmul.f32 %v1196, %v1316
        %v1326 = vmul.f32 %v1211, %v1317
        %v1327 = vmul.f32 %v1226, %v1318
        %v1328 = vmul.f32 %v1241, %v1319
        %v1329 = vmul.f32 %v1256, %v1320
        %v1330 = vmul.f32 %v1271, %v1321
        %v1331 = vmul.f32 %v1286, %v1322
        %v1332 = vadd.f32 %v1323, -0.28449672
        %v1333 = vadd.f32 %v1324, -0.28449672
        %v1334 = vadd.f32 %v1325, -0.28449672
        %v1335 = vadd.f32 %v1326, -0.28449672
        %v1336 = vadd.f32 %v1327, -0.28449672
        %v1337 = vadd.f32 %v1328, -0.28449672
        %v1338 = vadd.f32 %v1329, -0.28449672
        %v1339 = vadd.f32 %v1330, -0.28449672
        %v1340 = vadd.f32 %v1331, -0.28449672
        %v1341 = vmul.f32 %v1166, %v1332
        %v1342 = vmul.f32 %v1181, %v1333
        %v1343 = vmul.f32 %v1196, %v1334
        %v1344 = vmul.f32 %v1211, %v1335
        %v1345 = vmul.f32 %v1226, %v1336
        %v1346 = vmul.f32 %v1241, %v1337
        %v1347 = vmul.f32 %v1256, %v1338
        %v1348 = vmul.f32 %v1271, %v1339
        %v1349 = vmul.f32 %v1286, %v1340
        %v1350 = vadd.f32 %v1341, 0.2548296
        %v1351 = vadd.f32 %v1342, 0.2548296
        %v1352 = vadd.f32 %v1343, 0.2548296
        %v1353 = vadd.f32 %v1344, 0.2548296
        %v1354 = vadd.f32 %v1345, 0.2548296
        %v1355 = vadd.f32 %v1346, 0.2548296
        %v1356 = vadd.f32 %v1347, 0.2548296
        %v1357 = vadd.f32 %v1348, 0.2548296
        %v1358 = vadd.f32 %v1349, 0.2548296
        %v1359 = vmul.f32 %v1166, %v1350
        %v1360 = vmul.f32 %v1181, %v1351
        %v1361 = vmul.f32 %v1196, %v1352
        %v1362 = vmul.f32 %v1211, %v1353
        %v1363 = vmul.f32 %v1226, %v1354
        %v1364 = vmul.f32 %v1241, %v1355
        %v1365 = vmul.f32 %v1256, %v1356
        %v1366 = vmul.f32 %v1271, %v1357
        %v1367 = vmul.f32 %v1286, %v1358
        %v1368 = vsub.f32 0.0, %v1125
        %v1369 = vsub.f32 0.0, %v1126
        %v1370 = vsub.f32 0.0, %v1127
        %v1371 = vsub.f32 0.0, %v1128
        %v1372 = vsub.f32 0.0, %v1129
        %v1373 = vsub.f32 0.0, %v1130
        %v1374 = vsub.f32 0.0, %v1131
        %v1375 = vsub.f32 0.0, %v1132
        %v1376 = vsub.f32 0.0, %v1133
        %v1377 = vmul.f32 %v1368, %v1125
        %v1378 = vmul.f32 %v1369, %v1126
        %v1379 = vmul.f32 %v1370, %v1127
        %v1380 = vmul.f32 %v1371, %v1128
        %v1381 = vmul.f32 %v1372, %v1129
        %v1382 = vmul.f32 %v1373, %v1130
        %v1383 = vmul.f32 %v1374, %v1131
        %v1384 = vmul.f32 %v1375, %v1132
        %v1385 = vmul.f32 %v1376, %v1133
        %v1386 = vmul.f32 %v1377, 1.442695
        %v1387 = vpow.pop %v1386
        %v1388 = vmul.f32 %v1378, 1.442695
        %v1389 = vpow.pop %v1388
        %v1390 = vmul.f32 %v1379, 1.442695
        %v1391 = vpow.pop %v1390
        %v1392 = vmul.f32 %v1380, 1.442695
        %v1393 = vpow.pop %v1392
        %v1394 = vmul.f32 %v1381, 1.442695
        %v1395 = vpow.pop %v1394
        %v1396 = vmul.f32 %v1382, 1.442695
        %v1397 = vpow.pop %v1396
        %v1398 = vmul.f32 %v1383, 1.442695
        %v1399 = vpow.pop %v1398
        %v1400 = vmul.f32 %v1384, 1.442695
        %v1401 = vpow.pop %v1400
        %v1402 = vmul.f32 %v1385, 1.442695
        %v1403 = vpow.pop %v1402
        %v1404 = vmul.f32 %v1359, %v1387
        %v1405 = vmul.f32 %v1360, %v1389
        %v1406 = vmul.f32 %v1361, %v1391
        %v1407 = vmul.f32 %v1362, %v1393
        %v1408 = vmul.f32 %v1363, %v1395
        %v1409 = vmul.f32 %v1364, %v1397
        %v1410 = vmul.f32 %v1365, %v1399
        %v1411 = vmul.f32 %v1366, %v1401
        %v1412 = vmul.f32 %v1367, %v1403
        %v1413 = vsub.f32 1.0, %v1404
        %v1414 = vsub.f32 1.0, %v1405
        %v1415 = vsub.f32 1.0, %v1406
        %v1416 = vsub.f32 1.0, %v1407
        %v1417 = vsub.f32 1.0, %v1408
        %v1418 = vsub.f32 1.0, %v1409
        %v1419 = vsub.f32 1.0, %v1410
        %v1420 = vsub.f32 1.0, %v1411
        %v1421 = vsub.f32 1.0, %v1412
        %v1422 = vmul.f32 %v1116, %v1413
        %v1423 = vmul.f32 %v1117, %v1414
        %v1424 = vmul.f32 %v1118, %v1415
        %v1425 = vmul.f32 %v1119, %v1416
        %v1426 = vmul.f32 %v1120, %v1417
        %v1427 = vmul.f32 %v1121, %v1418
        %v1428 = vmul.f32 %v1122, %v1419
        %v1429 = vmul.f32 %v1123, %v1420
        %v1430 = vmul.f32 %v1124, %v1421
        %v1431 = vadd.f32 %v1422, 1.0
        %v1432 = vadd.f32 %v1423, 1.0
        %v1433 = vadd.f32 %v1424, 1.0
        %v1434 = vadd.f32 %v1425, 1.0
        %v1435 = vadd.f32 %v1426, 1.0
        %v1436 = vadd.f32 %v1427, 1.0
        %v1437 = vadd.f32 %v1428, 1.0
        %v1438 = vadd.f32 %v1429, 1.0
        %v1439 = vadd.f32 %v1430, 1.0
        %v1440 = vmul.f32 %v1089, %v1431
        %v1441 = vmul.f32 %v1090, %v1432
        %v1442 = vmul.f32 %v1091, %v1433
        %v1443 = vmul.f32 %v1092, %v1434
        %v1444 = vmul.f32 %v1093, %v1435
        %v1445 = vmul.f32 %v1094, %v1436
        %v1446 = vmul.f32 %v1095, %v1437
        %v1447 = vmul.f32 %v1096, %v1438
        %v1448 = vmul.f32 %v1097, %v1439
        %v1449 = vld [vmem:[#allocation6] sm:$0xff]
        %v1450 = vld [vmem:[#allocation6 + $0x8] sm:$0xff]
        %v1451 = vld [vmem:[#allocation6 + $0x10] sm:$0xff]
        %v1452 = vld [vmem:[#allocation6 + $0x18] sm:$0xff]
        %vm1453 = vcmask 531456
        %v1455 = vsel %vm1453, %v1449, 0
        %v1458 = vsel %vm1453, %v1450, 0
        %v1461 = vsel %vm1453, %v1451, 0
        %v1464 = vsel %vm1453, %v1452, 0
        %vm1466 = vcmask 1040384
        %v1468 = vsel %vm1466, %v1448, 0
        %1470 = vmatpush.msra.mxu0 0.0
        %1471 = vmatpush.msra.mxu0 0.0
        %1472 = vmatpush.msra.mxu0 0.0
        %1473 = vmatpush.msra.mxu0 0.0
        %1474 = vmatpush.msra.mxu0 0.0
        %1475 = vmatpush.msra.mxu0 0.0
        %1476 = vmatpush.msra.mxu0 0.0
        %1477 = vmatpush.msra.mxu0 %v1468
        %1478 = vmatpush.msra.mxu0 %v1447
        %1479 = vmatpush.msra.mxu0 %v1446
        %1480 = vmatpush.msra.mxu0 %v1445
        %1481 = vmatpush.msra.mxu0 %v1444
        %1482 = vmatpush.msra.mxu0 %v1443
        %1483 = vmatpush.msra.mxu0 %v1442
        %1484 = vmatpush.msra.mxu0 %v1441
        %1485 = vmatpush.msra.mxu0 %v1440
        %1486 = vmatmul.f32.gmra.mxu0 %v1455
        %v1487 = vpop.f32.mrf.mxu0
        %v1488 = vadd.f32 0.0, %v1487
        %1489 = vmatmul.f32.gmra.mxu0 %v1458
        %v1490 = vpop.f32.mrf.mxu0
        %v1491 = vadd.f32 0.0, %v1490
        %1492 = vmatmul.f32.gmra.mxu0 %v1461
        %v1493 = vpop.f32.mrf.mxu0
        %v1494 = vadd.f32 0.0, %v1493
        %1495 = vmatmul.f32.gmra.mxu0 %v1464
        %v1496 = vpop.f32.mrf.mxu0
        %v1497 = vadd.f32 0.0, %v1496
        %1498 = vdwg.mxu0
        %v1499 = vpack.c.bf16 %v1491, %v1488
        %v1500 = vpack.c.bf16 %v1497, %v1494
        %v1501 = vld [vmem:[#allocation7] sm:$0xf]
        %v1502 = vld [vmem:[#allocation7 + $0x4] sm:$0xf]
        %v1503 = vld [vmem:[#allocation7 + $0x8] sm:$0xf]
        %v1504 = vld [vmem:[#allocation7 + $0xc] sm:$0xf]
        %s1505 = scalar_lea.vmem [#allocation6], 32
        %v1506 = vld [vmem:[%s1505] sm:$0xff]
        %v1507 = vld [vmem:[%s1505 + $0x8] sm:$0xff]
        %v1508 = vld [vmem:[%s1505 + $0x10] sm:$0xff]
        %v1509 = vld [vmem:[%s1505 + $0x18] sm:$0xff]
        %v1511 = vsel %vm1453, %v1506, 0
        %v1514 = vsel %vm1453, %v1507, 0
        %v1517 = vsel %vm1453, %v1508, 0
        %v1520 = vsel %vm1453, %v1509, 0
        %1522 = vmatpush.msra.mxu0 0.0
        %1523 = vmatpush.msra.mxu0 0.0
        %1524 = vmatpush.msra.mxu0 0.0
        %1525 = vmatpush.msra.mxu0 0.0
        %1526 = vmatpush.msra.mxu0 0.0
        %1527 = vmatpush.msra.mxu0 0.0
        %1528 = vmatpush.msra.mxu0 0.0
        %1529 = vmatpush.msra.mxu0 %v1468
        %1530 = vmatpush.msra.mxu0 %v1447
        %1531 = vmatpush.msra.mxu0 %v1446
        %1532 = vmatpush.msra.mxu0 %v1445
        %1533 = vmatpush.msra.mxu0 %v1444
        %1534 = vmatpush.msra.mxu0 %v1443
        %1535 = vmatpush.msra.mxu0 %v1442
        %1536 = vmatpush.msra.mxu0 %v1441
        %1537 = vmatpush.msra.mxu0 %v1440
        %1538 = vmatmul.f32.gmra.mxu0 %v1511
        %v1539 = vpop.f32.mrf.mxu0
        %v1540 = vadd.f32 0.0, %v1539
        %1541 = vmatmul.f32.gmra.mxu0 %v1514
        %v1542 = vpop.f32.mrf.mxu0
        %v1543 = vadd.f32 0.0, %v1542
        %1544 = vmatmul.f32.gmra.mxu0 %v1517
        %v1545 = vpop.f32.mrf.mxu0
        %v1546 = vadd.f32 0.0, %v1545
        %1547 = vmatmul.f32.gmra.mxu0 %v1520
        %v1548 = vpop.f32.mrf.mxu0
        %v1549 = vadd.f32 0.0, %v1548
        %1550 = vdwg.mxu0
        %v1551 = vpack.c.bf16 %v1543, %v1540
        %v1552 = vpack.c.bf16 %v1549, %v1546
        %s1553 = scalar_lea.vmem [#allocation7], 16
        %v1554 = vld [vmem:[%s1553] sm:$0xf]
        %v1555 = vld [vmem:[%s1553 + $0x4] sm:$0xf]
        %v1556 = vld [vmem:[%s1553 + $0x8] sm:$0xf]
        %v1557 = vld [vmem:[%s1553 + $0xc] sm:$0xf]
        %v1562 = vunpack.c.l.b16 %v1554
        %v1563 = vunpack.c.l.b16 %v1555
        %v1564 = vunpack.c.l.b16 %v1556
        %v1565 = vunpack.c.l.b16 %v1557
        %v1566 = vpack.c.b16 %v1563, %v1562
        %v1567 = vpack.c.b16 %v1565, %v1564
        %v1571 = vsel %vm968, %v1551, 0
        %v1574 = vsel %vm968, %v1552, 0
        %1576 = vmatpush.bf16.msra.mxu0 0
        %1577 = vmatpush.bf16.msra.mxu0 0
        %1578 = vmatpush.bf16.msra.mxu0 0
        %1579 = vmatpush.bf16.msra.mxu0 0
        %1580 = vmatpush.bf16.msra.mxu0 0
        %1581 = vmatpush.bf16.msra.mxu0 0
        %1582 = vmatpush.bf16.msra.mxu0 %v1567
        %1583 = vmatpush.bf16.msra.mxu0 %v1566
        %1584 = vmatmul.bf16.gmra.mxu0 %v1571
        %v1585 = vpop.f32.mrf.mxu0
        %v1586 = vadd.f32 0.0, %v1585
        %v1587 = vpop.f32.mrf.mxu0
        %v1588 = vadd.f32 0.0, %v1587
        %1589 = vmatmul.bf16.gmra.mxu0 %v1574
        %v1590 = vpop.f32.mrf.mxu0
        %v1591 = vadd.f32 0.0, %v1590
        %v1592 = vpop.f32.mrf.mxu0
        %v1593 = vadd.f32 0.0, %v1592
        %1594 = vdwg.mxu0
        %v1599 = vunpack.c.l.b16 %v1501
        %v1600 = vunpack.c.l.b16 %v1502
        %v1601 = vunpack.c.l.b16 %v1503
        %v1602 = vunpack.c.l.b16 %v1504
        %v1603 = vpack.c.b16 %v1600, %v1599
        %v1604 = vpack.c.b16 %v1602, %v1601
        %v1608 = vsel %vm968, %v1499, 0
        %v1611 = vsel %vm968, %v1500, 0
        %1613 = vmatpush.bf16.msra.mxu0 0
        %1614 = vmatpush.bf16.msra.mxu0 0
        %1615 = vmatpush.bf16.msra.mxu0 0
        %1616 = vmatpush.bf16.msra.mxu0 0
        %1617 = vmatpush.bf16.msra.mxu0 0
        %1618 = vmatpush.bf16.msra.mxu0 0
        %1619 = vmatpush.bf16.msra.mxu0 %v1604
        %1620 = vmatpush.bf16.msra.mxu0 %v1603
        %1621 = vmatmul.bf16.gmra.mxu0 %v1608
        %v1622 = vpop.f32.mrf.mxu0
        %v1623 = vadd.f32 %v1586, %v1622
        %v1624 = vpop.f32.mrf.mxu0
        %v1625 = vadd.f32 %v1588, %v1624
        %1626 = vmatmul.bf16.gmra.mxu0 %v1611
        %v1627 = vpop.f32.mrf.mxu0
        %v1628 = vadd.f32 %v1591, %v1627
        %v1629 = vpop.f32.mrf.mxu0
        %v1630 = vadd.f32 %v1593, %v1629
        %1631 = vdwg.mxu0
        %s1632 = scalar_lea.vmem [#allocation6], 64
        %v1633 = vld [vmem:[%s1632] sm:$0xff]
        %v1634 = vld [vmem:[%s1632 + $0x8] sm:$0xff]
        %v1635 = vld [vmem:[%s1632 + $0x10] sm:$0xff]
        %v1636 = vld [vmem:[%s1632 + $0x18] sm:$0xff]
        %v1638 = vsel %vm1453, %v1633, 0
        %v1641 = vsel %vm1453, %v1634, 0
        %v1644 = vsel %vm1453, %v1635, 0
        %v1647 = vsel %vm1453, %v1636, 0
        %1649 = vmatpush.msra.mxu0 0.0
        %1650 = vmatpush.msra.mxu0 0.0
        %1651 = vmatpush.msra.mxu0 0.0
        %1652 = vmatpush.msra.mxu0 0.0
        %1653 = vmatpush.msra.mxu0 0.0
        %1654 = vmatpush.msra.mxu0 0.0
        %1655 = vmatpush.msra.mxu0 0.0
        %1656 = vmatpush.msra.mxu0 %v1468
        %1657 = vmatpush.msra.mxu0 %v1447
        %1658 = vmatpush.msra.mxu0 %v1446
        %1659 = vmatpush.msra.mxu0 %v1445
        %1660 = vmatpush.msra.mxu0 %v1444
        %1661 = vmatpush.msra.mxu0 %v1443
        %1662 = vmatpush.msra.mxu0 %v1442
        %1663 = vmatpush.msra.mxu0 %v1441
        %1664 = vmatpush.msra.mxu0 %v1440
        %1665 = vmatmul.f32.gmra.mxu0 %v1638
        %v1666 = vpop.f32.mrf.mxu0
        %v1667 = vadd.f32 0.0, %v1666
        %1668 = vmatmul.f32.gmra.mxu0 %v1641
        %v1669 = vpop.f32.mrf.mxu0
        %v1670 = vadd.f32 0.0, %v1669
        %1671 = vmatmul.f32.gmra.mxu0 %v1644
        %v1672 = vpop.f32.mrf.mxu0
        %v1673 = vadd.f32 0.0, %v1672
        %1674 = vmatmul.f32.gmra.mxu0 %v1647
        %v1675 = vpop.f32.mrf.mxu0
        %v1676 = vadd.f32 0.0, %v1675
        %1677 = vdwg.mxu0
        %v1678 = vpack.c.bf16 %v1670, %v1667
        %v1679 = vpack.c.bf16 %v1676, %v1673
        %s1680 = scalar_lea.vmem [#allocation7], 32
        %v1681 = vld [vmem:[%s1680] sm:$0xf]
        %v1682 = vld [vmem:[%s1680 + $0x4] sm:$0xf]
        %v1683 = vld [vmem:[%s1680 + $0x8] sm:$0xf]
        %v1684 = vld [vmem:[%s1680 + $0xc] sm:$0xf]
        %v1689 = vunpack.c.l.b16 %v1681
        %v1690 = vunpack.c.l.b16 %v1682
        %v1691 = vunpack.c.l.b16 %v1683
        %v1692 = vunpack.c.l.b16 %v1684
        %v1693 = vpack.c.b16 %v1690, %v1689
        %v1694 = vpack.c.b16 %v1692, %v1691
        %v1698 = vsel %vm968, %v1678, 0
        %v1701 = vsel %vm968, %v1679, 0
        %1703 = vmatpush.bf16.msra.mxu0 0
        %1704 = vmatpush.bf16.msra.mxu0 0
        %1705 = vmatpush.bf16.msra.mxu0 0
        %1706 = vmatpush.bf16.msra.mxu0 0
        %1707 = vmatpush.bf16.msra.mxu0 0
        %1708 = vmatpush.bf16.msra.mxu0 0
        %1709 = vmatpush.bf16.msra.mxu0 %v1694
        %1710 = vmatpush.bf16.msra.mxu0 %v1693
        %1711 = vmatmul.bf16.gmra.mxu0 %v1698
        %v1712 = vpop.f32.mrf.mxu0
        %v1713 = vadd.f32 0.0, %v1712
        %v1714 = vpop.f32.mrf.mxu0
        %v1715 = vadd.f32 0.0, %v1714
        %1716 = vmatmul.bf16.gmra.mxu0 %v1701
        %v1717 = vpop.f32.mrf.mxu0
        %v1718 = vadd.f32 0.0, %v1717
        %v1719 = vpop.f32.mrf.mxu0
        %v1720 = vadd.f32 0.0, %v1719
        %1721 = vdwg.mxu0
        %v1722 = vadd.f32 %v1623, %v1713
        %v1723 = vadd.f32 %v1625, %v1715
        %v1724 = vadd.f32 %v1628, %v1718
        %v1725 = vadd.f32 %v1630, %v1720
        %v1726 = vmul.f32 %v1722, 0.5
        %v1727 = vmul.f32 %v1723, 0.5
        %v1728 = vmul.f32 %v1724, 0.5
        %v1729 = vmul.f32 %v1725, 0.5
        %v1730 = vmul.f32 %v1722, 0.70710677
        %v1731 = vmul.f32 %v1723, 0.70710677
        %v1732 = vmul.f32 %v1724, 0.70710677
        %v1733 = vmul.f32 %v1725, 0.70710677
        %vm1734 = vcmp.lt.f32.partialorder %v1730, 0.0
        %vm1735 = vcmp.lt.f32.partialorder %v1731, 0.0
        %vm1736 = vcmp.lt.f32.partialorder %v1732, 0.0
        %vm1737 = vcmp.lt.f32.partialorder %v1733, 0.0
        %v1738 = vsel %vm1734, -1.0, 1.0
        %v1739 = vsel %vm1735, -1.0, 1.0
        %v1740 = vsel %vm1736, -1.0, 1.0
        %v1741 = vsel %vm1737, -1.0, 1.0
        %v1742 = vand.u32 2147483647, %v1730
        %v1743 = vand.u32 2147483647, %v1731
        %v1744 = vand.u32 2147483647, %v1732
        %v1745 = vand.u32 2147483647, %v1733
        %v1746 = vmul.f32 %v1742, 0.3275911
        %v1747 = vmul.f32 %v1743, 0.3275911
        %v1748 = vmul.f32 %v1744, 0.3275911
        %v1749 = vmul.f32 %v1745, 0.3275911
        %v1750 = vadd.f32 %v1746, 1.0
        %v1751 = vadd.f32 %v1747, 1.0
        %v1752 = vadd.f32 %v1748, 1.0
        %v1753 = vadd.f32 %v1749, 1.0
        %v1754 = vrcp.pop %v1750
        %v1755 = vmul.f32 %v1750, %v1754
        %v1756 = vsub.f32 1.0, %v1755
        %v1757 = vmul.f32 %v1754, %v1756
        %v1758 = vadd.f32 %v1754, %v1757
        %vm1759 = vweird.f32 %v1750
        %vm1760 = vweird.f32 %v1754
        %vm1761 = vmor %vm1759, %vm1760
        %v1762 = vsel %vm1761, %v1754, %v1758
        %v1763 = vand.u32 2147483647, %v1750
        %vm1764 = vcmp.eq.f32.partialorder %v1763, 8.507059e+37
        %v1765 = vand.u32 %v1750, 2147483648
        %v1766 = vor.u32 1.1754944e-38, %v1765
        %v1767 = vsel %vm1764, %v1766, %v1762
        %v1768 = vmul.f32 1.0, %v1767
        %v1769 = vrcp.pop %v1751
        %v1770 = vmul.f32 %v1751, %v1769
        %v1771 = vsub.f32 1.0, %v1770
        %v1772 = vmul.f32 %v1769, %v1771
        %v1773 = vadd.f32 %v1769, %v1772
        %vm1774 = vweird.f32 %v1751
        %vm1775 = vweird.f32 %v1769
        %vm1776 = vmor %vm1774, %vm1775
        %v1777 = vsel %vm1776, %v1769, %v1773
        %v1778 = vand.u32 2147483647, %v1751
        %vm1779 = vcmp.eq.f32.partialorder %v1778, 8.507059e+37
        %v1780 = vand.u32 %v1751, 2147483648
        %v1781 = vor.u32 1.1754944e-38, %v1780
        %v1782 = vsel %vm1779, %v1781, %v1777
        %v1783 = vmul.f32 1.0, %v1782
        %v1784 = vrcp.pop %v1752
        %v1785 = vmul.f32 %v1752, %v1784
        %v1786 = vsub.f32 1.0, %v1785
        %v1787 = vmul.f32 %v1784, %v1786
        %v1788 = vadd.f32 %v1784, %v1787
        %vm1789 = vweird.f32 %v1752
        %vm1790 = vweird.f32 %v1784
        %vm1791 = vmor %vm1789, %vm1790
        %v1792 = vsel %vm1791, %v1784, %v1788
        %v1793 = vand.u32 2147483647, %v1752
        %vm1794 = vcmp.eq.f32.partialorder %v1793, 8.507059e+37
        %v1795 = vand.u32 %v1752, 2147483648
        %v1796 = vor.u32 1.1754944e-38, %v1795
        %v1797 = vsel %vm1794, %v1796, %v1792
        %v1798 = vmul.f32 1.0, %v1797
        %v1799 = vrcp.pop %v1753
        %v1800 = vmul.f32 %v1753, %v1799
        %v1801 = vsub.f32 1.0, %v1800
        %v1802 = vmul.f32 %v1799, %v1801
        %v1803 = vadd.f32 %v1799, %v1802
        %vm1804 = vweird.f32 %v1753
        %vm1805 = vweird.f32 %v1799
        %vm1806 = vmor %vm1804, %vm1805
        %v1807 = vsel %vm1806, %v1799, %v1803
        %v1808 = vand.u32 2147483647, %v1753
        %vm1809 = vcmp.eq.f32.partialorder %v1808, 8.507059e+37
        %v1810 = vand.u32 %v1753, 2147483648
        %v1811 = vor.u32 1.1754944e-38, %v1810
        %v1812 = vsel %vm1809, %v1811, %v1807
        %v1813 = vmul.f32 1.0, %v1812
        %v1814 = vmul.f32 %v1768, 1.0614054
        %v1815 = vmul.f32 %v1783, 1.0614054
        %v1816 = vmul.f32 %v1798, 1.0614054
        %v1817 = vmul.f32 %v1813, 1.0614054
        %v1818 = vadd.f32 %v1814, -1.4531521
        %v1819 = vadd.f32 %v1815, -1.4531521
        %v1820 = vadd.f32 %v1816, -1.4531521
        %v1821 = vadd.f32 %v1817, -1.4531521
        %v1822 = vmul.f32 %v1768, %v1818
        %v1823 = vmul.f32 %v1783, %v1819
        %v1824 = vmul.f32 %v1798, %v1820
        %v1825 = vmul.f32 %v1813, %v1821
        %v1826 = vadd.f32 %v1822, 1.4214138
        %v1827 = vadd.f32 %v1823, 1.4214138
        %v1828 = vadd.f32 %v1824, 1.4214138
        %v1829 = vadd.f32 %v1825, 1.4214138
        %v1830 = vmul.f32 %v1768, %v1826
        %v1831 = vmul.f32 %v1783, %v1827
        %v1832 = vmul.f32 %v1798, %v1828
        %v1833 = vmul.f32 %v1813, %v1829
        %v1834 = vadd.f32 %v1830, -0.28449672
        %v1835 = vadd.f32 %v1831, -0.28449672
        %v1836 = vadd.f32 %v1832, -0.28449672
        %v1837 = vadd.f32 %v1833, -0.28449672
        %v1838 = vmul.f32 %v1768, %v1834
        %v1839 = vmul.f32 %v1783, %v1835
        %v1840 = vmul.f32 %v1798, %v1836
        %v1841 = vmul.f32 %v1813, %v1837
        %v1842 = vadd.f32 %v1838, 0.2548296
        %v1843 = vadd.f32 %v1839, 0.2548296
        %v1844 = vadd.f32 %v1840, 0.2548296
        %v1845 = vadd.f32 %v1841, 0.2548296
        %v1846 = vmul.f32 %v1768, %v1842
        %v1847 = vmul.f32 %v1783, %v1843
        %v1848 = vmul.f32 %v1798, %v1844
        %v1849 = vmul.f32 %v1813, %v1845
        %v1850 = vsub.f32 0.0, %v1742
        %v1851 = vsub.f32 0.0, %v1743
        %v1852 = vsub.f32 0.0, %v1744
        %v1853 = vsub.f32 0.0, %v1745
        %v1854 = vmul.f32 %v1850, %v1742
        %v1855 = vmul.f32 %v1851, %v1743
        %v1856 = vmul.f32 %v1852, %v1744
        %v1857 = vmul.f32 %v1853, %v1745
        %v1858 = vmul.f32 %v1854, 1.442695
        %v1859 = vpow.pop %v1858
        %v1860 = vmul.f32 %v1855, 1.442695
        %v1861 = vpow.pop %v1860
        %v1862 = vmul.f32 %v1856, 1.442695
        %v1863 = vpow.pop %v1862
        %v1864 = vmul.f32 %v1857, 1.442695
        %v1865 = vpow.pop %v1864
        %v1866 = vmul.f32 %v1846, %v1859
        %v1867 = vmul.f32 %v1847, %v1861
        %v1868 = vmul.f32 %v1848, %v1863
        %v1869 = vmul.f32 %v1849, %v1865
        %v1870 = vsub.f32 1.0, %v1866
        %v1871 = vsub.f32 1.0, %v1867
        %v1872 = vsub.f32 1.0, %v1868
        %v1873 = vsub.f32 1.0, %v1869
        %v1874 = vmul.f32 %v1738, %v1870
        %v1875 = vmul.f32 %v1739, %v1871
        %v1876 = vmul.f32 %v1740, %v1872
        %v1877 = vmul.f32 %v1741, %v1873
        %v1878 = vadd.f32 %v1874, 1.0
        %v1879 = vadd.f32 %v1875, 1.0
        %v1880 = vadd.f32 %v1876, 1.0
        %v1881 = vadd.f32 %v1877, 1.0
        %v1882 = vmul.f32 %v1726, %v1878
        %v1883 = vmul.f32 %v1727, %v1879
        %v1884 = vmul.f32 %v1728, %v1880
        %v1885 = vmul.f32 %v1729, %v1881
        %v1886 = vld [vmem:[%s7] sm:$0x1]
        %v1887 = vld [vmem:[%s8] sm:$0x1]
        %v1888 = vsel %vm968, %v1882, 0.0
        %1889 = vadd.xlane.f32.xlu0 %v1888
        %v1890 = vpop.xlane.xlu0 %1889
        %v1891 = vsel %vm968, %v1883, 0.0
        %1892 = vadd.xlane.f32.xlu0 %v1891
        %v1893 = vpop.xlane.xlu0 %1892
        %v1894 = vsel %vm968, %v1884, 0.0
        %1895 = vadd.xlane.f32.xlu0 %v1894
        %v1896 = vpop.xlane.xlu0 %1895
        %v1897 = vsel %vm968, %v1885, 0.0
        %1898 = vadd.xlane.f32.xlu0 %v1897
        %v1899 = vpop.xlane.xlu0 %1898
        %v1900 = vrcp.pop 32.0
        %v1901 = vmul.f32 32.0, %v1900
        %v1902 = vsub.f32 1.0, %v1901
        %v1903 = vmul.f32 %v1900, %v1902
        %v1904 = vadd.f32 %v1900, %v1903
        %vm1905 = vweird.f32 %v1900
        %v1906 = vsel %vm1905, %v1900, %v1904
        %v1907 = vmul.f32 %v1890, %v1906
        %v1908 = vmul.f32 %v1893, %v1906
        %v1909 = vmul.f32 %v1896, %v1906
        %v1910 = vmul.f32 %v1899, %v1906
        %v1911 = vsub.f32 %v1882, %v1907
        %v1912 = vsub.f32 %v1883, %v1908
        %v1913 = vsub.f32 %v1884, %v1909
        %v1914 = vsub.f32 %v1885, %v1910
        %v1915 = vmul.f32 %v1911, %v1911
        %v1916 = vmul.f32 %v1912, %v1912
        %v1917 = vmul.f32 %v1913, %v1913
        %v1918 = vmul.f32 %v1914, %v1914
        %v1919 = vsel %vm968, %v1915, 0.0
        %1920 = vadd.xlane.f32.xlu0 %v1919
        %v1921 = vpop.xlane.xlu0 %1920
        %v1922 = vsel %vm968, %v1916, 0.0
        %1923 = vadd.xlane.f32.xlu0 %v1922
        %v1924 = vpop.xlane.xlu0 %1923
        %v1925 = vsel %vm968, %v1917, 0.0
        %1926 = vadd.xlane.f32.xlu0 %v1925
        %v1927 = vpop.xlane.xlu0 %1926
        %v1928 = vsel %vm968, %v1918, 0.0
        %1929 = vadd.xlane.f32.xlu0 %v1928
        %v1930 = vpop.xlane.xlu0 %1929
        %v1931 = vmul.f32 %v1921, %v1906
        %v1932 = vmul.f32 %v1924, %v1906
        %v1933 = vmul.f32 %v1927, %v1906
        %v1934 = vmul.f32 %v1930, %v1906
        %v1935 = vadd.f32 %v1931, 1e-05
        %v1936 = vadd.f32 %v1932, 1e-05
        %v1937 = vadd.f32 %v1933, 1e-05
        %v1938 = vadd.f32 %v1934, 1e-05
        %v1939 = vrsqrt.pop %v1935
        %v1940 = vmul.f32 %v1939, %v1935
        %v1941 = vmul.f32 %v1940, %v1939
        %v1942 = vmul.f32 0.5, %v1941
        %v1943 = vsub.f32 1.5, %v1942
        %v1944 = vmul.f32 %v1939, %v1943
        %vm1945 = vweird.f32 %v1935
        %vm1946 = vweird.f32 %v1939
        %vm1947 = vmor %vm1945, %vm1946
        %v1948 = vsel %vm1947, %v1939, %v1944
        %v1949 = vrsqrt.pop %v1936
        %v1950 = vmul.f32 %v1949, %v1936
        %v1951 = vmul.f32 %v1950, %v1949
        %v1952 = vmul.f32 0.5, %v1951
        %v1953 = vsub.f32 1.5, %v1952
        %v1954 = vmul.f32 %v1949, %v1953
        %vm1955 = vweird.f32 %v1936
        %vm1956 = vweird.f32 %v1949
        %vm1957 = vmor %vm1955, %vm1956
        %v1958 = vsel %vm1957, %v1949, %v1954
        %v1959 = vrsqrt.pop %v1937
        %v1960 = vmul.f32 %v1959, %v1937
        %v1961 = vmul.f32 %v1960, %v1959
        %v1962 = vmul.f32 0.5, %v1961
        %v1963 = vsub.f32 1.5, %v1962
        %v1964 = vmul.f32 %v1959, %v1963
        %vm1965 = vweird.f32 %v1937
        %vm1966 = vweird.f32 %v1959
        %vm1967 = vmor %vm1965, %vm1966
        %v1968 = vsel %vm1967, %v1959, %v1964
        %v1969 = vrsqrt.pop %v1938
        %v1970 = vmul.f32 %v1969, %v1938
        %v1971 = vmul.f32 %v1970, %v1969
        %v1972 = vmul.f32 0.5, %v1971
        %v1973 = vsub.f32 1.5, %v1972
        %v1974 = vmul.f32 %v1969, %v1973
        %vm1975 = vweird.f32 %v1938
        %vm1976 = vweird.f32 %v1969
        %vm1977 = vmor %vm1975, %vm1976
        %v1978 = vsel %vm1977, %v1969, %v1974
        %v1979 = vmul.f32 %v1911, %v1948
        %v1980 = vmul.f32 %v1912, %v1958
        %v1981 = vmul.f32 %v1913, %v1968
        %v1982 = vmul.f32 %v1914, %v1978
        %v1984 = vperm.slane %v1886, 0
        %v1986 = vmul.f32 %v1979, %v1984
        %v1987 = vmul.f32 %v1980, %v1984
        %v1988 = vmul.f32 %v1981, %v1984
        %v1989 = vmul.f32 %v1982, %v1984
        %v1991 = vperm.slane %v1887, 0
        %v1993 = vadd.f32 %v1986, %v1991
        %v1994 = vadd.f32 %v1987, %v1991
        %v1995 = vadd.f32 %v1988, %v1991
        %v1996 = vadd.f32 %v1989, %v1991
        %v1997 = vpack.c.bf16 %v1994, %v1993
        %v1998 = vpack.c.bf16 %v1996, %v1995
        %v1999 = vld [vmem:[#allocation9] sm:$0xf]
        %v2000 = vld [vmem:[#allocation9 + $0x4] sm:$0xf]
        %v2001 = vld [vmem:[#allocation9 + $0x8] sm:$0xf]
        %v2002 = vld [vmem:[#allocation9 + $0xc] sm:$0xf]
        %v2003 = vld [vmem:[#allocation10] sm:$0x1]
        %v2005 = vperm.slane %v2003, 0
        %v2011 = vunpack.c.l.b16 %v1999
        %v2012 = vunpack.c.l.b16 %v2000
        %v2013 = vunpack.c.l.b16 %v2001
        %v2014 = vunpack.c.l.b16 %v2002
        %v2015 = vpack.c.b16 %v2012, %v2011
        %v2016 = vpack.c.b16 %v2014, %v2013
        %v2020 = vsel %vm968, %v1997, 0
        %v2023 = vsel %vm968, %v1998, 0
        %2025 = vmatpush.bf16.msra.mxu0 0
        %2026 = vmatpush.bf16.msra.mxu0 0
        %2027 = vmatpush.bf16.msra.mxu0 0
        %2028 = vmatpush.bf16.msra.mxu0 0
        %2029 = vmatpush.bf16.msra.mxu0 0
        %2030 = vmatpush.bf16.msra.mxu0 0
        %2031 = vmatpush.bf16.msra.mxu0 %v2016
        %2032 = vmatpush.bf16.msra.mxu0 %v2015
        %2033 = vmatmul.bf16.gmra.mxu0 %v2020
        %v2034 = vpop.f32.mrf.mxu0
        %v2035 = vadd.f32 %v2005, %v2034
        %v2036 = vpop.f32.mrf.mxu0
        %v2037 = vadd.f32 %v2005, %v2036
        %2038 = vmatmul.bf16.gmra.mxu0 %v2023
        %v2039 = vpop.f32.mrf.mxu0
        %v2040 = vadd.f32 %v2005, %v2039
        %v2041 = vpop.f32.mrf.mxu0
        %v2042 = vadd.f32 %v2005, %v2041
        %2043 = vdwg.mxu0
        %v2044 = vld [vmem:[%s11] sm:$0xff]
        %v2045 = vld [vmem:[%s11 + $0x8] sm:$0xff]
        %v2046 = vld [vmem:[%s11 + $0x10] sm:$0xff]
        %v2047 = vld [vmem:[%s11 + $0x18] sm:$0xff]
        %v2049 = vsel %vm968, %v2044, 0
        %v2052 = vsel %vm968, %v2045, 0
        %v2055 = vsel %vm968, %v2046, 0
        %v2058 = vsel %vm968, %v2047, 0
        %2060 = vmatpush.msra.mxu0 0.0
        %2061 = vmatpush.msra.mxu0 0.0
        %2062 = vmatpush.msra.mxu0 0.0
        %2063 = vmatpush.msra.mxu0 0.0
        %2064 = vmatpush.msra.mxu0 0.0
        %2065 = vmatpush.msra.mxu0 0.0
        %2066 = vmatpush.msra.mxu0 0.0
        %2067 = vmatpush.msra.mxu0 0.0
        %2068 = vmatpush.msra.mxu0 0.0
        %2069 = vmatpush.msra.mxu0 0.0
        %2070 = vmatpush.msra.mxu0 0.0
        %2071 = vmatpush.msra.mxu0 0.0
        %2072 = vmatpush.msra.mxu0 %v2042
        %2073 = vmatpush.msra.mxu0 %v2040
        %2074 = vmatpush.msra.mxu0 %v2037
        %2075 = vmatpush.msra.mxu0 %v2035
        %2076 = vmatmul.f32.gmra.mxu0 %v2049
        %v2077 = vpop.f32.mrf.mxu0
        %v2078 = vadd.f32 0.0, %v2077
        %2079 = vmatmul.f32.gmra.mxu0 %v2052
        %v2080 = vpop.f32.mrf.mxu0
        %v2081 = vadd.f32 0.0, %v2080
        %2082 = vmatmul.f32.gmra.mxu0 %v2055
        %v2083 = vpop.f32.mrf.mxu0
        %v2084 = vadd.f32 0.0, %v2083
        %2085 = vmatmul.f32.gmra.mxu0 %v2058
        %v2086 = vpop.f32.mrf.mxu0
        %v2087 = vadd.f32 0.0, %v2086
        %2088 = vdwg.mxu0
        %v2089 = vpack.c.bf16 %v2081, %v2078
        %v2090 = vpack.c.bf16 %v2087, %v2084
        %v2091 = vld [vmem:[#allocation12] sm:$0xf]
        %v2092 = vld [vmem:[#allocation12 + $0x4] sm:$0xf]
        %v2093 = vld [vmem:[#allocation12 + $0x8] sm:$0xf]
        %v2094 = vld [vmem:[#allocation12 + $0xc] sm:$0xf]
        %s2095 = scalar_lea.vmem %s11, 32
        %v2096 = vld [vmem:[%s2095] sm:$0xff]
        %v2097 = vld [vmem:[%s2095 + $0x8] sm:$0xff]
        %v2098 = vld [vmem:[%s2095 + $0x10] sm:$0xff]
        %v2099 = vld [vmem:[%s2095 + $0x18] sm:$0xff]
        %v2101 = vsel %vm968, %v2096, 0
        %v2104 = vsel %vm968, %v2097, 0
        %v2107 = vsel %vm968, %v2098, 0
        %v2110 = vsel %vm968, %v2099, 0
        %2112 = vmatpush.msra.mxu0 0.0
        %2113 = vmatpush.msra.mxu0 0.0
        %2114 = vmatpush.msra.mxu0 0.0
        %2115 = vmatpush.msra.mxu0 0.0
        %2116 = vmatpush.msra.mxu0 0.0
        %2117 = vmatpush.msra.mxu0 0.0
        %2118 = vmatpush.msra.mxu0 0.0
        %2119 = vmatpush.msra.mxu0 0.0
        %2120 = vmatpush.msra.mxu0 0.0
        %2121 = vmatpush.msra.mxu0 0.0
        %2122 = vmatpush.msra.mxu0 0.0
        %2123 = vmatpush.msra.mxu0 0.0
        %2124 = vmatpush.msra.mxu0 %v2042
        %2125 = vmatpush.msra.mxu0 %v2040
        %2126 = vmatpush.msra.mxu0 %v2037
        %2127 = vmatpush.msra.mxu0 %v2035
        %2128 = vmatmul.f32.gmra.mxu0 %v2101
        %v2129 = vpop.f32.mrf.mxu0
        %v2130 = vadd.f32 0.0, %v2129
        %2131 = vmatmul.f32.gmra.mxu0 %v2104
        %v2132 = vpop.f32.mrf.mxu0
        %v2133 = vadd.f32 0.0, %v2132
        %2134 = vmatmul.f32.gmra.mxu0 %v2107
        %v2135 = vpop.f32.mrf.mxu0
        %v2136 = vadd.f32 0.0, %v2135
        %2137 = vmatmul.f32.gmra.mxu0 %v2110
        %v2138 = vpop.f32.mrf.mxu0
        %v2139 = vadd.f32 0.0, %v2138
        %2140 = vdwg.mxu0
        %v2141 = vpack.c.bf16 %v2133, %v2130
        %v2142 = vpack.c.bf16 %v2139, %v2136
        %s2143 = scalar_lea.vmem [#allocation12], 16
        %v2144 = vld [vmem:[%s2143] sm:$0xf]
        %v2145 = vld [vmem:[%s2143 + $0x4] sm:$0xf]
        %v2146 = vld [vmem:[%s2143 + $0x8] sm:$0xf]
        %v2147 = vld [vmem:[%s2143 + $0xc] sm:$0xf]
        %v2152 = vunpack.c.l.b16 %v2144
        %v2153 = vunpack.c.l.b16 %v2145
        %v2154 = vunpack.c.l.b16 %v2146
        %v2155 = vunpack.c.l.b16 %v2147
        %v2156 = vpack.c.b16 %v2153, %v2152
        %v2157 = vpack.c.b16 %v2155, %v2154
        %v2161 = vsel %vm968, %v2141, 0
        %v2164 = vsel %vm968, %v2142, 0
        %2166 = vmatpush.bf16.msra.mxu0 0
        %2167 = vmatpush.bf16.msra.mxu0 0
        %2168 = vmatpush.bf16.msra.mxu0 0
        %2169 = vmatpush.bf16.msra.mxu0 0
        %2170 = vmatpush.bf16.msra.mxu0 0
        %2171 = vmatpush.bf16.msra.mxu0 0
        %2172 = vmatpush.bf16.msra.mxu0 %v2157
        %2173 = vmatpush.bf16.msra.mxu0 %v2156
        %2174 = vmatmul.bf16.gmra.mxu0 %v2161
        %v2175 = vpop.f32.mrf.mxu0
        %v2176 = vadd.f32 0.0, %v2175
        %v2177 = vpop.f32.mrf.mxu0
        %v2178 = vadd.f32 0.0, %v2177
        %2179 = vmatmul.bf16.gmra.mxu0 %v2164
        %v2180 = vpop.f32.mrf.mxu0
        %v2181 = vadd.f32 0.0, %v2180
        %v2182 = vpop.f32.mrf.mxu0
        %v2183 = vadd.f32 0.0, %v2182
        %2184 = vdwg.mxu0
        %v2189 = vunpack.c.l.b16 %v2091
        %v2190 = vunpack.c.l.b16 %v2092
        %v2191 = vunpack.c.l.b16 %v2093
        %v2192 = vunpack.c.l.b16 %v2094
        %v2193 = vpack.c.b16 %v2190, %v2189
        %v2194 = vpack.c.b16 %v2192, %v2191
        %v2198 = vsel %vm968, %v2089, 0
        %v2201 = vsel %vm968, %v2090, 0
        %2203 = vmatpush.bf16.msra.mxu0 0
        %2204 = vmatpush.bf16.msra.mxu0 0
        %2205 = vmatpush.bf16.msra.mxu0 0
        %2206 = vmatpush.bf16.msra.mxu0 0
        %2207 = vmatpush.bf16.msra.mxu0 0
        %2208 = vmatpush.bf16.msra.mxu0 0
        %2209 = vmatpush.bf16.msra.mxu0 %v2194
        %2210 = vmatpush.bf16.msra.mxu0 %v2193
        %2211 = vmatmul.bf16.gmra.mxu0 %v2198
        %v2212 = vpop.f32.mrf.mxu0
        %v2213 = vadd.f32 %v2176, %v2212
        %v2214 = vpop.f32.mrf.mxu0
        %v2215 = vadd.f32 %v2178, %v2214
        %2216 = vmatmul.bf16.gmra.mxu0 %v2201
        %v2217 = vpop.f32.mrf.mxu0
        %v2218 = vadd.f32 %v2181, %v2217
        %v2219 = vpop.f32.mrf.mxu0
        %v2220 = vadd.f32 %v2183, %v2219
        %2221 = vdwg.mxu0
        %s2222 = scalar_lea.vmem %s11, 64
        %v2223 = vld [vmem:[%s2222] sm:$0xff]
        %v2224 = vld [vmem:[%s2222 + $0x8] sm:$0xff]
        %v2225 = vld [vmem:[%s2222 + $0x10] sm:$0xff]
        %v2226 = vld [vmem:[%s2222 + $0x18] sm:$0xff]
        %v2228 = vsel %vm968, %v2223, 0
        %v2231 = vsel %vm968, %v2224, 0
        %v2234 = vsel %vm968, %v2225, 0
        %v2237 = vsel %vm968, %v2226, 0
        %2239 = vmatpush.msra.mxu0 0.0
        %2240 = vmatpush.msra.mxu0 0.0
        %2241 = vmatpush.msra.mxu0 0.0
        %2242 = vmatpush.msra.mxu0 0.0
        %2243 = vmatpush.msra.mxu0 0.0
        %2244 = vmatpush.msra.mxu0 0.0
        %2245 = vmatpush.msra.mxu0 0.0
        %2246 = vmatpush.msra.mxu0 0.0
        %2247 = vmatpush.msra.mxu0 0.0
        %2248 = vmatpush.msra.mxu0 0.0
        %2249 = vmatpush.msra.mxu0 0.0
        %2250 = vmatpush.msra.mxu0 0.0
        %2251 = vmatpush.msra.mxu0 %v2042
        %2252 = vmatpush.msra.mxu0 %v2040
        %2253 = vmatpush.msra.mxu0 %v2037
        %2254 = vmatpush.msra.mxu0 %v2035
        %2255 = vmatmul.f32.gmra.mxu0 %v2228
        %v2256 = vpop.f32.mrf.mxu0
        %v2257 = vadd.f32 0.0, %v2256
        %2258 = vmatmul.f32.gmra.mxu0 %v2231
        %v2259 = vpop.f32.mrf.mxu0
        %v2260 = vadd.f32 0.0, %v2259
        %2261 = vmatmul.f32.gmra.mxu0 %v2234
        %v2262 = vpop.f32.mrf.mxu0
        %v2263 = vadd.f32 0.0, %v2262
        %2264 = vmatmul.f32.gmra.mxu0 %v2237
        %v2265 = vpop.f32.mrf.mxu0
        %v2266 = vadd.f32 0.0, %v2265
        %2267 = vdwg.mxu0
        %v2268 = vpack.c.bf16 %v2260, %v2257
        %v2269 = vpack.c.bf16 %v2266, %v2263
        %s2270 = scalar_lea.vmem [#allocation12], 32
        %v2271 = vld [vmem:[%s2270] sm:$0xf]
        %v2272 = vld [vmem:[%s2270 + $0x4] sm:$0xf]
        %v2273 = vld [vmem:[%s2270 + $0x8] sm:$0xf]
        %v2274 = vld [vmem:[%s2270 + $0xc] sm:$0xf]
        %v2279 = vunpack.c.l.b16 %v2271
        %v2280 = vunpack.c.l.b16 %v2272
        %v2281 = vunpack.c.l.b16 %v2273
        %v2282 = vunpack.c.l.b16 %v2274
        %v2283 = vpack.c.b16 %v2280, %v2279
        %v2284 = vpack.c.b16 %v2282, %v2281
        %v2288 = vsel %vm968, %v2268, 0
        %v2291 = vsel %vm968, %v2269, 0
        %2293 = vmatpush.bf16.msra.mxu0 0
        %2294 = vmatpush.bf16.msra.mxu0 0
        %2295 = vmatpush.bf16.msra.mxu0 0
        %2296 = vmatpush.bf16.msra.mxu0 0
        %2297 = vmatpush.bf16.msra.mxu0 0
        %2298 = vmatpush.bf16.msra.mxu0 0
        %2299 = vmatpush.bf16.msra.mxu0 %v2284
        %2300 = vmatpush.bf16.msra.mxu0 %v2283
        %2301 = vmatmul.bf16.gmra.mxu0 %v2288
        %v2302 = vpop.f32.mrf.mxu0
        %v2303 = vadd.f32 0.0, %v2302
        %v2304 = vpop.f32.mrf.mxu0
        %v2305 = vadd.f32 0.0, %v2304
        %2306 = vmatmul.bf16.gmra.mxu0 %v2291
        %v2307 = vpop.f32.mrf.mxu0
        %v2308 = vadd.f32 0.0, %v2307
        %v2309 = vpop.f32.mrf.mxu0
        %v2310 = vadd.f32 0.0, %v2309
        %2311 = vdwg.mxu0
        %v2312 = vadd.f32 %v2213, %v2303
        %v2313 = vadd.f32 %v2215, %v2305
        %v2314 = vadd.f32 %v2218, %v2308
        %v2315 = vadd.f32 %v2220, %v2310
        %s2316 = scalar_lea.vmem %s11, 96
        %v2317 = vld [vmem:[%s2316] sm:$0xff]
        %v2318 = vld [vmem:[%s2316 + $0x8] sm:$0xff]
        %v2319 = vld [vmem:[%s2316 + $0x10] sm:$0xff]
        %v2320 = vld [vmem:[%s2316 + $0x18] sm:$0xff]
        %v2322 = vsel %vm968, %v2317, 0
        %v2325 = vsel %vm968, %v2318, 0
        %v2328 = vsel %vm968, %v2319, 0
        %v2331 = vsel %vm968, %v2320, 0
        %2333 = vmatpush.msra.mxu0 0.0
        %2334 = vmatpush.msra.mxu0 0.0
        %2335 = vmatpush.msra.mxu0 0.0
        %2336 = vmatpush.msra.mxu0 0.0
        %2337 = vmatpush.msra.mxu0 0.0
        %2338 = vmatpush.msra.mxu0 0.0
        %2339 = vmatpush.msra.mxu0 0.0
        %2340 = vmatpush.msra.mxu0 0.0
        %2341 = vmatpush.msra.mxu0 0.0
        %2342 = vmatpush.msra.mxu0 0.0
        %2343 = vmatpush.msra.mxu0 0.0
        %2344 = vmatpush.msra.mxu0 0.0
        %2345 = vmatpush.msra.mxu0 %v2042
        %2346 = vmatpush.msra.mxu0 %v2040
        %2347 = vmatpush.msra.mxu0 %v2037
        %2348 = vmatpush.msra.mxu0 %v2035
        %2349 = vmatmul.f32.gmra.mxu0 %v2322
        %v2350 = vpop.f32.mrf.mxu0
        %v2351 = vadd.f32 0.0, %v2350
        %2352 = vmatmul.f32.gmra.mxu0 %v2325
        %v2353 = vpop.f32.mrf.mxu0
        %v2354 = vadd.f32 0.0, %v2353
        %2355 = vmatmul.f32.gmra.mxu0 %v2328
        %v2356 = vpop.f32.mrf.mxu0
        %v2357 = vadd.f32 0.0, %v2356
        %2358 = vmatmul.f32.gmra.mxu0 %v2331
        %v2359 = vpop.f32.mrf.mxu0
        %v2360 = vadd.f32 0.0, %v2359
        %2361 = vdwg.mxu0
        %v2362 = vpack.c.bf16 %v2354, %v2351
        %v2363 = vpack.c.bf16 %v2360, %v2357
        %s2364 = scalar_lea.vmem [#allocation12], 48
        %v2365 = vld [vmem:[%s2364] sm:$0xf]
        %v2366 = vld [vmem:[%s2364 + $0x4] sm:$0xf]
        %v2367 = vld [vmem:[%s2364 + $0x8] sm:$0xf]
        %v2368 = vld [vmem:[%s2364 + $0xc] sm:$0xf]
        %v2373 = vunpack.c.l.b16 %v2365
        %v2374 = vunpack.c.l.b16 %v2366
        %v2375 = vunpack.c.l.b16 %v2367
        %v2376 = vunpack.c.l.b16 %v2368
        %v2377 = vpack.c.b16 %v2374, %v2373
        %v2378 = vpack.c.b16 %v2376, %v2375
        %v2382 = vsel %vm968, %v2362, 0
        %v2385 = vsel %vm968, %v2363, 0
        %2387 = vmatpush.bf16.msra.mxu0 0
        %2388 = vmatpush.bf16.msra.mxu0 0
        %2389 = vmatpush.bf16.msra.mxu0 0
        %2390 = vmatpush.bf16.msra.mxu0 0
        %2391 = vmatpush.bf16.msra.mxu0 0
        %2392 = vmatpush.bf16.msra.mxu0 0
        %2393 = vmatpush.bf16.msra.mxu0 %v2378
        %2394 = vmatpush.bf16.msra.mxu0 %v2377
        %2395 = vmatmul.bf16.gmra.mxu0 %v2382
        %v2396 = vpop.f32.mrf.mxu0
        %v2397 = vadd.f32 0.0, %v2396
        %v2398 = vpop.f32.mrf.mxu0
        %v2399 = vadd.f32 0.0, %v2398
        %2400 = vmatmul.bf16.gmra.mxu0 %v2385
        %v2401 = vpop.f32.mrf.mxu0
        %v2402 = vadd.f32 0.0, %v2401
        %v2403 = vpop.f32.mrf.mxu0
        %v2404 = vadd.f32 0.0, %v2403
        %2405 = vdwg.mxu0
        %v2406 = vadd.f32 %v2312, %v2397
        %v2407 = vadd.f32 %v2313, %v2399
        %v2408 = vadd.f32 %v2314, %v2402
        %v2409 = vadd.f32 %v2315, %v2404
        %s2410 = scalar_lea.vmem %s11, 128
        %v2411 = vld [vmem:[%s2410] sm:$0xff]
        %v2412 = vld [vmem:[%s2410 + $0x8] sm:$0xff]
        %v2413 = vld [vmem:[%s2410 + $0x10] sm:$0xff]
        %v2414 = vld [vmem:[%s2410 + $0x18] sm:$0xff]
        %v2416 = vsel %vm968, %v2411, 0
        %v2419 = vsel %vm968, %v2412, 0
        %v2422 = vsel %vm968, %v2413, 0
        %v2425 = vsel %vm968, %v2414, 0
        %2427 = vmatpush.msra.mxu0 0.0
        %2428 = vmatpush.msra.mxu0 0.0
        %2429 = vmatpush.msra.mxu0 0.0
        %2430 = vmatpush.msra.mxu0 0.0
        %2431 = vmatpush.msra.mxu0 0.0
        %2432 = vmatpush.msra.mxu0 0.0
        %2433 = vmatpush.msra.mxu0 0.0
        %2434 = vmatpush.msra.mxu0 0.0
        %2435 = vmatpush.msra.mxu0 0.0
        %2436 = vmatpush.msra.mxu0 0.0
        %2437 = vmatpush.msra.mxu0 0.0
        %2438 = vmatpush.msra.mxu0 0.0
        %2439 = vmatpush.msra.mxu0 %v2042
        %2440 = vmatpush.msra.mxu0 %v2040
        %2441 = vmatpush.msra.mxu0 %v2037
        %2442 = vmatpush.msra.mxu0 %v2035
        %2443 = vmatmul.f32.gmra.mxu0 %v2416
        %v2444 = vpop.f32.mrf.mxu0
        %v2445 = vadd.f32 0.0, %v2444
        %2446 = vmatmul.f32.gmra.mxu0 %v2419
        %v2447 = vpop.f32.mrf.mxu0
        %v2448 = vadd.f32 0.0, %v2447
        %2449 = vmatmul.f32.gmra.mxu0 %v2422
        %v2450 = vpop.f32.mrf.mxu0
        %v2451 = vadd.f32 0.0, %v2450
        %2452 = vmatmul.f32.gmra.mxu0 %v2425
        %v2453 = vpop.f32.mrf.mxu0
        %v2454 = vadd.f32 0.0, %v2453
        %2455 = vdwg.mxu0
        %v2456 = vpack.c.bf16 %v2448, %v2445
        %v2457 = vpack.c.bf16 %v2454, %v2451
        %s2458 = scalar_lea.vmem [#allocation12], 64
        %v2459 = vld [vmem:[%s2458] sm:$0xf]
        %v2460 = vld [vmem:[%s2458 + $0x4] sm:$0xf]
        %v2461 = vld [vmem:[%s2458 + $0x8] sm:$0xf]
        %v2462 = vld [vmem:[%s2458 + $0xc] sm:$0xf]
        %v2467 = vunpack.c.l.b16 %v2459
        %v2468 = vunpack.c.l.b16 %v2460
        %v2469 = vunpack.c.l.b16 %v2461
        %v2470 = vunpack.c.l.b16 %v2462
        %v2471 = vpack.c.b16 %v2468, %v2467
        %v2472 = vpack.c.b16 %v2470, %v2469
        %v2476 = vsel %vm968, %v2456, 0
        %v2479 = vsel %vm968, %v2457, 0
        %2481 = vmatpush.bf16.msra.mxu0 0
        %2482 = vmatpush.bf16.msra.mxu0 0
        %2483 = vmatpush.bf16.msra.mxu0 0
        %2484 = vmatpush.bf16.msra.mxu0 0
        %2485 = vmatpush.bf16.msra.mxu0 0
        %2486 = vmatpush.bf16.msra.mxu0 0
        %2487 = vmatpush.bf16.msra.mxu0 %v2472
        %2488 = vmatpush.bf16.msra.mxu0 %v2471
        %2489 = vmatmul.bf16.gmra.mxu0 %v2476
        %v2490 = vpop.f32.mrf.mxu0
        %v2491 = vadd.f32 0.0, %v2490
        %v2492 = vpop.f32.mrf.mxu0
        %v2493 = vadd.f32 0.0, %v2492
        %2494 = vmatmul.bf16.gmra.mxu0 %v2479
        %v2495 = vpop.f32.mrf.mxu0
        %v2496 = vadd.f32 0.0, %v2495
        %v2497 = vpop.f32.mrf.mxu0
        %v2498 = vadd.f32 0.0, %v2497
        %2499 = vdwg.mxu0
        %v2500 = vadd.f32 %v2406, %v2491
        %v2501 = vadd.f32 %v2407, %v2493
        %v2502 = vadd.f32 %v2408, %v2496
        %v2503 = vadd.f32 %v2409, %v2498
        %v2504 = vld [vmem:[#allocation13] sm:$0x1]
        %v2506 = vperm.slane %v2504, 0
        %v2508 = vadd.f32 %v2500, %v2506
        %v2509 = vadd.f32 %v2501, %v2506
        %v2510 = vadd.f32 %v2502, %v2506
        %v2511 = vadd.f32 %v2503, %v2506
        %v2512 = vmul.f32 %v2508, 0.5
        %v2513 = vmul.f32 %v2509, 0.5
        %v2514 = vmul.f32 %v2510, 0.5
        %v2515 = vmul.f32 %v2511, 0.5
        %v2516 = vmul.f32 %v2508, 0.70710677
        %v2517 = vmul.f32 %v2509, 0.70710677
        %v2518 = vmul.f32 %v2510, 0.70710677
        %v2519 = vmul.f32 %v2511, 0.70710677
        %vm2520 = vcmp.lt.f32.partialorder %v2516, 0.0
        %vm2521 = vcmp.lt.f32.partialorder %v2517, 0.0
        %vm2522 = vcmp.lt.f32.partialorder %v2518, 0.0
        %vm2523 = vcmp.lt.f32.partialorder %v2519, 0.0
        %v2524 = vsel %vm2520, -1.0, 1.0
        %v2525 = vsel %vm2521, -1.0, 1.0
        %v2526 = vsel %vm2522, -1.0, 1.0
        %v2527 = vsel %vm2523, -1.0, 1.0
        %v2528 = vand.u32 2147483647, %v2516
        %v2529 = vand.u32 2147483647, %v2517
        %v2530 = vand.u32 2147483647, %v2518
        %v2531 = vand.u32 2147483647, %v2519
        %v2532 = vmul.f32 %v2528, 0.3275911
        %v2533 = vmul.f32 %v2529, 0.3275911
        %v2534 = vmul.f32 %v2530, 0.3275911
        %v2535 = vmul.f32 %v2531, 0.3275911
        %v2536 = vadd.f32 %v2532, 1.0
        %v2537 = vadd.f32 %v2533, 1.0
        %v2538 = vadd.f32 %v2534, 1.0
        %v2539 = vadd.f32 %v2535, 1.0
        %v2540 = vrcp.pop %v2536
        %v2541 = vmul.f32 %v2536, %v2540
        %v2542 = vsub.f32 1.0, %v2541
        %v2543 = vmul.f32 %v2540, %v2542
        %v2544 = vadd.f32 %v2540, %v2543
        %vm2545 = vweird.f32 %v2536
        %vm2546 = vweird.f32 %v2540
        %vm2547 = vmor %vm2545, %vm2546
        %v2548 = vsel %vm2547, %v2540, %v2544
        %v2549 = vand.u32 2147483647, %v2536
        %vm2550 = vcmp.eq.f32.partialorder %v2549, 8.507059e+37
        %v2551 = vand.u32 %v2536, 2147483648
        %v2552 = vor.u32 1.1754944e-38, %v2551
        %v2553 = vsel %vm2550, %v2552, %v2548
        %v2554 = vmul.f32 1.0, %v2553
        %v2555 = vrcp.pop %v2537
        %v2556 = vmul.f32 %v2537, %v2555
        %v2557 = vsub.f32 1.0, %v2556
        %v2558 = vmul.f32 %v2555, %v2557
        %v2559 = vadd.f32 %v2555, %v2558
        %vm2560 = vweird.f32 %v2537
        %vm2561 = vweird.f32 %v2555
        %vm2562 = vmor %vm2560, %vm2561
        %v2563 = vsel %vm2562, %v2555, %v2559
        %v2564 = vand.u32 2147483647, %v2537
        %vm2565 = vcmp.eq.f32.partialorder %v2564, 8.507059e+37
        %v2566 = vand.u32 %v2537, 2147483648
        %v2567 = vor.u32 1.1754944e-38, %v2566
        %v2568 = vsel %vm2565, %v2567, %v2563
        %v2569 = vmul.f32 1.0, %v2568
        %v2570 = vrcp.pop %v2538
        %v2571 = vmul.f32 %v2538, %v2570
        %v2572 = vsub.f32 1.0, %v2571
        %v2573 = vmul.f32 %v2570, %v2572
        %v2574 = vadd.f32 %v2570, %v2573
        %vm2575 = vweird.f32 %v2538
        %vm2576 = vweird.f32 %v2570
        %vm2577 = vmor %vm2575, %vm2576
        %v2578 = vsel %vm2577, %v2570, %v2574
        %v2579 = vand.u32 2147483647, %v2538
        %vm2580 = vcmp.eq.f32.partialorder %v2579, 8.507059e+37
        %v2581 = vand.u32 %v2538, 2147483648
        %v2582 = vor.u32 1.1754944e-38, %v2581
        %v2583 = vsel %vm2580, %v2582, %v2578
        %v2584 = vmul.f32 1.0, %v2583
        %v2585 = vrcp.pop %v2539
        %v2586 = vmul.f32 %v2539, %v2585
        %v2587 = vsub.f32 1.0, %v2586
        %v2588 = vmul.f32 %v2585, %v2587
        %v2589 = vadd.f32 %v2585, %v2588
        %vm2590 = vweird.f32 %v2539
        %vm2591 = vweird.f32 %v2585
        %vm2592 = vmor %vm2590, %vm2591
        %v2593 = vsel %vm2592, %v2585, %v2589
        %v2594 = vand.u32 2147483647, %v2539
        %vm2595 = vcmp.eq.f32.partialorder %v2594, 8.507059e+37
        %v2596 = vand.u32 %v2539, 2147483648
        %v2597 = vor.u32 1.1754944e-38, %v2596
        %v2598 = vsel %vm2595, %v2597, %v2593
        %v2599 = vmul.f32 1.0, %v2598
        %v2600 = vmul.f32 %v2554, 1.0614054
        %v2601 = vmul.f32 %v2569, 1.0614054
        %v2602 = vmul.f32 %v2584, 1.0614054
        %v2603 = vmul.f32 %v2599, 1.0614054
        %v2604 = vadd.f32 %v2600, -1.4531521
        %v2605 = vadd.f32 %v2601, -1.4531521
        %v2606 = vadd.f32 %v2602, -1.4531521
        %v2607 = vadd.f32 %v2603, -1.4531521
        %v2608 = vmul.f32 %v2554, %v2604
        %v2609 = vmul.f32 %v2569, %v2605
        %v2610 = vmul.f32 %v2584, %v2606
        %v2611 = vmul.f32 %v2599, %v2607
        %v2612 = vadd.f32 %v2608, 1.4214138
        %v2613 = vadd.f32 %v2609, 1.4214138
        %v2614 = vadd.f32 %v2610, 1.4214138
        %v2615 = vadd.f32 %v2611, 1.4214138
        %v2616 = vmul.f32 %v2554, %v2612
        %v2617 = vmul.f32 %v2569, %v2613
        %v2618 = vmul.f32 %v2584, %v2614
        %v2619 = vmul.f32 %v2599, %v2615
        %v2620 = vadd.f32 %v2616, -0.28449672
        %v2621 = vadd.f32 %v2617, -0.28449672
        %v2622 = vadd.f32 %v2618, -0.28449672
        %v2623 = vadd.f32 %v2619, -0.28449672
        %v2624 = vmul.f32 %v2554, %v2620
        %v2625 = vmul.f32 %v2569, %v2621
        %v2626 = vmul.f32 %v2584, %v2622
        %v2627 = vmul.f32 %v2599, %v2623
        %v2628 = vadd.f32 %v2624, 0.2548296
        %v2629 = vadd.f32 %v2625, 0.2548296
        %v2630 = vadd.f32 %v2626, 0.2548296
        %v2631 = vadd.f32 %v2627, 0.2548296
        %v2632 = vmul.f32 %v2554, %v2628
        %v2633 = vmul.f32 %v2569, %v2629
        %v2634 = vmul.f32 %v2584, %v2630
        %v2635 = vmul.f32 %v2599, %v2631
        %v2636 = vsub.f32 0.0, %v2528
        %v2637 = vsub.f32 0.0, %v2529
        %v2638 = vsub.f32 0.0, %v2530
        %v2639 = vsub.f32 0.0, %v2531
        %v2640 = vmul.f32 %v2636, %v2528
        %v2641 = vmul.f32 %v2637, %v2529
        %v2642 = vmul.f32 %v2638, %v2530
        %v2643 = vmul.f32 %v2639, %v2531
        %v2644 = vmul.f32 %v2640, 1.442695
        %v2645 = vpow.pop %v2644
        %v2646 = vmul.f32 %v2641, 1.442695
        %v2647 = vpow.pop %v2646
        %v2648 = vmul.f32 %v2642, 1.442695
        %v2649 = vpow.pop %v2648
        %v2650 = vmul.f32 %v2643, 1.442695
        %v2651 = vpow.pop %v2650
        %v2652 = vmul.f32 %v2632, %v2645
        %v2653 = vmul.f32 %v2633, %v2647
        %v2654 = vmul.f32 %v2634, %v2649
        %v2655 = vmul.f32 %v2635, %v2651
        %v2656 = vsub.f32 1.0, %v2652
        %v2657 = vsub.f32 1.0, %v2653
        %v2658 = vsub.f32 1.0, %v2654
        %v2659 = vsub.f32 1.0, %v2655
        %v2660 = vmul.f32 %v2524, %v2656
        %v2661 = vmul.f32 %v2525, %v2657
        %v2662 = vmul.f32 %v2526, %v2658
        %v2663 = vmul.f32 %v2527, %v2659
        %v2664 = vadd.f32 %v2660, 1.0
        %v2665 = vadd.f32 %v2661, 1.0
        %v2666 = vadd.f32 %v2662, 1.0
        %v2667 = vadd.f32 %v2663, 1.0
        %v2668 = vmul.f32 %v2512, %v2664
        %v2669 = vmul.f32 %v2513, %v2665
        %v2670 = vmul.f32 %v2514, %v2666
        %v2671 = vmul.f32 %v2515, %v2667
        %v2672 = vadd.f32 %v2668, %v2035
        %v2673 = vadd.f32 %v2669, %v2037
        %v2674 = vadd.f32 %v2670, %v2040
        %v2675 = vadd.f32 %v2671, %v2042
        %v2676 = vld [vmem:[%s14] sm:$0x1]
        %v2677 = vld [vmem:[%s15] sm:$0x1]
        %v2678 = vsel %vm968, %v2672, 0.0
        %2679 = vadd.xlane.f32.xlu0 %v2678
        %v2680 = vpop.xlane.xlu0 %2679
        %v2681 = vsel %vm968, %v2673, 0.0
        %2682 = vadd.xlane.f32.xlu0 %v2681
        %v2683 = vpop.xlane.xlu0 %2682
        %v2684 = vsel %vm968, %v2674, 0.0
        %2685 = vadd.xlane.f32.xlu0 %v2684
        %v2686 = vpop.xlane.xlu0 %2685
        %v2687 = vsel %vm968, %v2675, 0.0
        %2688 = vadd.xlane.f32.xlu0 %v2687
        %v2689 = vpop.xlane.xlu0 %2688
        %v2690 = vmul.f32 %v2680, %v1906
        %v2691 = vmul.f32 %v2683, %v1906
        %v2692 = vmul.f32 %v2686, %v1906
        %v2693 = vmul.f32 %v2689, %v1906
        %v2694 = vsub.f32 %v2672, %v2690
        %v2695 = vsub.f32 %v2673, %v2691
        %v2696 = vsub.f32 %v2674, %v2692
        %v2697 = vsub.f32 %v2675, %v2693
        %v2698 = vmul.f32 %v2694, %v2694
        %v2699 = vmul.f32 %v2695, %v2695
        %v2700 = vmul.f32 %v2696, %v2696
        %v2701 = vmul.f32 %v2697, %v2697
        %v2702 = vsel %vm968, %v2698, 0.0
        %2703 = vadd.xlane.f32.xlu0 %v2702
        %v2704 = vpop.xlane.xlu0 %2703
        %v2705 = vsel %vm968, %v2699, 0.0
        %2706 = vadd.xlane.f32.xlu0 %v2705
        %v2707 = vpop.xlane.xlu0 %2706
        %v2708 = vsel %vm968, %v2700, 0.0
        %2709 = vadd.xlane.f32.xlu0 %v2708
        %v2710 = vpop.xlane.xlu0 %2709
        %v2711 = vsel %vm968, %v2701, 0.0
        %2712 = vadd.xlane.f32.xlu0 %v2711
        %v2713 = vpop.xlane.xlu0 %2712
        %v2714 = vmul.f32 %v2704, %v1906
        %v2715 = vmul.f32 %v2707, %v1906
        %v2716 = vmul.f32 %v2710, %v1906
        %v2717 = vmul.f32 %v2713, %v1906
        %v2718 = vadd.f32 %v2714, 1e-05
        %v2719 = vadd.f32 %v2715, 1e-05
        %v2720 = vadd.f32 %v2716, 1e-05
        %v2721 = vadd.f32 %v2717, 1e-05
        %v2722 = vrsqrt.pop %v2718
        %v2723 = vmul.f32 %v2722, %v2718
        %v2724 = vmul.f32 %v2723, %v2722
        %v2725 = vmul.f32 0.5, %v2724
        %v2726 = vsub.f32 1.5, %v2725
        %v2727 = vmul.f32 %v2722, %v2726
        %vm2728 = vweird.f32 %v2718
        %vm2729 = vweird.f32 %v2722
        %vm2730 = vmor %vm2728, %vm2729
        %v2731 = vsel %vm2730, %v2722, %v2727
        %v2732 = vrsqrt.pop %v2719
        %v2733 = vmul.f32 %v2732, %v2719
        %v2734 = vmul.f32 %v2733, %v2732
        %v2735 = vmul.f32 0.5, %v2734
        %v2736 = vsub.f32 1.5, %v2735
        %v2737 = vmul.f32 %v2732, %v2736
        %vm2738 = vweird.f32 %v2719
        %vm2739 = vweird.f32 %v2732
        %vm2740 = vmor %vm2738, %vm2739
        %v2741 = vsel %vm2740, %v2732, %v2737
        %v2742 = vrsqrt.pop %v2720
        %v2743 = vmul.f32 %v2742, %v2720
        %v2744 = vmul.f32 %v2743, %v2742
        %v2745 = vmul.f32 0.5, %v2744
        %v2746 = vsub.f32 1.5, %v2745
        %v2747 = vmul.f32 %v2742, %v2746
        %vm2748 = vweird.f32 %v2720
        %vm2749 = vweird.f32 %v2742
        %vm2750 = vmor %vm2748, %vm2749
        %v2751 = vsel %vm2750, %v2742, %v2747
        %v2752 = vrsqrt.pop %v2721
        %v2753 = vmul.f32 %v2752, %v2721
        %v2754 = vmul.f32 %v2753, %v2752
        %v2755 = vmul.f32 0.5, %v2754
        %v2756 = vsub.f32 1.5, %v2755
        %v2757 = vmul.f32 %v2752, %v2756
        %vm2758 = vweird.f32 %v2721
        %vm2759 = vweird.f32 %v2752
        %vm2760 = vmor %vm2758, %vm2759
        %v2761 = vsel %vm2760, %v2752, %v2757
        %v2762 = vmul.f32 %v2694, %v2731
        %v2763 = vmul.f32 %v2695, %v2741
        %v2764 = vmul.f32 %v2696, %v2751
        %v2765 = vmul.f32 %v2697, %v2761
        %v2767 = vperm.slane %v2676, 0
        %v2769 = vmul.f32 %v2762, %v2767
        %v2770 = vmul.f32 %v2763, %v2767
        %v2771 = vmul.f32 %v2764, %v2767
        %v2772 = vmul.f32 %v2765, %v2767
        %v2774 = vperm.slane %v2677, 0
        %v2776 = vadd.f32 %v2769, %v2774
        %v2777 = vadd.f32 %v2770, %v2774
        %v2778 = vadd.f32 %v2771, %v2774
        %v2779 = vadd.f32 %v2772, %v2774
        %2780 = vst.msk [vmem:[%s646] sm:$0xff] %vm968, %v2776
        %2781 = vst.msk [vmem:[%s646 + $0x8] sm:$0xff] %vm968, %v2777
        %2782 = vst.msk [vmem:[%s646 + $0x10] sm:$0xff] %vm968, %v2778
        %2783 = vst.msk [vmem:[%s646 + $0x18] sm:$0xff] %vm968, %v2779
        %p2784 = scmp.lt.s32.totalorder %s32, 1
        %s2785 = scalar_select %p2784, %s32, 1
        %s2786 = smul.addr %s2785, 4
        %s2787 = smul.addr %s2786, 8
        %s2788 = scalar_lea.vmem %s16, %s2787
        // Predicated region
        $region117: #{hubert_forward.2} parent=83 // pred_check
          %p2789 = pneg %p391
        $region118: #{hubert_forward.2} parent=83 // pred_check_branch
          %2791 = sbr.rel (%p2789) target = $region120
        $region119: #{hubert_forward.2} parent=83 // pred_region
          _
        $region120: #{hubert_forward.2} parent=83 // pred_fallthru
          _
      $region84: #{hubert_forward.2} parent=5 // pred_fallthru
        _
      %p2792 = scmp.le.s32.totalorder 2, %s27
      // Predicated region
      $region121: #{hubert_forward.2} parent=5 // pred_check
        %p2793 = pneg %p2792
      $region122: #{hubert_forward.2} parent=5 // pred_check_branch
        %2795 = sbr.rel (%p2793) target = $region124
      $region123: #{hubert_forward.2} parent=5 // pred_region
        %s2796 = ssub.s32 %s27, 2
        // Predicated region
        $region125: #{hubert_forward.2} parent=123 // pred_check
          %p2797 = pneg %p397
        $region126: #{hubert_forward.2} parent=123 // pred_check_branch
          %2799 = sbr.rel (%p2797) target = $region128
        $region127: #{hubert_forward.2} parent=123 // pred_region
          %p2800 = scmp.lt.s32.totalorder %s33, 1
          %s2801 = scalar_select %p2800, %s33, 1
          %s2802 = smul.addr %s2801, 4
          %s2803 = smul.addr %s2802, 8
          %s2804 = scalar_lea.vmem %s16, %s2803
        $region128: #{hubert_forward.2} parent=123 // pred_fallthru
          _
      $region124: #{hubert_forward.2} parent=5 // pred_fallthru
        _
    $region6: #{hubert_forward.2} parent=1 // loop_footer
      %s31 = sadd.s32 1, %s27
    $region7: #{hubert_forward.2} parent=1 // loop_footer_branch
      %26 = sbr.rel target = $region3
    $region8: #{hubert_forward.2} parent=1 // loop_exit
      _
    %2805 = vsyncpa [#allocation3], 1
    %s2806 = scalar_lea.sflag [#allocation3], 1
    %2807 = vsyncpa %s2806, 1
    %2808 = vsyncpa [#allocation5], 1
    %2809 = vsyncpa [#allocation8], 1
    %2810 = vsyncpa [#allocation11], 1
    %2811 = vsyncpa [#allocation14], 1

</llo_original>
